<compile_context>
chip_gen: v6e
topology: v6e:2x2x1
jax: 0.10.0
libtpu: 0.0.40
codegen_flags: <defaults>
</compile_context>

<pallas_src>
import functools

import jax
import jax.numpy as jnp
from jax.experimental import pallas as pl
from jax.experimental.pallas import tpu as pltpu


# --------------------------------------------------------------------------- #
# Shared in-kernel helpers
# --------------------------------------------------------------------------- #
def _gru_cell(x, h, w_rz, b_rz, w_in, b_in, w_hn, b_hn, hidden_size):
    """Fused-rz GRU cell. x:(B,E) h:(B,H) w_rz:(E+H,2H) w_in:(E,H) w_hn:(H,H)."""
    H = hidden_size
    xh = jnp.concatenate([x, h], axis=1)                                  # (B, E+H)
    rz = jax.nn.sigmoid(
        jnp.dot(xh, w_rz, preferred_element_type=jnp.float32) + b_rz)     # (B, 2H)
    r = rz[:, :H]
    z = rz[:, H:]
    n = jnp.tanh(
        jnp.dot(x, w_in, preferred_element_type=jnp.float32) + b_in
        + r * (jnp.dot(h, w_hn, preferred_element_type=jnp.float32) + b_hn))
    return (1.0 - z) * n + z * h


def _embed_onehot(tok_col, emb, vocab_size):
    """tok_col:(B,1) int32, emb:(V,E) -> (B,E) via one-hot @ emb on the MXU."""
    B = tok_col.shape[0]
    lane = jax.lax.broadcasted_iota(jnp.int32, (B, vocab_size), 1)
    onehot = (lane == tok_col).astype(jnp.float32)
    return jnp.dot(onehot, emb, preferred_element_type=jnp.float32)


# --------------------------------------------------------------------------- #
# Encoder: one grid-less kernel, time loop unrolled inside
# --------------------------------------------------------------------------- #
def _encoder_kernel(emb_ref, w_rz_ref, b_rz_ref, w_in_ref, b_in_ref,
                    w_hn_ref, b_hn_ref, h_ref, *, hidden_size, seq_len):
    B = h_ref.shape[0]
    w_rz = w_rz_ref[...]
    b_rz = b_rz_ref[...]
    w_in = w_in_ref[...]
    b_in = b_in_ref[...]
    w_hn = w_hn_ref[...]
    b_hn = b_hn_ref[...]

    def body(t, h):
        return _gru_cell(emb_ref[t], h, w_rz, b_rz, w_in, b_in, w_hn, b_hn,
                         hidden_size)

    h0 = jnp.zeros((B, hidden_size), jnp.float32)
    h_ref[...] = jax.lax.fori_loop(0, seq_len, body, h0, unroll=True)


def encoder_pallas(emb_src_tm, w_rz, b_rz, w_in, b_in, w_hn, b_hn):
    """emb_src_tm: (S, B, E) time-major embedded source. Returns final hidden (B, H)."""
    S, B, E = emb_src_tm.shape
    H = w_hn.shape[0]
    kernel = functools.partial(_encoder_kernel, hidden_size=H, seq_len=S)

    flops = S * 2 * B * ((E + H) * 2 * H + E * H + H * H)
    transcendentals = S * B * 3 * H
    bytes_accessed = 4 * (S * B * E + (E + H) * 2 * H + 2 * H + E * H + H
                          + H * H + H + B * H)

    return pl.pallas_call(
        kernel,
        out_shape=jax.ShapeDtypeStruct((B, H), jnp.float32),
        cost_estimate=pl.CostEstimate(flops=flops,
                                      transcendentals=transcendentals,
                                      bytes_accessed=bytes_accessed),
    )(emb_src_tm, w_rz, b_rz, w_in, b_in, w_hn, b_hn)


# --------------------------------------------------------------------------- #
# Decoder: fully fused greedy decode loop -> one pallas_call, grid=(T_trg,)
#   GRU cell + fc projection + masked argmax + one-hot embedding feedback,
#   weights resident in VMEM, hidden/embedded-token carried in VMEM scratch.
# --------------------------------------------------------------------------- #
def _decoder_kernel(h0_ref, emb_ref, w_rz_ref, b_rz_ref, w_in_ref, b_in_ref,
                    w_hn_ref, b_hn_ref, w_fc_ref, b_fc_ref,
                    logits_ref, h_scr, x_scr, *, hidden_size, vocab_size):
    t = pl.program_id(0)
    B = h_scr.shape[0]
    H = hidden_size
    V = vocab_size                     # true vocab (valid lanes / emb rows)
    Vp = logits_ref.shape[-1]          # 128-padded vocab (lane-dense store)

    @pl.when(t == 0)
    def _():
        h_scr[...] = h0_ref[...]
        sos = jnp.full((B, 1), 1, dtype=jnp.int32)          # <SOS> token id = 1
        x_scr[...] = _embed_onehot(sos, emb_ref[...], V)

    x = x_scr[...]
    h = h_scr[...]
    h_new = _gru_cell(x, h, w_rz_ref[...], b_rz_ref[...], w_in_ref[...],
                      b_in_ref[...], w_hn_ref[...], b_hn_ref[...], H)
    h_scr[...] = h_new

    logits = (jnp.dot(h_new, w_fc_ref[...], preferred_element_type=jnp.float32)
              + b_fc_ref[...])                              # (B, Vp)
    logits_ref[...] = logits

    # Greedy feedback for the next step (skip on the last step).
    @pl.when(t < pl.num_programs(0) - 1)
    def _():
        lane = jax.lax.broadcasted_iota(jnp.int32, (B, Vp), 1)
        masked = jnp.where(lane < V, logits, -1e30)          # mask pad lanes
        m = jnp.max(masked, axis=1, keepdims=True)
        tok = jnp.min(jnp.where(masked == m, lane, Vp), axis=1, keepdims=True)
        x_scr[...] = _embed_onehot(tok, emb_ref[...], V)


def decoder_greedy_pallas(h0, dec_emb, w_rz, b_rz, w_in, b_in, w_hn, b_hn,
                          fc_w_p, fc_b_p, *, trg_len, vocab_size):
    """Returns padded logits (T_trg, B, Vp); caller slices/transposes."""
    B, H = h0.shape
    V, E = dec_emb.shape
    Vp = fc_w_p.shape[1]
    kernel = functools.partial(_decoder_kernel, hidden_size=H,
                               vocab_size=vocab_size)

    def const(t):
        return (0, 0)

    flops = trg_len * 2 * B * ((E + H) * 2 * H + E * H + H * H + H * Vp + V * E)
    transcendentals = trg_len * B * 3 * H
    bytes_accessed = 4 * (B * H + V * E + (E + H) * 2 * H + 2 * H + E * H + H
                          + H * H + H + H * Vp + Vp + trg_len * B * Vp)

    # TODO(synk): at realistic sizes (H=512, V~30k) tile fc_w over V with an
    # extra grid axis instead of keeping it fully resident (v7x: 64 MiB VMEM).
    return pl.pallas_call(
        kernel,
        out_shape=jax.ShapeDtypeStruct((trg_len, B, Vp), jnp.float32),
        grid_spec=pltpu.PrefetchScalarGridSpec(
            num_scalar_prefetch=0,
            grid=(trg_len,),
            in_specs=[
                pl.BlockSpec((B, H), const),            # encoder hidden
                pl.BlockSpec((V, E), const),            # decoder embedding table
                pl.BlockSpec(w_rz.shape, const),
                pl.BlockSpec(b_rz.shape, const),
                pl.BlockSpec(w_in.shape, const),
                pl.BlockSpec(b_in.shape, const),
                pl.BlockSpec(w_hn.shape, const),
                pl.BlockSpec(b_hn.shape, const),
                pl.BlockSpec(fc_w_p.shape, const),
                pl.BlockSpec(fc_b_p.shape, const),
            ],
            out_specs=pl.BlockSpec((None, B, Vp), lambda t: (t, 0, 0)),
            scratch_shapes=[pltpu.VMEM((B, H), jnp.float32),   # hidden carry
                            pltpu.VMEM((B, E), jnp.float32)],  # embedded token carry
        ),
        compiler_params=pltpu.CompilerParams(
            dimension_semantics=("arbitrary",)),   # serial recurrence over time
        cost_estimate=pl.CostEstimate(flops=flops,
                                      transcendentals=transcendentals,
                                      bytes_accessed=bytes_accessed),
    )(h0, dec_emb, w_rz, b_rz, w_in, b_in, w_hn, b_hn, fc_w_p, fc_b_p)


# --------------------------------------------------------------------------- #
# Weight repacking (pure layout glue, done once in the wrapper)
# --------------------------------------------------------------------------- #
def _pack_gru(wih, whh, bih, bhh):
    """wih:(E,3H) whh:(H,3H) bih/bhh:(1,3H), torch gate order r|z|n."""
    H = whh.shape[0]
    w_rz = jnp.concatenate([wih[:, :2 * H], whh[:, :2 * H]], axis=0)   # (E+H, 2H)
    b_rz = bih[:, :2 * H] + bhh[:, :2 * H]                             # (1, 2H)
    w_in = wih[:, 2 * H:]                                              # (E, H)
    b_in = bih[:, 2 * H:]                                              # (1, H)
    w_hn = whh[:, 2 * H:]                                              # (H, H)
    b_hn = bhh[:, 2 * H:]                                              # (1, H)
    return w_rz, b_rz, w_in, b_in, w_hn, b_hn


# --------------------------------------------------------------------------- #
# Full Seq2Seq forward (greedy decoding, <SOS>=1 start token, trg only sets length)
# --------------------------------------------------------------------------- #
def seq2seq_forward(params, src, trg_len):
    V = params["fc_w"].shape[1]
    Vp = ((V + 127) // 128) * 128

    enc_w = _pack_gru(params["enc_wih"], params["enc_whh"],
                      params["enc_bih"], params["enc_bhh"])
    dec_w = _pack_gru(params["dec_wih"], params["dec_whh"],
                      params["dec_bih"], params["dec_bhh"])
    fc_w_p = jnp.pad(params["fc_w"], ((0, 0), (0, Vp - V)))
    fc_b_p = jnp.pad(params["fc_b"], ((0, 0), (0, Vp - V)))

    # Source embedding lookup + time-major relayout: thin XLA glue.
    emb_src = params["enc_emb"][src]                     # (B, S, E)
    emb_src_tm = jnp.transpose(emb_src, (1, 0, 2))       # (S, B, E)

    hidden = encoder_pallas(emb_src_tm, *enc_w)          # (B, H)

    logits_p = decoder_greedy_pallas(hidden, params["dec_emb"], *dec_w,
                                     fc_w_p, fc_b_p,
                                     trg_len=trg_len, vocab_size=V)  # (T,B,Vp)
    return jnp.transpose(logits_p[:, :, :V], (1, 0, 2))  # (B, T_trg, V_fr)


# --------------------------------------------------------------------------- #
# Deterministic parameter construction (shapes follow the PyTorch module __init__)
# --------------------------------------------------------------------------- #
def init_params(key, vocab_en, vocab_fr, embed_size, hidden_size):
    ks = jax.random.split(key, 12)
    E, H = embed_size, hidden_size
    scale = 0.1

    def norm(k, shape):
        return scale * jax.random.normal(k, shape, dtype=jnp.float32)

    return {
        # Encoder
        "enc_emb": norm(ks[0], (vocab_en, E)),
        "enc_wih": norm(ks[1], (E, 3 * H)),     # transposed vs. torch weight_ih_l0
        "enc_whh": norm(ks[2], (H, 3 * H)),     # transposed vs. torch weight_hh_l0
        "enc_bih": norm(ks[3], (1, 3 * H)),
        "enc_bhh": norm(ks[4], (1, 3 * H)),
        # Decoder
        "dec_emb": norm(ks[5], (vocab_fr, E)),
        "dec_wih": norm(ks[6], (E, 3 * H)),
        "dec_whh": norm(ks[7], (H, 3 * H)),
        "dec_bih": norm(ks[8], (1, 3 * H)),
        "dec_bhh": norm(ks[9], (1, 3 * H)),
        "fc_w":    norm(ks[10], (H, vocab_fr)),  # transposed vs. torch fc.weight
        "fc_b":    norm(ks[11], (1, vocab_fr)),
    }


if __name__ == "__main__":
    B, S, T_TRG = 2, 8, 8
    EMBED, HIDDEN = 32, 32
    VOCAB_EN, VOCAB_FR = 16, 24

    key = jax.random.PRNGKey(0)
    k_param, k_src, k_trg = jax.random.split(key, 3)

    params = init_params(k_param, VOCAB_EN, VOCAB_FR, EMBED, HIDDEN)
    src = jax.random.randint(k_src, (B, S), 0, VOCAB_EN, dtype=jnp.int32)
    trg = jax.random.randint(k_trg, (B, T_TRG), 0, VOCAB_FR, dtype=jnp.int32)  # only length used

    fwd = jax.jit(functools.partial(seq2seq_forward, trg_len=T_TRG))
    out = fwd(params, src)
    out = jax.block_until_ready(out)

    assert out.shape == (B, T_TRG, VOCAB_FR), out.shape
    assert out.dtype == jnp.float32
    print("KERNEL_OK")
</pallas_src>

<mosaic_0001>
module attributes {stable_mosaic.version = 11 : i64} {
  func.func @_encoder_kernel(%arg0: memref<8x2x32xf32, #tpu.memory_space<vmem>>, %arg1: memref<64x64xf32, #tpu.memory_space<vmem>>, %arg2: memref<1x64xf32, #tpu.memory_space<vmem>>, %arg3: memref<32x32xf32, #tpu.memory_space<vmem>>, %arg4: memref<1x32xf32, #tpu.memory_space<vmem>>, %arg5: memref<32x32xf32, #tpu.memory_space<vmem>>, %arg6: memref<1x32xf32, #tpu.memory_space<vmem>>, %arg7: memref<2x32xf32, #tpu.memory_space<vmem>>) attributes {dimension_semantics = [], scalar_prefetch = 0 : i64, scratch_operands = 0 : i64, tpu.core_type = #tpu.core_type<tc>} {
    %c0 = arith.constant 0 : index
    %c0_0 = arith.constant 0 : index
    %0 = vector.load %arg1[%c0, %c0_0] : memref<64x64xf32, #tpu.memory_space<vmem>>, vector<64x64xf32>
    %c0_1 = arith.constant 0 : index
    %c0_2 = arith.constant 0 : index
    %1 = vector.load %arg2[%c0_1, %c0_2] : memref<1x64xf32, #tpu.memory_space<vmem>>, vector<1x64xf32>
    %c0_3 = arith.constant 0 : index
    %c0_4 = arith.constant 0 : index
    %2 = vector.load %arg3[%c0_3, %c0_4] : memref<32x32xf32, #tpu.memory_space<vmem>>, vector<32x32xf32>
    %c0_5 = arith.constant 0 : index
    %c0_6 = arith.constant 0 : index
    %3 = vector.load %arg4[%c0_5, %c0_6] : memref<1x32xf32, #tpu.memory_space<vmem>>, vector<1x32xf32>
    %c0_7 = arith.constant 0 : index
    %c0_8 = arith.constant 0 : index
    %4 = vector.load %arg5[%c0_7, %c0_8] : memref<32x32xf32, #tpu.memory_space<vmem>>, vector<32x32xf32>
    %c0_9 = arith.constant 0 : index
    %c0_10 = arith.constant 0 : index
    %5 = vector.load %arg6[%c0_9, %c0_10] : memref<1x32xf32, #tpu.memory_space<vmem>>, vector<1x32xf32>
    %cst = arith.constant 0.000000e+00 : f32
    %6 = vector.broadcast %cst : f32 to vector<2x32xf32>
    %c0_i32 = arith.constant 0 : i32
    %7 = arith.index_cast %c0_i32 : i32 to index
    %c0_11 = arith.constant 0 : index
    %c0_12 = arith.constant 0 : index
    %8 = vector.load %arg0[%7, %c0_11, %c0_12] : memref<8x2x32xf32, #tpu.memory_space<vmem>>, vector<1x2x32xf32>
    %9 = vector.shape_cast %8 : vector<1x2x32xf32> to vector<2x32xf32>
    %10 = tpu.concatenate %9, %6 in 1 : vector<2x32xf32>, vector<2x32xf32> -> vector<2x64xf32>
    %cst_13 = arith.constant dense<0.000000e+00> : vector<2x64xf32>
    %11 = tpu.matmul %10, %0, %cst_13 {dimension_numbers = #tpu.dot_dimension_numbers<[1], [0], [0], [1], [0, 0, 1, 1], [], []>} : vector<2x64xf32>, vector<64x64xf32>, vector<2x64xf32> -> vector<2x64xf32>
    %12 = vector.broadcast %1 : vector<1x64xf32> to vector<2x64xf32>
    %13 = arith.addf %11, %12 : vector<2x64xf32>
    %14 = arith.negf %13 : vector<2x64xf32>
    %15 = math.exp %14 : vector<2x64xf32>
    %cst_14 = arith.constant 1.000000e+00 : f32
    %16 = vector.broadcast %cst_14 : f32 to vector<2x64xf32>
    %17 = arith.addf %16, %15 : vector<2x64xf32>
    %18 = arith.divf %16, %17 : vector<2x64xf32>
    %19 = vector.extract_strided_slice %18 {offsets = [0, 0], sizes = [2, 32], strides = [1, 1]} : vector<2x64xf32> to vector<2x32xf32>
    %20 = vector.extract_strided_slice %18 {offsets = [0, 32], sizes = [2, 32], strides = [1, 1]} : vector<2x64xf32> to vector<2x32xf32>
    %cst_15 = arith.constant dense<0.000000e+00> : vector<2x32xf32>
    %21 = tpu.matmul %9, %2, %cst_15 {dimension_numbers = #tpu.dot_dimension_numbers<[1], [0], [0], [1], [0, 0, 1, 1], [], []>} : vector<2x32xf32>, vector<32x32xf32>, vector<2x32xf32> -> vector<2x32xf32>
    %22 = vector.broadcast %3 : vector<1x32xf32> to vector<2x32xf32>
    %23 = arith.addf %21, %22 : vector<2x32xf32>
    %cst_16 = arith.constant dense<0.000000e+00> : vector<2x32xf32>
    %24 = tpu.matmul %6, %4, %cst_16 {dimension_numbers = #tpu.dot_dimension_numbers<[1], [0], [0], [1], [0, 0, 1, 1], [], []>} : vector<2x32xf32>, vector<32x32xf32>, vector<2x32xf32> -> vector<2x32xf32>
    %25 = vector.broadcast %5 : vector<1x32xf32> to vector<2x32xf32>
    %26 = arith.addf %24, %25 : vector<2x32xf32>
    %27 = arith.mulf %19, %26 : vector<2x32xf32>
    %28 = arith.addf %23, %27 : vector<2x32xf32>
    %29 = math.tanh %28 : vector<2x32xf32>
    %cst_17 = arith.constant 1.000000e+00 : f32
    %30 = vector.broadcast %cst_17 : f32 to vector<2x32xf32>
    %31 = arith.subf %30, %20 : vector<2x32xf32>
    %32 = arith.mulf %31, %29 : vector<2x32xf32>
    %33 = arith.mulf %20, %6 : vector<2x32xf32>
    %34 = arith.addf %32, %33 : vector<2x32xf32>
    %c1_i32 = arith.constant 1 : i32
    %35 = arith.index_cast %c1_i32 : i32 to index
    %c0_18 = arith.constant 0 : index
    %c0_19 = arith.constant 0 : index
    %36 = vector.load %arg0[%35, %c0_18, %c0_19] : memref<8x2x32xf32, #tpu.memory_space<vmem>>, vector<1x2x32xf32>
    %37 = vector.shape_cast %36 : vector<1x2x32xf32> to vector<2x32xf32>
    %38 = tpu.concatenate %37, %34 in 1 : vector<2x32xf32>, vector<2x32xf32> -> vector<2x64xf32>
    %cst_20 = arith.constant dense<0.000000e+00> : vector<2x64xf32>
    %39 = tpu.matmul %38, %0, %cst_20 {dimension_numbers = #tpu.dot_dimension_numbers<[1], [0], [0], [1], [0, 0, 1, 1], [], []>} : vector<2x64xf32>, vector<64x64xf32>, vector<2x64xf32> -> vector<2x64xf32>
    %40 = vector.broadcast %1 : vector<1x64xf32> to vector<2x64xf32>
    %41 = arith.addf %39, %40 : vector<2x64xf32>
    %42 = arith.negf %41 : vector<2x64xf32>
    %43 = math.exp %42 : vector<2x64xf32>
    %cst_21 = arith.constant 1.000000e+00 : f32
    %44 = vector.broadcast %cst_21 : f32 to vector<2x64xf32>
    %45 = arith.addf %44, %43 : vector<2x64xf32>
    %46 = arith.divf %44, %45 : vector<2x64xf32>
    %47 = vector.extract_strided_slice %46 {offsets = [0, 0], sizes = [2, 32], strides = [1, 1]} : vector<2x64xf32> to vector<2x32xf32>
    %48 = vector.extract_strided_slice %46 {offsets = [0, 32], sizes = [2, 32], strides = [1, 1]} : vector<2x64xf32> to vector<2x32xf32>
    %cst_22 = arith.constant dense<0.000000e+00> : vector<2x32xf32>
    %49 = tpu.matmul %37, %2, %cst_22 {dimension_numbers = #tpu.dot_dimension_numbers<[1], [0], [0], [1], [0, 0, 1, 1], [], []>} : vector<2x32xf32>, vector<32x32xf32>, vector<2x32xf32> -> vector<2x32xf32>
    %50 = vector.broadcast %3 : vector<1x32xf32> to vector<2x32xf32>
    %51 = arith.addf %49, %50 : vector<2x32xf32>
    %cst_23 = arith.constant dense<0.000000e+00> : vector<2x32xf32>
    %52 = tpu.matmul %34, %4, %cst_23 {dimension_numbers = #tpu.dot_dimension_numbers<[1], [0], [0], [1], [0, 0, 1, 1], [], []>} : vector<2x32xf32>, vector<32x32xf32>, vector<2x32xf32> -> vector<2x32xf32>
    %53 = vector.broadcast %5 : vector<1x32xf32> to vector<2x32xf32>
    %54 = arith.addf %52, %53 : vector<2x32xf32>
    %55 = arith.mulf %47, %54 : vector<2x32xf32>
    %56 = arith.addf %51, %55 : vector<2x32xf32>
    %57 = math.tanh %56 : vector<2x32xf32>
    %cst_24 = arith.constant 1.000000e+00 : f32
    %58 = vector.broadcast %cst_24 : f32 to vector<2x32xf32>
    %59 = arith.subf %58, %48 : vector<2x32xf32>
    %60 = arith.mulf %59, %57 : vector<2x32xf32>
    %61 = arith.mulf %48, %34 : vector<2x32xf32>
    %62 = arith.addf %60, %61 : vector<2x32xf32>
    %c2_i32 = arith.constant 2 : i32
    %63 = arith.index_cast %c2_i32 : i32 to index
    %c0_25 = arith.constant 0 : index
    %c0_26 = arith.constant 0 : index
    %64 = vector.load %arg0[%63, %c0_25, %c0_26] : memref<8x2x32xf32, #tpu.memory_space<vmem>>, vector<1x2x32xf32>
    %65 = vector.shape_cast %64 : vector<1x2x32xf32> to vector<2x32xf32>
    %66 = tpu.concatenate %65, %62 in 1 : vector<2x32xf32>, vector<2x32xf32> -> vector<2x64xf32>
    %cst_27 = arith.constant dense<0.000000e+00> : vector<2x64xf32>
    %67 = tpu.matmul %66, %0, %cst_27 {dimension_numbers = #tpu.dot_dimension_numbers<[1], [0], [0], [1], [0, 0, 1, 1], [], []>} : vector<2x64xf32>, vector<64x64xf32>, vector<2x64xf32> -> vector<2x64xf32>
    %68 = vector.broadcast %1 : vector<1x64xf32> to vector<2x64xf32>
    %69 = arith.addf %67, %68 : vector<2x64xf32>
    %70 = arith.negf %69 : vector<2x64xf32>
    %71 = math.exp %70 : vector<2x64xf32>
    %cst_28 = arith.constant 1.000000e+00 : f32
    %72 = vector.broadcast %cst_28 : f32 to vector<2x64xf32>
    %73 = arith.addf %72, %71 : vector<2x64xf32>
    %74 = arith.divf %72, %73 : vector<2x64xf32>
    %75 = vector.extract_strided_slice %74 {offsets = [0, 0], sizes = [2, 32], strides = [1, 1]} : vector<2x64xf32> to vector<2x32xf32>
    %76 = vector.extract_strided_slice %74 {offsets = [0, 32], sizes = [2, 32], strides = [1, 1]} : vector<2x64xf32> to vector<2x32xf32>
    %cst_29 = arith.constant dense<0.000000e+00> : vector<2x32xf32>
    %77 = tpu.matmul %65, %2, %cst_29 {dimension_numbers = #tpu.dot_dimension_numbers<[1], [0], [0], [1], [0, 0, 1, 1], [], []>} : vector<2x32xf32>, vector<32x32xf32>, vector<2x32xf32> -> vector<2x32xf32>
    %78 = vector.broadcast %3 : vector<1x32xf32> to vector<2x32xf32>
    %79 = arith.addf %77, %78 : vector<2x32xf32>
    %cst_30 = arith.constant dense<0.000000e+00> : vector<2x32xf32>
    %80 = tpu.matmul %62, %4, %cst_30 {dimension_numbers = #tpu.dot_dimension_numbers<[1], [0], [0], [1], [0, 0, 1, 1], [], []>} : vector<2x32xf32>, vector<32x32xf32>, vector<2x32xf32> -> vector<2x32xf32>
    %81 = vector.broadcast %5 : vector<1x32xf32> to vector<2x32xf32>
    %82 = arith.addf %80, %81 : vector<2x32xf32>
    %83 = arith.mulf %75, %82 : vector<2x32xf32>
    %84 = arith.addf %79, %83 : vector<2x32xf32>
    %85 = math.tanh %84 : vector<2x32xf32>
    %cst_31 = arith.constant 1.000000e+00 : f32
    %86 = vector.broadcast %cst_31 : f32 to vector<2x32xf32>
    %87 = arith.subf %86, %76 : vector<2x32xf32>
    %88 = arith.mulf %87, %85 : vector<2x32xf32>
    %89 = arith.mulf %76, %62 : vector<2x32xf32>
    %90 = arith.addf %88, %89 : vector<2x32xf32>
    %c3_i32 = arith.constant 3 : i32
    %91 = arith.index_cast %c3_i32 : i32 to index
    %c0_32 = arith.constant 0 : index
    %c0_33 = arith.constant 0 : index
    %92 = vector.load %arg0[%91, %c0_32, %c0_33] : memref<8x2x32xf32, #tpu.memory_space<vmem>>, vector<1x2x32xf32>
    %93 = vector.shape_cast %92 : vector<1x2x32xf32> to vector<2x32xf32>
    %94 = tpu.concatenate %93, %90 in 1 : vector<2x32xf32>, vector<2x32xf32> -> vector<2x64xf32>
    %cst_34 = arith.constant dense<0.000000e+00> : vector<2x64xf32>
    %95 = tpu.matmul %94, %0, %cst_34 {dimension_numbers = #tpu.dot_dimension_numbers<[1], [0], [0], [1], [0, 0, 1, 1], [], []>} : vector<2x64xf32>, vector<64x64xf32>, vector<2x64xf32> -> vector<2x64xf32>
    %96 = vector.broadcast %1 : vector<1x64xf32> to vector<2x64xf32>
    %97 = arith.addf %95, %96 : vector<2x64xf32>
    %98 = arith.negf %97 : vector<2x64xf32>
    %99 = math.exp %98 : vector<2x64xf32>
    %cst_35 = arith.constant 1.000000e+00 : f32
    %100 = vector.broadcast %cst_35 : f32 to vector<2x64xf32>
    %101 = arith.addf %100, %99 : vector<2x64xf32>
    %102 = arith.divf %100, %101 : vector<2x64xf32>
    %103 = vector.extract_strided_slice %102 {offsets = [0, 0], sizes = [2, 32], strides = [1, 1]} : vector<2x64xf32> to vector<2x32xf32>
    %104 = vector.extract_strided_slice %102 {offsets = [0, 32], sizes = [2, 32], strides = [1, 1]} : vector<2x64xf32> to vector<2x32xf32>
    %cst_36 = arith.constant dense<0.000000e+00> : vector<2x32xf32>
    %105 = tpu.matmul %93, %2, %cst_36 {dimension_numbers = #tpu.dot_dimension_numbers<[1], [0], [0], [1], [0, 0, 1, 1], [], []>} : vector<2x32xf32>, vector<32x32xf32>, vector<2x32xf32> -> vector<2x32xf32>
    %106 = vector.broadcast %3 : vector<1x32xf32> to vector<2x32xf32>
    %107 = arith.addf %105, %106 : vector<2x32xf32>
    %cst_37 = arith.constant dense<0.000000e+00> : vector<2x32xf32>
    %108 = tpu.matmul %90, %4, %cst_37 {dimension_numbers = #tpu.dot_dimension_numbers<[1], [0], [0], [1], [0, 0, 1, 1], [], []>} : vector<2x32xf32>, vector<32x32xf32>, vector<2x32xf32> -> vector<2x32xf32>
    %109 = vector.broadcast %5 : vector<1x32xf32> to vector<2x32xf32>
    %110 = arith.addf %108, %109 : vector<2x32xf32>
    %111 = arith.mulf %103, %110 : vector<2x32xf32>
    %112 = arith.addf %107, %111 : vector<2x32xf32>
    %113 = math.tanh %112 : vector<2x32xf32>
    %cst_38 = arith.constant 1.000000e+00 : f32
    %114 = vector.broadcast %cst_38 : f32 to vector<2x32xf32>
    %115 = arith.subf %114, %104 : vector<2x32xf32>
    %116 = arith.mulf %115, %113 : vector<2x32xf32>
    %117 = arith.mulf %104, %90 : vector<2x32xf32>
    %118 = arith.addf %116, %117 : vector<2x32xf32>
    %c4_i32 = arith.constant 4 : i32
    %119 = arith.index_cast %c4_i32 : i32 to index
    %c0_39 = arith.constant 0 : index
    %c0_40 = arith.constant 0 : index
    %120 = vector.load %arg0[%119, %c0_39, %c0_40] : memref<8x2x32xf32, #tpu.memory_space<vmem>>, vector<1x2x32xf32>
    %121 = vector.shape_cast %120 : vector<1x2x32xf32> to vector<2x32xf32>
    %122 = tpu.concatenate %121, %118 in 1 : vector<2x32xf32>, vector<2x32xf32> -> vector<2x64xf32>
    %cst_41 = arith.constant dense<0.000000e+00> : vector<2x64xf32>
    %123 = tpu.matmul %122, %0, %cst_41 {dimension_numbers = #tpu.dot_dimension_numbers<[1], [0], [0], [1], [0, 0, 1, 1], [], []>} : vector<2x64xf32>, vector<64x64xf32>, vector<2x64xf32> -> vector<2x64xf32>
    %124 = vector.broadcast %1 : vector<1x64xf32> to vector<2x64xf32>
    %125 = arith.addf %123, %124 : vector<2x64xf32>
    %126 = arith.negf %125 : vector<2x64xf32>
    %127 = math.exp %126 : vector<2x64xf32>
    %cst_42 = arith.constant 1.000000e+00 : f32
    %128 = vector.broadcast %cst_42 : f32 to vector<2x64xf32>
    %129 = arith.addf %128, %127 : vector<2x64xf32>
    %130 = arith.divf %128, %129 : vector<2x64xf32>
    %131 = vector.extract_strided_slice %130 {offsets = [0, 0], sizes = [2, 32], strides = [1, 1]} : vector<2x64xf32> to vector<2x32xf32>
    %132 = vector.extract_strided_slice %130 {offsets = [0, 32], sizes = [2, 32], strides = [1, 1]} : vector<2x64xf32> to vector<2x32xf32>
    %cst_43 = arith.constant dense<0.000000e+00> : vector<2x32xf32>
    %133 = tpu.matmul %121, %2, %cst_43 {dimension_numbers = #tpu.dot_dimension_numbers<[1], [0], [0], [1], [0, 0, 1, 1], [], []>} : vector<2x32xf32>, vector<32x32xf32>, vector<2x32xf32> -> vector<2x32xf32>
    %134 = vector.broadcast %3 : vector<1x32xf32> to vector<2x32xf32>
    %135 = arith.addf %133, %134 : vector<2x32xf32>
    %cst_44 = arith.constant dense<0.000000e+00> : vector<2x32xf32>
    %136 = tpu.matmul %118, %4, %cst_44 {dimension_numbers = #tpu.dot_dimension_numbers<[1], [0], [0], [1], [0, 0, 1, 1], [], []>} : vector<2x32xf32>, vector<32x32xf32>, vector<2x32xf32> -> vector<2x32xf32>
    %137 = vector.broadcast %5 : vector<1x32xf32> to vector<2x32xf32>
    %138 = arith.addf %136, %137 : vector<2x32xf32>
    %139 = arith.mulf %131, %138 : vector<2x32xf32>
    %140 = arith.addf %135, %139 : vector<2x32xf32>
    %141 = math.tanh %140 : vector<2x32xf32>
    %cst_45 = arith.constant 1.000000e+00 : f32
    %142 = vector.broadcast %cst_45 : f32 to vector<2x32xf32>
    %143 = arith.subf %142, %132 : vector<2x32xf32>
    %144 = arith.mulf %143, %141 : vector<2x32xf32>
    %145 = arith.mulf %132, %118 : vector<2x32xf32>
    %146 = arith.addf %144, %145 : vector<2x32xf32>
    %c5_i32 = arith.constant 5 : i32
    %147 = arith.index_cast %c5_i32 : i32 to index
    %c0_46 = arith.constant 0 : index
    %c0_47 = arith.constant 0 : index
    %148 = vector.load %arg0[%147, %c0_46, %c0_47] : memref<8x2x32xf32, #tpu.memory_space<vmem>>, vector<1x2x32xf32>
    %149 = vector.shape_cast %148 : vector<1x2x32xf32> to vector<2x32xf32>
    %150 = tpu.concatenate %149, %146 in 1 : vector<2x32xf32>, vector<2x32xf32> -> vector<2x64xf32>
    %cst_48 = arith.constant dense<0.000000e+00> : vector<2x64xf32>
    %151 = tpu.matmul %150, %0, %cst_48 {dimension_numbers = #tpu.dot_dimension_numbers<[1], [0], [0], [1], [0, 0, 1, 1], [], []>} : vector<2x64xf32>, vector<64x64xf32>, vector<2x64xf32> -> vector<2x64xf32>
    %152 = vector.broadcast %1 : vector<1x64xf32> to vector<2x64xf32>
    %153 = arith.addf %151, %152 : vector<2x64xf32>
    %154 = arith.negf %153 : vector<2x64xf32>
    %155 = math.exp %154 : vector<2x64xf32>
    %cst_49 = arith.constant 1.000000e+00 : f32
    %156 = vector.broadcast %cst_49 : f32 to vector<2x64xf32>
    %157 = arith.addf %156, %155 : vector<2x64xf32>
    %158 = arith.divf %156, %157 : vector<2x64xf32>
    %159 = vector.extract_strided_slice %158 {offsets = [0, 0], sizes = [2, 32], strides = [1, 1]} : vector<2x64xf32> to vector<2x32xf32>
    %160 = vector.extract_strided_slice %158 {offsets = [0, 32], sizes = [2, 32], strides = [1, 1]} : vector<2x64xf32> to vector<2x32xf32>
    %cst_50 = arith.constant dense<0.000000e+00> : vector<2x32xf32>
    %161 = tpu.matmul %149, %2, %cst_50 {dimension_numbers = #tpu.dot_dimension_numbers<[1], [0], [0], [1], [0, 0, 1, 1], [], []>} : vector<2x32xf32>, vector<32x32xf32>, vector<2x32xf32> -> vector<2x32xf32>
    %162 = vector.broadcast %3 : vector<1x32xf32> to vector<2x32xf32>
    %163 = arith.addf %161, %162 : vector<2x32xf32>
    %cst_51 = arith.constant dense<0.000000e+00> : vector<2x32xf32>
    %164 = tpu.matmul %146, %4, %cst_51 {dimension_numbers = #tpu.dot_dimension_numbers<[1], [0], [0], [1], [0, 0, 1, 1], [], []>} : vector<2x32xf32>, vector<32x32xf32>, vector<2x32xf32> -> vector<2x32xf32>
    %165 = vector.broadcast %5 : vector<1x32xf32> to vector<2x32xf32>
    %166 = arith.addf %164, %165 : vector<2x32xf32>
    %167 = arith.mulf %159, %166 : vector<2x32xf32>
    %168 = arith.addf %163, %167 : vector<2x32xf32>
    %169 = math.tanh %168 : vector<2x32xf32>
    %cst_52 = arith.constant 1.000000e+00 : f32
    %170 = vector.broadcast %cst_52 : f32 to vector<2x32xf32>
    %171 = arith.subf %170, %160 : vector<2x32xf32>
    %172 = arith.mulf %171, %169 : vector<2x32xf32>
    %173 = arith.mulf %160, %146 : vector<2x32xf32>
    %174 = arith.addf %172, %173 : vector<2x32xf32>
    %c6_i32 = arith.constant 6 : i32
    %175 = arith.index_cast %c6_i32 : i32 to index
    %c0_53 = arith.constant 0 : index
    %c0_54 = arith.constant 0 : index
    %176 = vector.load %arg0[%175, %c0_53, %c0_54] : memref<8x2x32xf32, #tpu.memory_space<vmem>>, vector<1x2x32xf32>
    %177 = vector.shape_cast %176 : vector<1x2x32xf32> to vector<2x32xf32>
    %178 = tpu.concatenate %177, %174 in 1 : vector<2x32xf32>, vector<2x32xf32> -> vector<2x64xf32>
    %cst_55 = arith.constant dense<0.000000e+00> : vector<2x64xf32>
    %179 = tpu.matmul %178, %0, %cst_55 {dimension_numbers = #tpu.dot_dimension_numbers<[1], [0], [0], [1], [0, 0, 1, 1], [], []>} : vector<2x64xf32>, vector<64x64xf32>, vector<2x64xf32> -> vector<2x64xf32>
    %180 = vector.broadcast %1 : vector<1x64xf32> to vector<2x64xf32>
    %181 = arith.addf %179, %180 : vector<2x64xf32>
    %182 = arith.negf %181 : vector<2x64xf32>
    %183 = math.exp %182 : vector<2x64xf32>
    %cst_56 = arith.constant 1.000000e+00 : f32
    %184 = vector.broadcast %cst_56 : f32 to vector<2x64xf32>
    %185 = arith.addf %184, %183 : vector<2x64xf32>
    %186 = arith.divf %184, %185 : vector<2x64xf32>
    %187 = vector.extract_strided_slice %186 {offsets = [0, 0], sizes = [2, 32], strides = [1, 1]} : vector<2x64xf32> to vector<2x32xf32>
    %188 = vector.extract_strided_slice %186 {offsets = [0, 32], sizes = [2, 32], strides = [1, 1]} : vector<2x64xf32> to vector<2x32xf32>
    %cst_57 = arith.constant dense<0.000000e+00> : vector<2x32xf32>
    %189 = tpu.matmul %177, %2, %cst_57 {dimension_numbers = #tpu.dot_dimension_numbers<[1], [0], [0], [1], [0, 0, 1, 1], [], []>} : vector<2x32xf32>, vector<32x32xf32>, vector<2x32xf32> -> vector<2x32xf32>
    %190 = vector.broadcast %3 : vector<1x32xf32> to vector<2x32xf32>
    %191 = arith.addf %189, %190 : vector<2x32xf32>
    %cst_58 = arith.constant dense<0.000000e+00> : vector<2x32xf32>
    %192 = tpu.matmul %174, %4, %cst_58 {dimension_numbers = #tpu.dot_dimension_numbers<[1], [0], [0], [1], [0, 0, 1, 1], [], []>} : vector<2x32xf32>, vector<32x32xf32>, vector<2x32xf32> -> vector<2x32xf32>
    %193 = vector.broadcast %5 : vector<1x32xf32> to vector<2x32xf32>
    %194 = arith.addf %192, %193 : vector<2x32xf32>
    %195 = arith.mulf %187, %194 : vector<2x32xf32>
    %196 = arith.addf %191, %195 : vector<2x32xf32>
    %197 = math.tanh %196 : vector<2x32xf32>
    %cst_59 = arith.constant 1.000000e+00 : f32
    %198 = vector.broadcast %cst_59 : f32 to vector<2x32xf32>
    %199 = arith.subf %198, %188 : vector<2x32xf32>
    %200 = arith.mulf %199, %197 : vector<2x32xf32>
    %201 = arith.mulf %188, %174 : vector<2x32xf32>
    %202 = arith.addf %200, %201 : vector<2x32xf32>
    %c7_i32 = arith.constant 7 : i32
    %203 = arith.index_cast %c7_i32 : i32 to index
    %c0_60 = arith.constant 0 : index
    %c0_61 = arith.constant 0 : index
    %204 = vector.load %arg0[%203, %c0_60, %c0_61] : memref<8x2x32xf32, #tpu.memory_space<vmem>>, vector<1x2x32xf32>
    %205 = vector.shape_cast %204 : vector<1x2x32xf32> to vector<2x32xf32>
    %206 = tpu.concatenate %205, %202 in 1 : vector<2x32xf32>, vector<2x32xf32> -> vector<2x64xf32>
    %cst_62 = arith.constant dense<0.000000e+00> : vector<2x64xf32>
    %207 = tpu.matmul %206, %0, %cst_62 {dimension_numbers = #tpu.dot_dimension_numbers<[1], [0], [0], [1], [0, 0, 1, 1], [], []>} : vector<2x64xf32>, vector<64x64xf32>, vector<2x64xf32> -> vector<2x64xf32>
    %208 = vector.broadcast %1 : vector<1x64xf32> to vector<2x64xf32>
    %209 = arith.addf %207, %208 : vector<2x64xf32>
    %210 = arith.negf %209 : vector<2x64xf32>
    %211 = math.exp %210 : vector<2x64xf32>
    %cst_63 = arith.constant 1.000000e+00 : f32
    %212 = vector.broadcast %cst_63 : f32 to vector<2x64xf32>
    %213 = arith.addf %212, %211 : vector<2x64xf32>
    %214 = arith.divf %212, %213 : vector<2x64xf32>
    %215 = vector.extract_strided_slice %214 {offsets = [0, 0], sizes = [2, 32], strides = [1, 1]} : vector<2x64xf32> to vector<2x32xf32>
    %216 = vector.extract_strided_slice %214 {offsets = [0, 32], sizes = [2, 32], strides = [1, 1]} : vector<2x64xf32> to vector<2x32xf32>
    %cst_64 = arith.constant dense<0.000000e+00> : vector<2x32xf32>
    %217 = tpu.matmul %205, %2, %cst_64 {dimension_numbers = #tpu.dot_dimension_numbers<[1], [0], [0], [1], [0, 0, 1, 1], [], []>} : vector<2x32xf32>, vector<32x32xf32>, vector<2x32xf32> -> vector<2x32xf32>
    %218 = vector.broadcast %3 : vector<1x32xf32> to vector<2x32xf32>
    %219 = arith.addf %217, %218 : vector<2x32xf32>
    %cst_65 = arith.constant dense<0.000000e+00> : vector<2x32xf32>
    %220 = tpu.matmul %202, %4, %cst_65 {dimension_numbers = #tpu.dot_dimension_numbers<[1], [0], [0], [1], [0, 0, 1, 1], [], []>} : vector<2x32xf32>, vector<32x32xf32>, vector<2x32xf32> -> vector<2x32xf32>
    %221 = vector.broadcast %5 : vector<1x32xf32> to vector<2x32xf32>
    %222 = arith.addf %220, %221 : vector<2x32xf32>
    %223 = arith.mulf %215, %222 : vector<2x32xf32>
    %224 = arith.addf %219, %223 : vector<2x32xf32>
    %225 = math.tanh %224 : vector<2x32xf32>
    %cst_66 = arith.constant 1.000000e+00 : f32
    %226 = vector.broadcast %cst_66 : f32 to vector<2x32xf32>
    %227 = arith.subf %226, %216 : vector<2x32xf32>
    %228 = arith.mulf %227, %225 : vector<2x32xf32>
    %229 = arith.mulf %216, %202 : vector<2x32xf32>
    %230 = arith.addf %228, %229 : vector<2x32xf32>
    %c8_i32 = arith.constant 8 : i32
    %c0_67 = arith.constant 0 : index
    %c0_68 = arith.constant 0 : index
    %231 = vector.load %arg7[%c0_67, %c0_68] : memref<2x32xf32, #tpu.memory_space<vmem>>, vector<2x32xf32>
    tpu.vector_store %arg7[%c0_67, %c0_68], %230 {strides = array<i32>} : memref<2x32xf32, #tpu.memory_space<vmem>>, vector<2x32xf32>,
    return
  }
}

module attributes {stable_mosaic.version = 11 : i64} {
  func.func @_decoder_kernel(%arg0: i32, %arg1: memref<2x32xf32, #tpu.memory_space<vmem>>, %arg2: memref<24x32xf32, #tpu.memory_space<vmem>>, %arg3: memref<64x64xf32, #tpu.memory_space<vmem>>, %arg4: memref<1x64xf32, #tpu.memory_space<vmem>>, %arg5: memref<32x32xf32, #tpu.memory_space<vmem>>, %arg6: memref<1x32xf32, #tpu.memory_space<vmem>>, %arg7: memref<32x32xf32, #tpu.memory_space<vmem>>, %arg8: memref<1x32xf32, #tpu.memory_space<vmem>>, %arg9: memref<32x128xf32, #tpu.memory_space<vmem>>, %arg10: memref<1x128xf32, #tpu.memory_space<vmem>>, %arg11: memref<1x2x128xf32, #tpu.memory_space<vmem>>, %arg12: memref<2x32xf32, #tpu.memory_space<vmem>>, %arg13: memref<2x32xf32, #tpu.memory_space<vmem>>) attributes {dimension_semantics = [#tpu.dimension_semantics<arbitrary>], iteration_bounds = array<i64: 8>, scalar_prefetch = 0 : i64, scratch_operands = 2 : i64, tpu.core_type = #tpu.core_type<tc>, window_params = [{pipeline_mode = #tpu.pipeline_mode<synchronous>, transform_indices = @transform_0, window_bounds = array<i64: 2, 32>}, {pipeline_mode = #tpu.pipeline_mode<synchronous>, transform_indices = @transform_1, window_bounds = array<i64: 24, 32>}, {pipeline_mode = #tpu.pipeline_mode<synchronous>, transform_indices = @transform_2, window_bounds = array<i64: 64, 64>}, {pipeline_mode = #tpu.pipeline_mode<synchronous>, transform_indices = @transform_3, window_bounds = array<i64: 1, 64>}, {pipeline_mode = #tpu.pipeline_mode<synchronous>, transform_indices = @transform_4, window_bounds = array<i64: 32, 32>}, {pipeline_mode = #tpu.pipeline_mode<synchronous>, transform_indices = @transform_5, window_bounds = array<i64: 1, 32>}, {pipeline_mode = #tpu.pipeline_mode<synchronous>, transform_indices = @transform_6, window_bounds = array<i64: 32, 32>}, {pipeline_mode = #tpu.pipeline_mode<synchronous>, transform_indices = @transform_7, window_bounds = array<i64: 1, 32>}, {pipeline_mode = #tpu.pipeline_mode<synchronous>, transform_indices = @transform_8, window_bounds = array<i64: 32, 128>}, {pipeline_mode = #tpu.pipeline_mode<synchronous>, transform_indices = @transform_9, window_bounds = array<i64: 1, 128>}, {transform_indices = @transform_10, window_bounds = array<i64: 1, 2, 128>}]} {
    %c0_i32 = arith.constant 0 : i32
    %0 = arith.cmpi eq, %arg0, %c0_i32 : i32
    %1 = arith.extui %0 : i1 to i32
    %c0_i32_0 = arith.constant 0 : i32
    %2 = arith.cmpi ne, %1, %c0_i32_0 : i32
    scf.if %2 {
      %c0_31 = arith.constant 0 : index
      %c0_32 = arith.constant 0 : index
      %48 = vector.load %arg1[%c0_31, %c0_32] : memref<2x32xf32, #tpu.memory_space<vmem>>, vector<2x32xf32>
      %c0_33 = arith.constant 0 : index
      %c0_34 = arith.constant 0 : index
      %49 = vector.load %arg12[%c0_33, %c0_34] : memref<2x32xf32, #tpu.memory_space<vmem>>, vector<2x32xf32>
      tpu.vector_store %arg12[%c0_33, %c0_34], %48 {strides = array<i32>} : memref<2x32xf32, #tpu.memory_space<vmem>>, vector<2x32xf32>,
      %c1_i32 = arith.constant 1 : i32
      %50 = vector.broadcast %c1_i32 : i32 to vector<2x1xi32>
      %c0_35 = arith.constant 0 : index
      %c0_36 = arith.constant 0 : index
      %51 = vector.load %arg2[%c0_35, %c0_36] : memref<24x32xf32, #tpu.memory_space<vmem>>, vector<24x32xf32>
      %52 = tpu.iota {dimensions = array<i32: 1>} : vector<2x24xi32>
      %53 = vector.broadcast %50 : vector<2x1xi32> to vector<2x24xi32>
      %54 = arith.cmpi eq, %52, %53 : vector<2x24xi32>
      %55 = arith.extui %54 : vector<2x24xi1> to vector<2x24xi32>
      %56 = arith.sitofp %55 : vector<2x24xi32> to vector<2x24xf32>
      %cst_37 = arith.constant dense<0.000000e+00> : vector<2x32xf32>
      %57 = tpu.matmul %56, %51, %cst_37 {dimension_numbers = #tpu.dot_dimension_numbers<[1], [0], [0], [1], [0, 0, 1, 1], [], []>} : vector<2x24xf32>, vector<24x32xf32>, vector<2x32xf32> -> vector<2x32xf32>
      %c0_38 = arith.constant 0 : index
      %c0_39 = arith.constant 0 : index
      %58 = vector.load %arg13[%c0_38, %c0_39] : memref<2x32xf32, #tpu.memory_space<vmem>>, vector<2x32xf32>
      tpu.vector_store %arg13[%c0_38, %c0_39], %57 {strides = array<i32>} : memref<2x32xf32, #tpu.memory_space<vmem>>, vector<2x32xf32>,
    } else {
    }
    %c0 = arith.constant 0 : index
    %c0_1 = arith.constant 0 : index
    %3 = vector.load %arg13[%c0, %c0_1] : memref<2x32xf32, #tpu.memory_space<vmem>>, vector<2x32xf32>
    %c0_2 = arith.constant 0 : index
    %c0_3 = arith.constant 0 : index
    %4 = vector.load %arg12[%c0_2, %c0_3] : memref<2x32xf32, #tpu.memory_space<vmem>>, vector<2x32xf32>
    %c0_4 = arith.constant 0 : index
    %c0_5 = arith.constant 0 : index
    %5 = vector.load %arg3[%c0_4, %c0_5] : memref<64x64xf32, #tpu.memory_space<vmem>>, vector<64x64xf32>
    %c0_6 = arith.constant 0 : index
    %c0_7 = arith.constant 0 : index
    %6 = vector.load %arg4[%c0_6, %c0_7] : memref<1x64xf32, #tpu.memory_space<vmem>>, vector<1x64xf32>
    %c0_8 = arith.constant 0 : index
    %c0_9 = arith.constant 0 : index
    %7 = vector.load %arg5[%c0_8, %c0_9] : memref<32x32xf32, #tpu.memory_space<vmem>>, vector<32x32xf32>
    %c0_10 = arith.constant 0 : index
    %c0_11 = arith.constant 0 : index
    %8 = vector.load %arg6[%c0_10, %c0_11] : memref<1x32xf32, #tpu.memory_space<vmem>>, vector<1x32xf32>
    %c0_12 = arith.constant 0 : index
    %c0_13 = arith.constant 0 : index
    %9 = vector.load %arg7[%c0_12, %c0_13] : memref<32x32xf32, #tpu.memory_space<vmem>>, vector<32x32xf32>
    %c0_14 = arith.constant 0 : index
    %c0_15 = arith.constant 0 : index
    %10 = vector.load %arg8[%c0_14, %c0_15] : memref<1x32xf32, #tpu.memory_space<vmem>>, vector<1x32xf32>
    %11 = tpu.concatenate %3, %4 in 1 : vector<2x32xf32>, vector<2x32xf32> -> vector<2x64xf32>
    %cst = arith.constant dense<0.000000e+00> : vector<2x64xf32>
    %12 = tpu.matmul %11, %5, %cst {dimension_numbers = #tpu.dot_dimension_numbers<[1], [0], [0], [1], [0, 0, 1, 1], [], []>} : vector<2x64xf32>, vector<64x64xf32>, vector<2x64xf32> -> vector<2x64xf32>
    %13 = vector.broadcast %6 : vector<1x64xf32> to vector<2x64xf32>
    %14 = arith.addf %12, %13 : vector<2x64xf32>
    %15 = arith.negf %14 : vector<2x64xf32>
    %16 = math.exp %15 : vector<2x64xf32>
    %cst_16 = arith.constant 1.000000e+00 : f32
    %17 = vector.broadcast %cst_16 : f32 to vector<2x64xf32>
    %18 = arith.addf %17, %16 : vector<2x64xf32>
    %19 = arith.divf %17, %18 : vector<2x64xf32>
    %20 = vector.extract_strided_slice %19 {offsets = [0, 0], sizes = [2, 32], strides = [1, 1]} : vector<2x64xf32> to vector<2x32xf32>
    %21 = vector.extract_strided_slice %19 {offsets = [0, 32], sizes = [2, 32], strides = [1, 1]} : vector<2x64xf32> to vector<2x32xf32>
    %cst_17 = arith.constant dense<0.000000e+00> : vector<2x32xf32>
    %22 = tpu.matmul %3, %7, %cst_17 {dimension_numbers = #tpu.dot_dimension_numbers<[1], [0], [0], [1], [0, 0, 1, 1], [], []>} : vector<2x32xf32>, vector<32x32xf32>, vector<2x32xf32> -> vector<2x32xf32>
    %23 = vector.broadcast %8 : vector<1x32xf32> to vector<2x32xf32>
    %24 = arith.addf %22, %23 : vector<2x32xf32>
    %cst_18 = arith.constant dense<0.000000e+00> : vector<2x32xf32>
    %25 = tpu.matmul %4, %9, %cst_18 {dimension_numbers = #tpu.dot_dimension_numbers<[1], [0], [0], [1], [0, 0, 1, 1], [], []>} : vector<2x32xf32>, vector<32x32xf32>, vector<2x32xf32> -> vector<2x32xf32>
    %26 = vector.broadcast %10 : vector<1x32xf32> to vector<2x32xf32>
    %27 = arith.addf %25, %26 : vector<2x32xf32>
    %28 = arith.mulf %20, %27 : vector<2x32xf32>
    %29 = arith.addf %24, %28 : vector<2x32xf32>
    %30 = math.tanh %29 : vector<2x32xf32>
    %cst_19 = arith.constant 1.000000e+00 : f32
    %31 = vector.broadcast %cst_19 : f32 to vector<2x32xf32>
    %32 = arith.subf %31, %21 : vector<2x32xf32>
    %33 = arith.mulf %32, %30 : vector<2x32xf32>
    %34 = arith.mulf %21, %4 : vector<2x32xf32>
    %35 = arith.addf %33, %34 : vector<2x32xf32>
    %c0_20 = arith.constant 0 : index
    %c0_21 = arith.constant 0 : index
    %36 = vector.load %arg12[%c0_20, %c0_21] : memref<2x32xf32, #tpu.memory_space<vmem>>, vector<2x32xf32>
    tpu.vector_store %arg12[%c0_20, %c0_21], %35 {strides = array<i32>} : memref<2x32xf32, #tpu.memory_space<vmem>>, vector<2x32xf32>,
    %c0_22 = arith.constant 0 : index
    %c0_23 = arith.constant 0 : index
    %37 = vector.load %arg9[%c0_22, %c0_23] : memref<32x128xf32, #tpu.memory_space<vmem>>, vector<32x128xf32>
    %cst_24 = arith.constant dense<0.000000e+00> : vector<2x128xf32>
    %38 = tpu.matmul %35, %37, %cst_24 {dimension_numbers = #tpu.dot_dimension_numbers<[1], [0], [0], [1], [0, 0, 1, 1], [], []>} : vector<2x32xf32>, vector<32x128xf32>, vector<2x128xf32> -> vector<2x128xf32>
    %c0_25 = arith.constant 0 : index
    %c0_26 = arith.constant 0 : index
    %39 = vector.load %arg10[%c0_25, %c0_26] : memref<1x128xf32, #tpu.memory_space<vmem>>, vector<1x128xf32>
    %40 = vector.broadcast %39 : vector<1x128xf32> to vector<2x128xf32>
    %41 = arith.addf %38, %40 : vector<2x128xf32>
    %c0_27 = arith.constant 0 : index
    %c0_28 = arith.constant 0 : index
    %c0_29 = arith.constant 0 : index
    %42 = vector.load %arg11[%c0_27, %c0_28, %c0_29] : memref<1x2x128xf32, #tpu.memory_space<vmem>>, vector<1x2x128xf32>
    %43 = vector.shape_cast %42 : vector<1x2x128xf32> to vector<2x128xf32>
    %44 = vector.shape_cast %41 : vector<2x128xf32> to vector<1x2x128xf32>
    tpu.vector_store %arg11[%c0_27, %c0_28, %c0_29], %44 {strides = array<i32>} : memref<1x2x128xf32, #tpu.memory_space<vmem>>, vector<1x2x128xf32>,
    %c7_i32 = arith.constant 7 : i32
    %45 = arith.cmpi slt, %arg0, %c7_i32 : i32
    %46 = arith.extui %45 : i1 to i32
    %c0_i32_30 = arith.constant 0 : i32
    %47 = arith.cmpi ne, %46, %c0_i32_30 : i32
    scf.if %47 {
      %48 = tpu.iota {dimensions = array<i32: 1>} : vector<2x128xi32>
      %c24_i32 = arith.constant 24 : i32
      %49 = vector.broadcast %c24_i32 : i32 to vector<2x128xi32>
      %50 = arith.cmpi slt, %48, %49 : vector<2x128xi32>
      %cst_31 = arith.constant -1.000000e+30 : f32
      %51 = vector.broadcast %cst_31 : f32 to vector<2x128xf32>
      %52 = arith.select %50, %41, %51 : vector<2x128xi1>, vector<2x128xf32>
      %cst_32 = arith.constant dense<0xFF800000> : vector<2xf32>
      %53 = vector.multi_reduction <maximumf>, %52, %cst_32 [1] : vector<2x128xf32> to vector<2xf32>
      %54 = vector.shape_cast %53 : vector<2xf32> to vector<2x1xf32>
      %55 = vector.broadcast %54 : vector<2x1xf32> to vector<2x128xf32>
      %56 = arith.cmpf oeq, %52, %55 : vector<2x128xf32>
      %c128_i32 = arith.constant 128 : i32
      %57 = vector.broadcast %c128_i32 : i32 to vector<2x128xi32>
      %58 = arith.select %56, %48, %57 : vector<2x128xi1>, vector<2x128xi32>
      %cst_33 = arith.constant dense<2147483647> : vector<2xi32>
      %59 = vector.multi_reduction <minsi>, %58, %cst_33 [1] : vector<2x128xi32> to vector<2xi32>
      %60 = vector.shape_cast %59 : vector<2xi32> to vector<2x1xi32>
      %c0_34 = arith.constant 0 : index
      %c0_35 = arith.constant 0 : index
      %61 = vector.load %arg2[%c0_34, %c0_35] : memref<24x32xf32, #tpu.memory_space<vmem>>, vector<24x32xf32>
      %62 = tpu.iota {dimensions = array<i32: 1>} : vector<2x24xi32>
      %63 = vector.broadcast %60 : vector<2x1xi32> to vector<2x24xi32>
      %64 = arith.cmpi eq, %62, %63 : vector<2x24xi32>
      %65 = arith.extui %64 : vector<2x24xi1> to vector<2x24xi32>
      %66 = arith.sitofp %65 : vector<2x24xi32> to vector<2x24xf32>
      %cst_36 = arith.constant dense<0.000000e+00> : vector<2x32xf32>
      %67 = tpu.matmul %66, %61, %cst_36 {dimension_numbers = #tpu.dot_dimension_numbers<[1], [0], [0], [1], [0, 0, 1, 1], [], []>} : vector<2x24xf32>, vector<24x32xf32>, vector<2x32xf32> -> vector<2x32xf32>
      %c0_37 = arith.constant 0 : index
      %c0_38 = arith.constant 0 : index
      %68 = vector.load %arg13[%c0_37, %c0_38] : memref<2x32xf32, #tpu.memory_space<vmem>>, vector<2x32xf32>
      tpu.vector_store %arg13[%c0_37, %c0_38], %67 {strides = array<i32>} : memref<2x32xf32, #tpu.memory_space<vmem>>, vector<2x32xf32>,
    } else {
    }
    return
  }
  func.func @transform_0(%arg0: i32) -> (i32, i32) {
    %c0_i32 = arith.constant 0 : i32
    %c0_i32_0 = arith.constant 0 : i32
    %c0_i32_1 = arith.constant 0 : i32
    return %c0_i32, %c0_i32_0 : i32, i32
  }
  func.func @transform_1(%arg0: i32) -> (i32, i32) {
    %c0_i32 = arith.constant 0 : i32
    %c0_i32_0 = arith.constant 0 : i32
    %c0_i32_1 = arith.constant 0 : i32
    return %c0_i32, %c0_i32_0 : i32, i32
  }
  func.func @transform_2(%arg0: i32) -> (i32, i32) {
    %c0_i32 = arith.constant 0 : i32
    %c0_i32_0 = arith.constant 0 : i32
    %c0_i32_1 = arith.constant 0 : i32
    return %c0_i32, %c0_i32_0 : i32, i32
  }
  func.func @transform_3(%arg0: i32) -> (i32, i32) {
    %c0_i32 = arith.constant 0 : i32
    %c0_i32_0 = arith.constant 0 : i32
    %c0_i32_1 = arith.constant 0 : i32
    return %c0_i32, %c0_i32_0 : i32, i32
  }
  func.func @transform_4(%arg0: i32) -> (i32, i32) {
    %c0_i32 = arith.constant 0 : i32
    %c0_i32_0 = arith.constant 0 : i32
    %c0_i32_1 = arith.constant 0 : i32
    return %c0_i32, %c0_i32_0 : i32, i32
  }
  func.func @transform_5(%arg0: i32) -> (i32, i32) {
    %c0_i32 = arith.constant 0 : i32
    %c0_i32_0 = arith.constant 0 : i32
    %c0_i32_1 = arith.constant 0 : i32
    return %c0_i32, %c0_i32_0 : i32, i32
  }
  func.func @transform_6(%arg0: i32) -> (i32, i32) {
    %c0_i32 = arith.constant 0 : i32
    %c0_i32_0 = arith.constant 0 : i32
    %c0_i32_1 = arith.constant 0 : i32
    return %c0_i32, %c0_i32_0 : i32, i32
  }
  func.func @transform_7(%arg0: i32) -> (i32, i32) {
    %c0_i32 = arith.constant 0 : i32
    %c0_i32_0 = arith.constant 0 : i32
    %c0_i32_1 = arith.constant 0 : i32
    return %c0_i32, %c0_i32_0 : i32, i32
  }
  func.func @transform_8(%arg0: i32) -> (i32, i32) {
    %c0_i32 = arith.constant 0 : i32
    %c0_i32_0 = arith.constant 0 : i32
    %c0_i32_1 = arith.constant 0 : i32
    return %c0_i32, %c0_i32_0 : i32, i32
  }
  func.func @transform_9(%arg0: i32) -> (i32, i32) {
    %c0_i32 = arith.constant 0 : i32
    %c0_i32_0 = arith.constant 0 : i32
    %c0_i32_1 = arith.constant 0 : i32
    return %c0_i32, %c0_i32_0 : i32, i32
  }
  func.func @transform_10(%arg0: i32) -> (i32, i32, i32) {
    %c0_i32 = arith.constant 0 : i32
    %c0_i32_0 = arith.constant 0 : i32
    %c0_i32_1 = arith.constant 0 : i32
    return %arg0, %c0_i32, %c0_i32_0 : i32, i32, i32
  }
}

</mosaic_0001>

<llo_original>
// kernel: seq2seq_forward.3
$region0: #{seq2seq_forward.3}
  #allocation0 [shape = 'u32[]', space=smem, size = 0x4, offset = 0x4, fixed_abs, tag = 'smem constant byte address 0x4 - core index']
  #allocation1 [shape = 'u32[144,128]{1,0:T(1,128)}', space=vmem, size = 0x12000, scoped, tag = 'internal scratch']
  #allocation2 [shape = 'f32[2,32]{1,0:T(2,128)}', space=vmem, size = 0x400, scoped, tag = 'scratch operand']
  #allocation3 [shape = 'f32[2,32]{1,0:T(2,128)}', space=vmem, size = 0x400, scoped, tag = 'scratch operand']
  %s0 = inlined_call_operand.vmem [shape: f32[2,32], index: 0, kind: input, shape index: {}]
  %s1 = inlined_call_operand.vmem [shape: f32[24,32], index: 1, kind: input, shape index: {}]
  %s2 = inlined_call_operand.vmem [shape: f32[64,64], index: 2, kind: input, shape index: {}]
  %s3 = inlined_call_operand.vmem [shape: f32[1,64], index: 3, kind: input, shape index: {}]
  %s4 = inlined_call_operand.vmem [shape: f32[32,32], index: 4, kind: input, shape index: {}]
  %s5 = inlined_call_operand.vmem [shape: f32[1,32], index: 5, kind: input, shape index: {}]
  %s6 = inlined_call_operand.vmem [shape: f32[32,32], index: 6, kind: input, shape index: {}]
  %s7 = inlined_call_operand.vmem [shape: f32[1,32], index: 7, kind: input, shape index: {}]
  %s8 = inlined_call_operand.vmem [shape: f32[32,128], index: 8, kind: input, shape index: {}]
  %s9 = inlined_call_operand.vmem [shape: f32[1,128], index: 9, kind: input, shape index: {}]
  %s10 = inlined_call_operand.vmem [shape: f32[8,2,128], index: 10, kind: output, shape index: {}]
  %s11 = sld [smem:[#allocation0]]
  $region81: #{seq2seq_forward.3} parent=0
    _
  %s13 = ssub.s32 1, %s11
  %s14 = scalar_select 0, %s13, %s11
  loop: start=0, step=1, limit=10
  $region2: #{seq2seq_forward.3} parent=0 // loop_pre_header
    _
  $region3: #{seq2seq_forward.3} parent=0 // loop_header
    %s16 = sphi 0, %s20
    %p17 = scmp.ge.s32.totalorder %s16, 10
    %s24 = sphi 0, %s24
    %s26 = sphi 0, %s24
    %s27 = sphi 0, %s26
    %s41 = sphi 0, %s27
    %s45 = sphi 0, %s45
    %s47 = sphi 0, %s45
    %s48 = sphi 0, %s47
    %s62 = sphi 0, %s48
    %s66 = sphi 0, %s66
    %s68 = sphi 0, %s66
    %s69 = sphi 0, %s68
    %s83 = sphi 0, %s69
    %s87 = sphi 0, %s87
    %s89 = sphi 0, %s87
    %s90 = sphi 0, %s89
    %s104 = sphi 0, %s90
    %s108 = sphi 0, %s108
    %s110 = sphi 0, %s108
    %s111 = sphi 0, %s110
    %s125 = sphi 0, %s111
    %s129 = sphi 0, %s129
    %s131 = sphi 0, %s129
    %s132 = sphi 0, %s131
    %s146 = sphi 0, %s132
    %s150 = sphi 0, %s150
    %s152 = sphi 0, %s150
    %s153 = sphi 0, %s152
    %s167 = sphi 0, %s153
    %s171 = sphi 0, %s171
    %s173 = sphi 0, %s171
    %s174 = sphi 0, %s173
    %s188 = sphi 0, %s174
    %s192 = sphi 0, %s192
    %s194 = sphi 0, %s192
    %s195 = sphi 0, %s194
    %s209 = sphi 0, %s195
    %s213 = sphi 0, %s213
    %s215 = sphi 0, %s213
    %s216 = sphi 0, %s215
    %s230 = sphi 0, %s216
    %s236 = sphi 0, %s238
    %s239 = sphi 0, %s236
    %s240 = sphi 0, %s239
    %s256 = sphi 0, %s240
  $region4: #{seq2seq_forward.3} parent=0 // loop_header_branch
    %19 = sbr.rel (%p17) target = $region8
  $region5: #{seq2seq_forward.3} parent=0 // loop_body
    %s21 = ssub.s32 %s16, 1
    %s22 = ssub.s32 %s16, 2
    %s23 = sadd.s32 %s16, 1
    %s25 = sadd.s32 %s24, 1
    %p28 = scmp.eq.s32.totalorder %s16, 7
    %p29 = scmp.ne.s32.totalorder %s24, %s26
    %p30 = scmp.eq.s32.totalorder %s16, 0
    %p31 = por %p29, %p30
    %p32 = scmp.ne.s32.totalorder %s24, %s26
    %p33 = scmp.eq.s32.totalorder %s21, 7
    %p34 = por %p32, %p33
    %p35 = scmp.ne.s32.totalorder %s26, %s27
    %p36 = scmp.eq.s32.totalorder %s21, 0
    %p37 = por %p35, %p36
    %p38 = scmp.ne.s32.totalorder %s26, %s27
    %p39 = scmp.eq.s32.totalorder %s22, 7
    %p40 = por %p38, %p39
    %p42 = scmp.ne.s32.totalorder %s27, %s41
    %p43 = scmp.eq.s32.totalorder %s22, 0
    %p44 = por %p42, %p43
    %s46 = sadd.s32 %s45, 1
    %p49 = scmp.eq.s32.totalorder %s16, 7
    %p50 = scmp.ne.s32.totalorder %s45, %s47
    %p51 = scmp.eq.s32.totalorder %s16, 0
    %p52 = por %p50, %p51
    %p53 = scmp.ne.s32.totalorder %s45, %s47
    %p54 = scmp.eq.s32.totalorder %s21, 7
    %p55 = por %p53, %p54
    %p56 = scmp.ne.s32.totalorder %s47, %s48
    %p57 = scmp.eq.s32.totalorder %s21, 0
    %p58 = por %p56, %p57
    %p59 = scmp.ne.s32.totalorder %s47, %s48
    %p60 = scmp.eq.s32.totalorder %s22, 7
    %p61 = por %p59, %p60
    %p63 = scmp.ne.s32.totalorder %s48, %s62
    %p64 = scmp.eq.s32.totalorder %s22, 0
    %p65 = por %p63, %p64
    %s67 = sadd.s32 %s66, 1
    %p70 = scmp.eq.s32.totalorder %s16, 7
    %p71 = scmp.ne.s32.totalorder %s66, %s68
    %p72 = scmp.eq.s32.totalorder %s16, 0
    %p73 = por %p71, %p72
    %p74 = scmp.ne.s32.totalorder %s66, %s68
    %p75 = scmp.eq.s32.totalorder %s21, 7
    %p76 = por %p74, %p75
    %p77 = scmp.ne.s32.totalorder %s68, %s69
    %p78 = scmp.eq.s32.totalorder %s21, 0
    %p79 = por %p77, %p78
    %p80 = scmp.ne.s32.totalorder %s68, %s69
    %p81 = scmp.eq.s32.totalorder %s22, 7
    %p82 = por %p80, %p81
    %p84 = scmp.ne.s32.totalorder %s69, %s83
    %p85 = scmp.eq.s32.totalorder %s22, 0
    %p86 = por %p84, %p85
    %s88 = sadd.s32 %s87, 1
    %p91 = scmp.eq.s32.totalorder %s16, 7
    %p92 = scmp.ne.s32.totalorder %s87, %s89
    %p93 = scmp.eq.s32.totalorder %s16, 0
    %p94 = por %p92, %p93
    %p95 = scmp.ne.s32.totalorder %s87, %s89
    %p96 = scmp.eq.s32.totalorder %s21, 7
    %p97 = por %p95, %p96
    %p98 = scmp.ne.s32.totalorder %s89, %s90
    %p99 = scmp.eq.s32.totalorder %s21, 0
    %p100 = por %p98, %p99
    %p101 = scmp.ne.s32.totalorder %s89, %s90
    %p102 = scmp.eq.s32.totalorder %s22, 7
    %p103 = por %p101, %p102
    %p105 = scmp.ne.s32.totalorder %s90, %s104
    %p106 = scmp.eq.s32.totalorder %s22, 0
    %p107 = por %p105, %p106
    %s109 = sadd.s32 %s108, 1
    %p112 = scmp.eq.s32.totalorder %s16, 7
    %p113 = scmp.ne.s32.totalorder %s108, %s110
    %p114 = scmp.eq.s32.totalorder %s16, 0
    %p115 = por %p113, %p114
    %p116 = scmp.ne.s32.totalorder %s108, %s110
    %p117 = scmp.eq.s32.totalorder %s21, 7
    %p118 = por %p116, %p117
    %p119 = scmp.ne.s32.totalorder %s110, %s111
    %p120 = scmp.eq.s32.totalorder %s21, 0
    %p121 = por %p119, %p120
    %p122 = scmp.ne.s32.totalorder %s110, %s111
    %p123 = scmp.eq.s32.totalorder %s22, 7
    %p124 = por %p122, %p123
    %p126 = scmp.ne.s32.totalorder %s111, %s125
    %p127 = scmp.eq.s32.totalorder %s22, 0
    %p128 = por %p126, %p127
    %s130 = sadd.s32 %s129, 1
    %p133 = scmp.eq.s32.totalorder %s16, 7
    %p134 = scmp.ne.s32.totalorder %s129, %s131
    %p135 = scmp.eq.s32.totalorder %s16, 0
    %p136 = por %p134, %p135
    %p137 = scmp.ne.s32.totalorder %s129, %s131
    %p138 = scmp.eq.s32.totalorder %s21, 7
    %p139 = por %p137, %p138
    %p140 = scmp.ne.s32.totalorder %s131, %s132
    %p141 = scmp.eq.s32.totalorder %s21, 0
    %p142 = por %p140, %p141
    %p143 = scmp.ne.s32.totalorder %s131, %s132
    %p144 = scmp.eq.s32.totalorder %s22, 7
    %p145 = por %p143, %p144
    %p147 = scmp.ne.s32.totalorder %s132, %s146
    %p148 = scmp.eq.s32.totalorder %s22, 0
    %p149 = por %p147, %p148
    %s151 = sadd.s32 %s150, 1
    %p154 = scmp.eq.s32.totalorder %s16, 7
    %p155 = scmp.ne.s32.totalorder %s150, %s152
    %p156 = scmp.eq.s32.totalorder %s16, 0
    %p157 = por %p155, %p156
    %p158 = scmp.ne.s32.totalorder %s150, %s152
    %p159 = scmp.eq.s32.totalorder %s21, 7
    %p160 = por %p158, %p159
    %p161 = scmp.ne.s32.totalorder %s152, %s153
    %p162 = scmp.eq.s32.totalorder %s21, 0
    %p163 = por %p161, %p162
    %p164 = scmp.ne.s32.totalorder %s152, %s153
    %p165 = scmp.eq.s32.totalorder %s22, 7
    %p166 = por %p164, %p165
    %p168 = scmp.ne.s32.totalorder %s153, %s167
    %p169 = scmp.eq.s32.totalorder %s22, 0
    %p170 = por %p168, %p169
    %s172 = sadd.s32 %s171, 1
    %p175 = scmp.eq.s32.totalorder %s16, 7
    %p176 = scmp.ne.s32.totalorder %s171, %s173
    %p177 = scmp.eq.s32.totalorder %s16, 0
    %p178 = por %p176, %p177
    %p179 = scmp.ne.s32.totalorder %s171, %s173
    %p180 = scmp.eq.s32.totalorder %s21, 7
    %p181 = por %p179, %p180
    %p182 = scmp.ne.s32.totalorder %s173, %s174
    %p183 = scmp.eq.s32.totalorder %s21, 0
    %p184 = por %p182, %p183
    %p185 = scmp.ne.s32.totalorder %s173, %s174
    %p186 = scmp.eq.s32.totalorder %s22, 7
    %p187 = por %p185, %p186
    %p189 = scmp.ne.s32.totalorder %s174, %s188
    %p190 = scmp.eq.s32.totalorder %s22, 0
    %p191 = por %p189, %p190
    %s193 = sadd.s32 %s192, 1
    %p196 = scmp.eq.s32.totalorder %s16, 7
    %p197 = scmp.ne.s32.totalorder %s192, %s194
    %p198 = scmp.eq.s32.totalorder %s16, 0
    %p199 = por %p197, %p198
    %p200 = scmp.ne.s32.totalorder %s192, %s194
    %p201 = scmp.eq.s32.totalorder %s21, 7
    %p202 = por %p200, %p201
    %p203 = scmp.ne.s32.totalorder %s194, %s195
    %p204 = scmp.eq.s32.totalorder %s21, 0
    %p205 = por %p203, %p204
    %p206 = scmp.ne.s32.totalorder %s194, %s195
    %p207 = scmp.eq.s32.totalorder %s22, 7
    %p208 = por %p206, %p207
    %p210 = scmp.ne.s32.totalorder %s195, %s209
    %p211 = scmp.eq.s32.totalorder %s22, 0
    %p212 = por %p210, %p211
    %s214 = sadd.s32 %s213, 1
    %p217 = scmp.eq.s32.totalorder %s16, 7
    %p218 = scmp.ne.s32.totalorder %s213, %s215
    %p219 = scmp.eq.s32.totalorder %s16, 0
    %p220 = por %p218, %p219
    %p221 = scmp.ne.s32.totalorder %s213, %s215
    %p222 = scmp.eq.s32.totalorder %s21, 7
    %p223 = por %p221, %p222
    %p224 = scmp.ne.s32.totalorder %s215, %s216
    %p225 = scmp.eq.s32.totalorder %s21, 0
    %p226 = por %p224, %p225
    %p227 = scmp.ne.s32.totalorder %s215, %s216
    %p228 = scmp.eq.s32.totalorder %s22, 7
    %p229 = por %p227, %p228
    %p231 = scmp.ne.s32.totalorder %s216, %s230
    %p232 = scmp.eq.s32.totalorder %s22, 0
    %p233 = por %p231, %p232
    %s234 = ssub.s32 %s16, %s23
    %p235 = scmp.eq.s32.totalorder %s234, 0
    %s237 = sadd.s32 %s236, 1
    %s238 = scalar_select %p235, %s236, %s237
    %p241 = pneg %p235
    %p242 = scmp.eq.s32.totalorder %s16, 7
    %p243 = por %p241, %p242
    %p244 = scmp.ne.s32.totalorder %s236, %s239
    %p245 = scmp.eq.s32.totalorder %s16, 0
    %p246 = por %p244, %p245
    %p247 = scmp.ne.s32.totalorder %s236, %s239
    %p248 = scmp.eq.s32.totalorder %s21, 7
    %p249 = por %p247, %p248
    %p250 = scmp.ne.s32.totalorder %s239, %s240
    %p251 = scmp.eq.s32.totalorder %s21, 0
    %p252 = por %p250, %p251
    %p253 = scmp.ne.s32.totalorder %s239, %s240
    %p254 = scmp.eq.s32.totalorder %s22, 7
    %p255 = por %p253, %p254
    %p257 = scmp.ne.s32.totalorder %s240, %s256
    %p258 = scmp.eq.s32.totalorder %s22, 0
    %p259 = por %p257, %p258
    %p260 = scmp.le.s32.totalorder 1, %s16
    %p261 = scmp.lt.s32.totalorder %s16, 9
    %p262 = pnand %p260, %p261
    %p263 = pneg %p262
    // Predicated region
    $region9: #{seq2seq_forward.3} parent=5 // pred_check
      _
    $region10: #{seq2seq_forward.3} parent=5 // pred_check_branch
      %265 = sbr.rel (%p262) target = $region12
    $region11: #{seq2seq_forward.3} parent=5 // pred_region
      %s266 = ssub.s32 %s16, 1
      // Predicated region
      $region13: #{seq2seq_forward.3} parent=11 // pred_check
        %p267 = pneg %p37
      $region14: #{seq2seq_forward.3} parent=11 // pred_check_branch
        %269 = sbr.rel (%p267) target = $region16
      $region15: #{seq2seq_forward.3} parent=11 // pred_region
        _
      $region16: #{seq2seq_forward.3} parent=11 // pred_fallthru
        _
      // Predicated region
      $region17: #{seq2seq_forward.3} parent=11 // pred_check
        %p270 = pneg %p58
      $region18: #{seq2seq_forward.3} parent=11 // pred_check_branch
        %272 = sbr.rel (%p270) target = $region20
      $region19: #{seq2seq_forward.3} parent=11 // pred_region
        _
      $region20: #{seq2seq_forward.3} parent=11 // pred_fallthru
        _
      // Predicated region
      $region21: #{seq2seq_forward.3} parent=11 // pred_check
        %p273 = pneg %p79
      $region22: #{seq2seq_forward.3} parent=11 // pred_check_branch
        %275 = sbr.rel (%p273) target = $region24
      $region23: #{seq2seq_forward.3} parent=11 // pred_region
        _
      $region24: #{seq2seq_forward.3} parent=11 // pred_fallthru
        _
      // Predicated region
      $region25: #{seq2seq_forward.3} parent=11 // pred_check
        %p276 = pneg %p100
      $region26: #{seq2seq_forward.3} parent=11 // pred_check_branch
        %278 = sbr.rel (%p276) target = $region28
      $region27: #{seq2seq_forward.3} parent=11 // pred_region
        _
      $region28: #{seq2seq_forward.3} parent=11 // pred_fallthru
        _
      // Predicated region
      $region29: #{seq2seq_forward.3} parent=11 // pred_check
        %p279 = pneg %p121
      $region30: #{seq2seq_forward.3} parent=11 // pred_check_branch
        %281 = sbr.rel (%p279) target = $region32
      $region31: #{seq2seq_forward.3} parent=11 // pred_region
        _
      $region32: #{seq2seq_forward.3} parent=11 // pred_fallthru
        _
      // Predicated region
      $region33: #{seq2seq_forward.3} parent=11 // pred_check
        %p282 = pneg %p142
      $region34: #{seq2seq_forward.3} parent=11 // pred_check_branch
        %284 = sbr.rel (%p282) target = $region36
      $region35: #{seq2seq_forward.3} parent=11 // pred_region
        _
      $region36: #{seq2seq_forward.3} parent=11 // pred_fallthru
        _
      // Predicated region
      $region37: #{seq2seq_forward.3} parent=11 // pred_check
        %p285 = pneg %p163
      $region38: #{seq2seq_forward.3} parent=11 // pred_check_branch
        %287 = sbr.rel (%p285) target = $region40
      $region39: #{seq2seq_forward.3} parent=11 // pred_region
        _
      $region40: #{seq2seq_forward.3} parent=11 // pred_fallthru
        _
      // Predicated region
      $region41: #{seq2seq_forward.3} parent=11 // pred_check
        %p288 = pneg %p184
      $region42: #{seq2seq_forward.3} parent=11 // pred_check_branch
        %290 = sbr.rel (%p288) target = $region44
      $region43: #{seq2seq_forward.3} parent=11 // pred_region
        _
      $region44: #{seq2seq_forward.3} parent=11 // pred_fallthru
        _
      // Predicated region
      $region45: #{seq2seq_forward.3} parent=11 // pred_check
        %p291 = pneg %p205
      $region46: #{seq2seq_forward.3} parent=11 // pred_check_branch
        %293 = sbr.rel (%p291) target = $region48
      $region47: #{seq2seq_forward.3} parent=11 // pred_region
        _
      $region48: #{seq2seq_forward.3} parent=11 // pred_fallthru
        _
      // Predicated region
      $region49: #{seq2seq_forward.3} parent=11 // pred_check
        %p294 = pneg %p226
      $region50: #{seq2seq_forward.3} parent=11 // pred_check_branch
        %296 = sbr.rel (%p294) target = $region52
      $region51: #{seq2seq_forward.3} parent=11 // pred_region
        _
      $region52: #{seq2seq_forward.3} parent=11 // pred_fallthru
        _
    $region12: #{seq2seq_forward.3} parent=5 // pred_fallthru
      _
    %p297 = scmp.lt.s32.totalorder %s16, 8
    // Predicated region
    $region53: #{seq2seq_forward.3} parent=5 // pred_check
      %p298 = pneg %p297
    $region54: #{seq2seq_forward.3} parent=5 // pred_check_branch
      %300 = sbr.rel (%p298) target = $region56
    $region55: #{seq2seq_forward.3} parent=5 // pred_region
      _
    $region56: #{seq2seq_forward.3} parent=5 // pred_fallthru
      _
    %p301 = scmp.le.s32.totalorder 1, %s16
    %p302 = scmp.lt.s32.totalorder %s16, 9
    %p303 = pnand %p301, %p302
    %p304 = pneg %p303
    // Predicated region
    $region57: #{seq2seq_forward.3} parent=5 // pred_check
      _
    $region58: #{seq2seq_forward.3} parent=5 // pred_check_branch
      %306 = sbr.rel (%p303) target = $region60
    $region59: #{seq2seq_forward.3} parent=5 // pred_region
      %s307 = ssub.s32 %s16, 1
      %p308 = pneg %p37
      %p309 = pneg %p34
      %p310 = pneg %p58
      %p311 = pneg %p55
      %p312 = pneg %p79
      %p313 = pneg %p76
      %p314 = pneg %p100
      %p315 = pneg %p97
      %p316 = pneg %p121
      %p317 = pneg %p118
      %p318 = pneg %p142
      %p319 = pneg %p139
      %p320 = pneg %p163
      %p321 = pneg %p160
      %p322 = pneg %p184
      %p323 = pneg %p181
      %p324 = pneg %p205
      %p325 = pneg %p202
      %p326 = pneg %p226
      %p327 = pneg %p223
      %p328 = pneg %p252
      %p329 = pneg %p249
      %p330 = scmp.lt.s32.totalorder %s21, 7
      %s331 = scalar_select %p330, %s21, 7
      %s332 = smul.addr %s331, 2
      %s333 = scalar_lea.vmem %s10, %s332
      %p334 = scmp.lt.s32.totalorder %s21, 7
      %s335 = scalar_select %p334, %s21, 7
      %s336 = smul.addr %s335, 2
      %s337 = scalar_lea.vmem %s10, %s336
      %p338 = scmp.eq.s32.totalorder %s21, 0
      // Predicated region
      $region61: #{seq2seq_forward.3} parent=59 // pred_check
        %p339 = pneg %p338
      $region62: #{seq2seq_forward.3} parent=59 // pred_check_branch
        %341 = sbr.rel (%p339) target = $region64
      $region63: #{seq2seq_forward.3} parent=59 // pred_region
        %v342 = vld [vmem:[%s0] sm:$0x3]
        %vm343 = vcmask 254976
        %344 = vst.msk [vmem:[#allocation2] sm:$0x3] %vm343, %v342
        %v345 = vld [vmem:[%s1] sm:$0xff]
        %v346 = vld [vmem:[%s1 + $0x8] sm:$0xff]
        %v347 = vld [vmem:[%s1 + $0x10] sm:$0xff]
        %v348 = vlaneseq
        %v349 = vand.u32 %v348, 127
        %vm350 = vcmp.eq.s32.totalorder %v349, 1
        %v351 = vsel %vm350, 1, 0
        %v352 = vcvt.s32.f32 %v351
        %vm353 = vcmask 195584
        %v355 = vsel %vm353, %v352, 0
        %357 = vmatprep.subr.mxu0 0.0
        %358 = vmatpush1.msra.mxu0 0.0
        %359 = vmatprep.subr.mxu0 0.0
        %360 = vmatpush1.msra.mxu0 0.0
        %361 = vmatprep.subr.mxu0 0.0
        %362 = vmatpush1.msra.mxu0 0.0
        %363 = vmatprep.subr.mxu0 0.0
        %364 = vmatpush1.msra.mxu0 0.0
        %365 = vmatprep.subr.mxu0 0.0
        %366 = vmatpush1.msra.mxu0 0.0
        %367 = vmatprep.subr.mxu0 0.0
        %368 = vmatpush1.msra.mxu0 0.0
        %369 = vmatprep.subr.mxu0 0.0
        %370 = vmatpush1.msra.mxu0 0.0
        %371 = vmatprep.subr.mxu0 0.0
        %372 = vmatpush1.msra.mxu0 0.0
        %373 = vmatprep.subr.mxu0 0.0
        %374 = vmatpush1.msra.mxu0 0.0
        %375 = vmatprep.subr.mxu0 0.0
        %376 = vmatpush1.msra.mxu0 0.0
        %377 = vmatprep.subr.mxu0 0.0
        %378 = vmatpush1.msra.mxu0 0.0
        %379 = vmatprep.subr.mxu0 0.0
        %380 = vmatpush1.msra.mxu0 0.0
        %381 = vmatprep.subr.mxu0 0.0
        %382 = vmatpush1.msra.mxu0 0.0
        %383 = vmatprep.subr.mxu0 0.0
        %384 = vmatpush1.msra.mxu0 %v347
        %385 = vmatprep.subr.mxu0 0.0
        %386 = vmatpush1.msra.mxu0 %v346
        %387 = vmatprep.subr.mxu0 0.0
        %388 = vmatpush1.msra.mxu0 %v345
        %389 = vmatprep.subr.mxu0 0.0
        %390 = vmatpush2.msra.mxu0 0.0
        %391 = vmatprep.subr.mxu0 0.0
        %392 = vmatpush2.msra.mxu0 0.0
        %393 = vmatprep.subr.mxu0 0.0
        %394 = vmatpush2.msra.mxu0 0.0
        %395 = vmatprep.subr.mxu0 0.0
        %396 = vmatpush2.msra.mxu0 0.0
        %397 = vmatprep.subr.mxu0 0.0
        %398 = vmatpush2.msra.mxu0 0.0
        %399 = vmatprep.subr.mxu0 0.0
        %400 = vmatpush2.msra.mxu0 0.0
        %401 = vmatprep.subr.mxu0 0.0
        %402 = vmatpush2.msra.mxu0 0.0
        %403 = vmatprep.subr.mxu0 0.0
        %404 = vmatpush2.msra.mxu0 0.0
        %405 = vmatprep.subr.mxu0 0.0
        %406 = vmatpush2.msra.mxu0 0.0
        %407 = vmatprep.subr.mxu0 0.0
        %408 = vmatpush2.msra.mxu0 0.0
        %409 = vmatprep.subr.mxu0 0.0
        %410 = vmatpush2.msra.mxu0 0.0
        %411 = vmatprep.subr.mxu0 0.0
        %412 = vmatpush2.msra.mxu0 0.0
        %413 = vmatprep.subr.mxu0 0.0
        %414 = vmatpush2.msra.mxu0 0.0
        %415 = vmatprep.subr.mxu0 0.0
        %416 = vmatpush2.msra.mxu0 0.0
        %417 = vmatprep.subr.mxu0 0.0
        %418 = vmatpush2.msra.mxu0 0.0
        %419 = vmatprep.subr.mxu0 0.0
        %420 = vmatpush2.msra.mxu0 0.0
        %421 = vmatprep.mubr.f32.mxu0 0.0
        %422 = vmatmul.mubr.f32.gmra.mxu0 %v355
        %v423 = vpop.f32.mrf.mxu0
        %v424 = vadd.f32 0.0, %v423
        %v425 = vpop.f32.mrf.mxu0
        %426 = vdwg.mxu0
        %427 = vst.msk [vmem:[#allocation3] sm:$0x3] %vm343, %v424
      $region64: #{seq2seq_forward.3} parent=59 // pred_fallthru
        _
      %v428 = vld [vmem:[#allocation3] sm:$0x3]
      %v429 = vld [vmem:[#allocation2] sm:$0x3]
      %v430 = vld [vmem:[%s2] sm:$0xff]
      %v431 = vld [vmem:[%s2 + $0x8] sm:$0xff]
      %v432 = vld [vmem:[%s2 + $0x10] sm:$0xff]
      %v433 = vld [vmem:[%s2 + $0x18] sm:$0xff]
      %v434 = vld [vmem:[%s2 + $0x20] sm:$0xff]
      %v435 = vld [vmem:[%s2 + $0x28] sm:$0xff]
      %v436 = vld [vmem:[%s2 + $0x30] sm:$0xff]
      %v437 = vld [vmem:[%s2 + $0x38] sm:$0xff]
      %v438 = vld [vmem:[%s3] sm:$0x1]
      %v439 = vld [vmem:[%s4] sm:$0xff]
      %v440 = vld [vmem:[%s4 + $0x8] sm:$0xff]
      %v441 = vld [vmem:[%s4 + $0x10] sm:$0xff]
      %v442 = vld [vmem:[%s4 + $0x18] sm:$0xff]
      %v443 = vld [vmem:[%s5] sm:$0x1]
      %v444 = vld [vmem:[%s6] sm:$0xff]
      %v445 = vld [vmem:[%s6 + $0x8] sm:$0xff]
      %v446 = vld [vmem:[%s6 + $0x10] sm:$0xff]
      %v447 = vld [vmem:[%s6 + $0x18] sm:$0xff]
      %v448 = vld [vmem:[%s7] sm:$0x1]
      %450 = vrot.lane.b32.xlu0 %v429, 32
      %v451 = vpop.permute.xlu0 %450
      %vm453 = vcmask 261120
      %v454 = vsel %vm453, %v428, %v451
      %v456 = vlaneseq
      %v457 = vshrl.u32 %v456, 7
      %v458 = vsub.s32 0, %v457
      %v459 = vrot.slane %v438, %v458
      %vm461 = vcmask 523264
      %v463 = vsel %vm461, %v454, 0
      %465 = vmatprep.subr.mxu0 0.0
      %466 = vmatpush1.msra.mxu0 0.0
      %467 = vmatprep.subr.mxu0 0.0
      %468 = vmatpush1.msra.mxu0 0.0
      %469 = vmatprep.subr.mxu0 0.0
      %470 = vmatpush1.msra.mxu0 0.0
      %471 = vmatprep.subr.mxu0 0.0
      %472 = vmatpush1.msra.mxu0 0.0
      %473 = vmatprep.subr.mxu0 0.0
      %474 = vmatpush1.msra.mxu0 0.0
      %475 = vmatprep.subr.mxu0 0.0
      %476 = vmatpush1.msra.mxu0 0.0
      %477 = vmatprep.subr.mxu0 0.0
      %478 = vmatpush1.msra.mxu0 0.0
      %479 = vmatprep.subr.mxu0 0.0
      %480 = vmatpush1.msra.mxu0 0.0
      %481 = vmatprep.subr.mxu0 0.0
      %482 = vmatpush1.msra.mxu0 %v437
      %483 = vmatprep.subr.mxu0 0.0
      %484 = vmatpush1.msra.mxu0 %v436
      %485 = vmatprep.subr.mxu0 0.0
      %486 = vmatpush1.msra.mxu0 %v435
      %487 = vmatprep.subr.mxu0 0.0
      %488 = vmatpush1.msra.mxu0 %v434
      %489 = vmatprep.subr.mxu0 0.0
      %490 = vmatpush1.msra.mxu0 %v433
      %491 = vmatprep.subr.mxu0 0.0
      %492 = vmatpush1.msra.mxu0 %v432
      %493 = vmatprep.subr.mxu0 0.0
      %494 = vmatpush1.msra.mxu0 %v431
      %495 = vmatprep.subr.mxu0 0.0
      %496 = vmatpush1.msra.mxu0 %v430
      %497 = vmatprep.subr.mxu0 0.0
      %498 = vmatpush2.msra.mxu0 0.0
      %499 = vmatprep.subr.mxu0 0.0
      %500 = vmatpush2.msra.mxu0 0.0
      %501 = vmatprep.subr.mxu0 0.0
      %502 = vmatpush2.msra.mxu0 0.0
      %503 = vmatprep.subr.mxu0 0.0
      %504 = vmatpush2.msra.mxu0 0.0
      %505 = vmatprep.subr.mxu0 0.0
      %506 = vmatpush2.msra.mxu0 0.0
      %507 = vmatprep.subr.mxu0 0.0
      %508 = vmatpush2.msra.mxu0 0.0
      %509 = vmatprep.subr.mxu0 0.0
      %510 = vmatpush2.msra.mxu0 0.0
      %511 = vmatprep.subr.mxu0 0.0
      %512 = vmatpush2.msra.mxu0 0.0
      %513 = vmatprep.subr.mxu0 0.0
      %514 = vmatpush2.msra.mxu0 0.0
      %515 = vmatprep.subr.mxu0 0.0
      %516 = vmatpush2.msra.mxu0 0.0
      %517 = vmatprep.subr.mxu0 0.0
      %518 = vmatpush2.msra.mxu0 0.0
      %519 = vmatprep.subr.mxu0 0.0
      %520 = vmatpush2.msra.mxu0 0.0
      %521 = vmatprep.subr.mxu0 0.0
      %522 = vmatpush2.msra.mxu0 0.0
      %523 = vmatprep.subr.mxu0 0.0
      %524 = vmatpush2.msra.mxu0 0.0
      %525 = vmatprep.subr.mxu0 0.0
      %526 = vmatpush2.msra.mxu0 0.0
      %527 = vmatprep.subr.mxu0 0.0
      %528 = vmatpush2.msra.mxu0 0.0
      %529 = vmatprep.mubr.f32.mxu0 0.0
      %530 = vmatmul.mubr.f32.gmra.mxu0 %v463
      %v531 = vpop.f32.mrf.mxu0
      %v532 = vadd.f32 %v459, %v531
      %v533 = vpop.f32.mrf.mxu0
      %534 = vdwg.mxu0
      %v535 = vxor.u32 %v532, 2147483648
      %v536 = vmul.f32 %v535, 1.442695
      %v537 = vpow.pop %v536
      %v538 = vadd.f32 %v537, 1.0
      %v539 = vrcp.pop %v538
      %v540 = vmul.f32 1.0, %v539
      %v542 = vlaneseq
      %v543 = vshrl.u32 %v542, 7
      %v544 = vsub.s32 0, %v543
      %v545 = vrot.slane %v443, %v544
      %v548 = vsel %vm453, %v428, 0
      %550 = vmatprep.subr.mxu0 0.0
      %551 = vmatpush1.msra.mxu0 0.0
      %552 = vmatprep.subr.mxu0 0.0
      %553 = vmatpush1.msra.mxu0 0.0
      %554 = vmatprep.subr.mxu0 0.0
      %555 = vmatpush1.msra.mxu0 0.0
      %556 = vmatprep.subr.mxu0 0.0
      %557 = vmatpush1.msra.mxu0 0.0
      %558 = vmatprep.subr.mxu0 0.0
      %559 = vmatpush1.msra.mxu0 0.0
      %560 = vmatprep.subr.mxu0 0.0
      %561 = vmatpush1.msra.mxu0 0.0
      %562 = vmatprep.subr.mxu0 0.0
      %563 = vmatpush1.msra.mxu0 0.0
      %564 = vmatprep.subr.mxu0 0.0
      %565 = vmatpush1.msra.mxu0 0.0
      %566 = vmatprep.subr.mxu0 0.0
      %567 = vmatpush1.msra.mxu0 0.0
      %568 = vmatprep.subr.mxu0 0.0
      %569 = vmatpush1.msra.mxu0 0.0
      %570 = vmatprep.subr.mxu0 0.0
      %571 = vmatpush1.msra.mxu0 0.0
      %572 = vmatprep.subr.mxu0 0.0
      %573 = vmatpush1.msra.mxu0 0.0
      %574 = vmatprep.subr.mxu0 0.0
      %575 = vmatpush1.msra.mxu0 %v442
      %576 = vmatprep.subr.mxu0 0.0
      %577 = vmatpush1.msra.mxu0 %v441
      %578 = vmatprep.subr.mxu0 0.0
      %579 = vmatpush1.msra.mxu0 %v440
      %580 = vmatprep.subr.mxu0 0.0
      %581 = vmatpush1.msra.mxu0 %v439
      %582 = vmatprep.subr.mxu0 0.0
      %583 = vmatpush2.msra.mxu0 0.0
      %584 = vmatprep.subr.mxu0 0.0
      %585 = vmatpush2.msra.mxu0 0.0
      %586 = vmatprep.subr.mxu0 0.0
      %587 = vmatpush2.msra.mxu0 0.0
      %588 = vmatprep.subr.mxu0 0.0
      %589 = vmatpush2.msra.mxu0 0.0
      %590 = vmatprep.subr.mxu0 0.0
      %591 = vmatpush2.msra.mxu0 0.0
      %592 = vmatprep.subr.mxu0 0.0
      %593 = vmatpush2.msra.mxu0 0.0
      %594 = vmatprep.subr.mxu0 0.0
      %595 = vmatpush2.msra.mxu0 0.0
      %596 = vmatprep.subr.mxu0 0.0
      %597 = vmatpush2.msra.mxu0 0.0
      %598 = vmatprep.subr.mxu0 0.0
      %599 = vmatpush2.msra.mxu0 0.0
      %600 = vmatprep.subr.mxu0 0.0
      %601 = vmatpush2.msra.mxu0 0.0
      %602 = vmatprep.subr.mxu0 0.0
      %603 = vmatpush2.msra.mxu0 0.0
      %604 = vmatprep.subr.mxu0 0.0
      %605 = vmatpush2.msra.mxu0 0.0
      %606 = vmatprep.subr.mxu0 0.0
      %607 = vmatpush2.msra.mxu0 0.0
      %608 = vmatprep.subr.mxu0 0.0
      %609 = vmatpush2.msra.mxu0 0.0
      %610 = vmatprep.subr.mxu0 0.0
      %611 = vmatpush2.msra.mxu0 0.0
      %612 = vmatprep.subr.mxu0 0.0
      %613 = vmatpush2.msra.mxu0 0.0
      %614 = vmatprep.mubr.f32.mxu0 0.0
      %615 = vmatmul.mubr.f32.gmra.mxu0 %v548
      %v616 = vpop.f32.mrf.mxu0
      %v617 = vadd.f32 %v545, %v616
      %v618 = vpop.f32.mrf.mxu0
      %619 = vdwg.mxu0
      %v621 = vlaneseq
      %v622 = vshrl.u32 %v621, 7
      %v623 = vsub.s32 0, %v622
      %v624 = vrot.slane %v448, %v623
      %v626 = vsel %vm453, %v429, 0
      %628 = vmatprep.subr.mxu0 0.0
      %629 = vmatpush1.msra.mxu0 0.0
      %630 = vmatprep.subr.mxu0 0.0
      %631 = vmatpush1.msra.mxu0 0.0
      %632 = vmatprep.subr.mxu0 0.0
      %633 = vmatpush1.msra.mxu0 0.0
      %634 = vmatprep.subr.mxu0 0.0
      %635 = vmatpush1.msra.mxu0 0.0
      %636 = vmatprep.subr.mxu0 0.0
      %637 = vmatpush1.msra.mxu0 0.0
      %638 = vmatprep.subr.mxu0 0.0
      %639 = vmatpush1.msra.mxu0 0.0
      %640 = vmatprep.subr.mxu0 0.0
      %641 = vmatpush1.msra.mxu0 0.0
      %642 = vmatprep.subr.mxu0 0.0
      %643 = vmatpush1.msra.mxu0 0.0
      %644 = vmatprep.subr.mxu0 0.0
      %645 = vmatpush1.msra.mxu0 0.0
      %646 = vmatprep.subr.mxu0 0.0
      %647 = vmatpush1.msra.mxu0 0.0
      %648 = vmatprep.subr.mxu0 0.0
      %649 = vmatpush1.msra.mxu0 0.0
      %650 = vmatprep.subr.mxu0 0.0
      %651 = vmatpush1.msra.mxu0 0.0
      %652 = vmatprep.subr.mxu0 0.0
      %653 = vmatpush1.msra.mxu0 %v447
      %654 = vmatprep.subr.mxu0 0.0
      %655 = vmatpush1.msra.mxu0 %v446
      %656 = vmatprep.subr.mxu0 0.0
      %657 = vmatpush1.msra.mxu0 %v445
      %658 = vmatprep.subr.mxu0 0.0
      %659 = vmatpush1.msra.mxu0 %v444
      %660 = vmatprep.subr.mxu0 0.0
      %661 = vmatpush2.msra.mxu0 0.0
      %662 = vmatprep.subr.mxu0 0.0
      %663 = vmatpush2.msra.mxu0 0.0
      %664 = vmatprep.subr.mxu0 0.0
      %665 = vmatpush2.msra.mxu0 0.0
      %666 = vmatprep.subr.mxu0 0.0
      %667 = vmatpush2.msra.mxu0 0.0
      %668 = vmatprep.subr.mxu0 0.0
      %669 = vmatpush2.msra.mxu0 0.0
      %670 = vmatprep.subr.mxu0 0.0
      %671 = vmatpush2.msra.mxu0 0.0
      %672 = vmatprep.subr.mxu0 0.0
      %673 = vmatpush2.msra.mxu0 0.0
      %674 = vmatprep.subr.mxu0 0.0
      %675 = vmatpush2.msra.mxu0 0.0
      %676 = vmatprep.subr.mxu0 0.0
      %677 = vmatpush2.msra.mxu0 0.0
      %678 = vmatprep.subr.mxu0 0.0
      %679 = vmatpush2.msra.mxu0 0.0
      %680 = vmatprep.subr.mxu0 0.0
      %681 = vmatpush2.msra.mxu0 0.0
      %682 = vmatprep.subr.mxu0 0.0
      %683 = vmatpush2.msra.mxu0 0.0
      %684 = vmatprep.subr.mxu0 0.0
      %685 = vmatpush2.msra.mxu0 0.0
      %686 = vmatprep.subr.mxu0 0.0
      %687 = vmatpush2.msra.mxu0 0.0
      %688 = vmatprep.subr.mxu0 0.0
      %689 = vmatpush2.msra.mxu0 0.0
      %690 = vmatprep.subr.mxu0 0.0
      %691 = vmatpush2.msra.mxu0 0.0
      %692 = vmatprep.mubr.f32.mxu0 0.0
      %693 = vmatmul.mubr.f32.gmra.mxu0 %v626
      %v694 = vpop.f32.mrf.mxu0
      %v695 = vadd.f32 %v624, %v694
      %v696 = vpop.f32.mrf.mxu0
      %697 = vdwg.mxu0
      %v698 = vmul.f32 %v540, %v695
      %v699 = vadd.f32 %v617, %v698
      %v700 = vtanh.pop %v699
      %v701 = vsub.f32 1.0, %v540
      %703 = vrot.lane.b32.xlu0 %v700, 32
      %v704 = vpop.permute.xlu0 %703
      %v706 = vmul.f32 %v701, %v704
      %v707 = vmul.f32 %v540, %v451
      %v708 = vadd.f32 %v706, %v707
      %710 = vrot.lane.b32.xlu0 %v708, 96
      %v711 = vpop.permute.xlu0 %710
      %vm713 = vcmask 254976
      %714 = vst.msk [vmem:[#allocation2] sm:$0x3] %vm713, %v711
      %v715 = vld [vmem:[%s8] sm:$0xff]
      %v716 = vld [vmem:[%s8 + $0x8] sm:$0xff]
      %v717 = vld [vmem:[%s8 + $0x10] sm:$0xff]
      %v718 = vld [vmem:[%s8 + $0x18] sm:$0xff]
      %v719 = vld [vmem:[%s9] sm:$0x1]
      %v721 = vlaneseq
      %v722 = vshrl.u32 %v721, 7
      %v723 = vsub.s32 0, %v722
      %v724 = vrot.slane %v719, %v723
      %v726 = vsel %vm453, %v711, 0
      %728 = vmatprep.subr.mxu0 0.0
      %729 = vmatpush1.msra.mxu0 0.0
      %730 = vmatprep.subr.mxu0 0.0
      %731 = vmatpush1.msra.mxu0 0.0
      %732 = vmatprep.subr.mxu0 0.0
      %733 = vmatpush1.msra.mxu0 0.0
      %734 = vmatprep.subr.mxu0 0.0
      %735 = vmatpush1.msra.mxu0 0.0
      %736 = vmatprep.subr.mxu0 0.0
      %737 = vmatpush1.msra.mxu0 0.0
      %738 = vmatprep.subr.mxu0 0.0
      %739 = vmatpush1.msra.mxu0 0.0
      %740 = vmatprep.subr.mxu0 0.0
      %741 = vmatpush1.msra.mxu0 0.0
      %742 = vmatprep.subr.mxu0 0.0
      %743 = vmatpush1.msra.mxu0 0.0
      %744 = vmatprep.subr.mxu0 0.0
      %745 = vmatpush1.msra.mxu0 0.0
      %746 = vmatprep.subr.mxu0 0.0
      %747 = vmatpush1.msra.mxu0 0.0
      %748 = vmatprep.subr.mxu0 0.0
      %749 = vmatpush1.msra.mxu0 0.0
      %750 = vmatprep.subr.mxu0 0.0
      %751 = vmatpush1.msra.mxu0 0.0
      %752 = vmatprep.subr.mxu0 0.0
      %753 = vmatpush1.msra.mxu0 %v718
      %754 = vmatprep.subr.mxu0 0.0
      %755 = vmatpush1.msra.mxu0 %v717
      %756 = vmatprep.subr.mxu0 0.0
      %757 = vmatpush1.msra.mxu0 %v716
      %758 = vmatprep.subr.mxu0 0.0
      %759 = vmatpush1.msra.mxu0 %v715
      %760 = vmatprep.subr.mxu0 0.0
      %761 = vmatpush2.msra.mxu0 0.0
      %762 = vmatprep.subr.mxu0 0.0
      %763 = vmatpush2.msra.mxu0 0.0
      %764 = vmatprep.subr.mxu0 0.0
      %765 = vmatpush2.msra.mxu0 0.0
      %766 = vmatprep.subr.mxu0 0.0
      %767 = vmatpush2.msra.mxu0 0.0
      %768 = vmatprep.subr.mxu0 0.0
      %769 = vmatpush2.msra.mxu0 0.0
      %770 = vmatprep.subr.mxu0 0.0
      %771 = vmatpush2.msra.mxu0 0.0
      %772 = vmatprep.subr.mxu0 0.0
      %773 = vmatpush2.msra.mxu0 0.0
      %774 = vmatprep.subr.mxu0 0.0
      %775 = vmatpush2.msra.mxu0 0.0
      %776 = vmatprep.subr.mxu0 0.0
      %777 = vmatpush2.msra.mxu0 0.0
      %778 = vmatprep.subr.mxu0 0.0
      %779 = vmatpush2.msra.mxu0 0.0
      %780 = vmatprep.subr.mxu0 0.0
      %781 = vmatpush2.msra.mxu0 0.0
      %782 = vmatprep.subr.mxu0 0.0
      %783 = vmatpush2.msra.mxu0 0.0
      %784 = vmatprep.subr.mxu0 0.0
      %785 = vmatpush2.msra.mxu0 0.0
      %786 = vmatprep.subr.mxu0 0.0
      %787 = vmatpush2.msra.mxu0 0.0
      %788 = vmatprep.subr.mxu0 0.0
      %789 = vmatpush2.msra.mxu0 0.0
      %790 = vmatprep.subr.mxu0 0.0
      %791 = vmatpush2.msra.mxu0 0.0
      %792 = vmatprep.mubr.f32.mxu0 0.0
      %793 = vmatmul.mubr.f32.gmra.mxu0 %v726
      %v794 = vpop.f32.mrf.mxu0
      %v795 = vadd.f32 %v724, %v794
      %v796 = vpop.f32.mrf.mxu0
      %797 = vdwg.mxu0
      %798 = vst [vmem:[%s337] sm:$0x3] %v795
      %p799 = scmp.lt.s32.totalorder %s21, 7
      // Predicated region
      $region65: #{seq2seq_forward.3} parent=59 // pred_check
        %p800 = pneg %p799
      $region66: #{seq2seq_forward.3} parent=59 // pred_check_branch
        %802 = sbr.rel (%p800) target = $region68
      $region67: #{seq2seq_forward.3} parent=59 // pred_region
        %v803 = vlaneseq
        %v804 = vand.u32 %v803, 127
        %vm805 = vcmp.lt.s32.totalorder %v804, 24
        %v806 = vsel %vm805, %v795, -1e+30
        %vm807 = vcmask 1041408
        %v808 = vsel %vm807, %v806, -inf
        %809 = vmax.xlane.f32.xlu0 %v808
        %v810 = vpop.xlane.xlu0 %809
        %vm811 = vcmp.eq.f32.partialorder %v806, %v810
        %v812 = vsel %vm811, %v804, 128
        %v813 = vsel %vm807, %v812, 2147483647
        %v814 = vand.u32 %v813, 65535
        %v815 = vshra.s32 %v813, 16
        %v816 = vcvt.s32.f32 %v814
        %v817 = vcvt.s32.f32 %v815
        %818 = vmin.xlane.f32.xlu0 %v817
        %v819 = vpop.xlane.xlu0 %818
        %vm820 = vcmp.eq.f32.partialorder %v817, %v819
        %v821 = vsel %vm820, %v816, inf
        %822 = vmin.xlane.f32.xlu0 %v821
        %v823 = vpop.xlane.xlu0 %822
        %v824 = vcvt.f32.s32 %v823
        %v825 = vcvt.f32.s32 %v819
        %v826 = vshll.u32 %v825, 16
        %v827 = vadd.s32 %v826, %v824
        %v828 = vld [vmem:[%s1] sm:$0xff]
        %v829 = vld [vmem:[%s1 + $0x8] sm:$0xff]
        %v830 = vld [vmem:[%s1 + $0x10] sm:$0xff]
        %vm831 = vcmp.eq.s32.totalorder %v804, %v827
        %v832 = vsel %vm831, 1, 0
        %v833 = vcvt.s32.f32 %v832
        %vm834 = vcmask 195584
        %v836 = vsel %vm834, %v833, 0
        %838 = vmatprep.subr.mxu0 0.0
        %839 = vmatpush1.msra.mxu0 0.0
        %840 = vmatprep.subr.mxu0 0.0
        %841 = vmatpush1.msra.mxu0 0.0
        %842 = vmatprep.subr.mxu0 0.0
        %843 = vmatpush1.msra.mxu0 0.0
        %844 = vmatprep.subr.mxu0 0.0
        %845 = vmatpush1.msra.mxu0 0.0
        %846 = vmatprep.subr.mxu0 0.0
        %847 = vmatpush1.msra.mxu0 0.0
        %848 = vmatprep.subr.mxu0 0.0
        %849 = vmatpush1.msra.mxu0 0.0
        %850 = vmatprep.subr.mxu0 0.0
        %851 = vmatpush1.msra.mxu0 0.0
        %852 = vmatprep.subr.mxu0 0.0
        %853 = vmatpush1.msra.mxu0 0.0
        %854 = vmatprep.subr.mxu0 0.0
        %855 = vmatpush1.msra.mxu0 0.0
        %856 = vmatprep.subr.mxu0 0.0
        %857 = vmatpush1.msra.mxu0 0.0
        %858 = vmatprep.subr.mxu0 0.0
        %859 = vmatpush1.msra.mxu0 0.0
        %860 = vmatprep.subr.mxu0 0.0
        %861 = vmatpush1.msra.mxu0 0.0
        %862 = vmatprep.subr.mxu0 0.0
        %863 = vmatpush1.msra.mxu0 0.0
        %864 = vmatprep.subr.mxu0 0.0
        %865 = vmatpush1.msra.mxu0 %v830
        %866 = vmatprep.subr.mxu0 0.0
        %867 = vmatpush1.msra.mxu0 %v829
        %868 = vmatprep.subr.mxu0 0.0
        %869 = vmatpush1.msra.mxu0 %v828
        %870 = vmatprep.subr.mxu0 0.0
        %871 = vmatpush2.msra.mxu0 0.0
        %872 = vmatprep.subr.mxu0 0.0
        %873 = vmatpush2.msra.mxu0 0.0
        %874 = vmatprep.subr.mxu0 0.0
        %875 = vmatpush2.msra.mxu0 0.0
        %876 = vmatprep.subr.mxu0 0.0
        %877 = vmatpush2.msra.mxu0 0.0
        %878 = vmatprep.subr.mxu0 0.0
        %879 = vmatpush2.msra.mxu0 0.0
        %880 = vmatprep.subr.mxu0 0.0
        %881 = vmatpush2.msra.mxu0 0.0
        %882 = vmatprep.subr.mxu0 0.0
        %883 = vmatpush2.msra.mxu0 0.0
        %884 = vmatprep.subr.mxu0 0.0
        %885 = vmatpush2.msra.mxu0 0.0
        %886 = vmatprep.subr.mxu0 0.0
        %887 = vmatpush2.msra.mxu0 0.0
        %888 = vmatprep.subr.mxu0 0.0
        %889 = vmatpush2.msra.mxu0 0.0
        %890 = vmatprep.subr.mxu0 0.0
        %891 = vmatpush2.msra.mxu0 0.0
        %892 = vmatprep.subr.mxu0 0.0
        %893 = vmatpush2.msra.mxu0 0.0
        %894 = vmatprep.subr.mxu0 0.0
        %895 = vmatpush2.msra.mxu0 0.0
        %896 = vmatprep.subr.mxu0 0.0
        %897 = vmatpush2.msra.mxu0 0.0
        %898 = vmatprep.subr.mxu0 0.0
        %899 = vmatpush2.msra.mxu0 0.0
        %900 = vmatprep.subr.mxu0 0.0
        %901 = vmatpush2.msra.mxu0 0.0
        %902 = vmatprep.mubr.f32.mxu0 0.0
        %903 = vmatmul.mubr.f32.gmra.mxu0 %v836
        %v904 = vpop.f32.mrf.mxu0
        %v905 = vadd.f32 0.0, %v904
        %v906 = vpop.f32.mrf.mxu0
        %907 = vdwg.mxu0
        %908 = vst.msk [vmem:[#allocation3] sm:$0x3] %vm713, %v905
      $region68: #{seq2seq_forward.3} parent=59 // pred_fallthru
        _
      %p909 = scmp.lt.s32.totalorder %s21, 7
      %s910 = scalar_select %p909, %s21, 7
      %s911 = smul.addr %s910, 2
      %s912 = scalar_lea.vmem %s10, %s911
      // Predicated region
      $region69: #{seq2seq_forward.3} parent=59 // pred_check
        %p913 = pneg %p249
      $region70: #{seq2seq_forward.3} parent=59 // pred_check_branch
        %915 = sbr.rel (%p913) target = $region72
      $region71: #{seq2seq_forward.3} parent=59 // pred_region
        _
      $region72: #{seq2seq_forward.3} parent=59 // pred_fallthru
        _
    $region60: #{seq2seq_forward.3} parent=5 // pred_fallthru
      _
    %p916 = scmp.le.s32.totalorder 2, %s16
    // Predicated region
    $region73: #{seq2seq_forward.3} parent=5 // pred_check
      %p917 = pneg %p916
    $region74: #{seq2seq_forward.3} parent=5 // pred_check_branch
      %919 = sbr.rel (%p917) target = $region76
    $region75: #{seq2seq_forward.3} parent=5 // pred_region
      %s920 = ssub.s32 %s16, 2
      // Predicated region
      $region77: #{seq2seq_forward.3} parent=75 // pred_check
        %p921 = pneg %p255
      $region78: #{seq2seq_forward.3} parent=75 // pred_check_branch
        %923 = sbr.rel (%p921) target = $region80
      $region79: #{seq2seq_forward.3} parent=75 // pred_region
        %p924 = scmp.lt.s32.totalorder %s22, 7
        %s925 = scalar_select %p924, %s22, 7
        %s926 = smul.addr %s925, 2
        %s927 = scalar_lea.vmem %s10, %s926
      $region80: #{seq2seq_forward.3} parent=75 // pred_fallthru
        _
    $region76: #{seq2seq_forward.3} parent=5 // pred_fallthru
      _
  $region6: #{seq2seq_forward.3} parent=0 // loop_footer
    %s20 = sadd.s32 1, %s16
  $region7: #{seq2seq_forward.3} parent=0 // loop_footer_branch
    %15 = sbr.rel target = $region3
  $region8: #{seq2seq_forward.3} parent=0 // loop_exit
    _

// kernel: seq2seq_forward.2
$region0: #{seq2seq_forward.2}
  #allocation0 [shape = 'u32[]', space=smem, size = 0x4, offset = 0x4, fixed_abs, tag = 'smem constant byte address 0x4 - core index']
  #allocation1 [shape = 'u32[144,128]{1,0:T(1,128)}', space=vmem, size = 0x12000, scoped, tag = 'internal scratch']
  %s0 = inlined_call_operand.vmem [shape: f32[8,2,32], index: 0, kind: input, shape index: {}]
  %s1 = inlined_call_operand.vmem [shape: f32[64,64], index: 1, kind: input, shape index: {}]
  %s2 = inlined_call_operand.vmem [shape: f32[1,64], index: 2, kind: input, shape index: {}]
  %s3 = inlined_call_operand.vmem [shape: f32[32,32], index: 3, kind: input, shape index: {}]
  %s4 = inlined_call_operand.vmem [shape: f32[1,32], index: 4, kind: input, shape index: {}]
  %s5 = inlined_call_operand.vmem [shape: f32[32,32], index: 5, kind: input, shape index: {}]
  %s6 = inlined_call_operand.vmem [shape: f32[1,32], index: 6, kind: input, shape index: {}]
  %s7 = inlined_call_operand.vmem [shape: f32[2,32], index: 7, kind: output, shape index: {}]
  %s8 = sld [smem:[#allocation0]]
  $region38: #{seq2seq_forward.2} parent=0
    _
  %s10 = ssub.s32 1, %s8
  %s11 = scalar_select 0, %s10, %s8
  // Predicated region
  $region2: #{seq2seq_forward.2} parent=0 // pred_check
    _
  $region3: #{seq2seq_forward.2} parent=0 // pred_check_branch
    %13 = sbr.rel (0) target = $region5
  $region4: #{seq2seq_forward.2} parent=0 // pred_region
    _
  $region5: #{seq2seq_forward.2} parent=0 // pred_fallthru
    _
  // Predicated region
  $region6: #{seq2seq_forward.2} parent=0 // pred_check
    _
  $region7: #{seq2seq_forward.2} parent=0 // pred_check_branch
    %15 = sbr.rel (0) target = $region9
  $region8: #{seq2seq_forward.2} parent=0 // pred_region
    _
  $region9: #{seq2seq_forward.2} parent=0 // pred_fallthru
    _
  // Predicated region
  $region10: #{seq2seq_forward.2} parent=0 // pred_check
    _
  $region11: #{seq2seq_forward.2} parent=0 // pred_check_branch
    %17 = sbr.rel (0) target = $region13
  $region12: #{seq2seq_forward.2} parent=0 // pred_region
    _
  $region13: #{seq2seq_forward.2} parent=0 // pred_fallthru
    _
  // Predicated region
  $region14: #{seq2seq_forward.2} parent=0 // pred_check
    _
  $region15: #{seq2seq_forward.2} parent=0 // pred_check_branch
    %19 = sbr.rel (0) target = $region17
  $region16: #{seq2seq_forward.2} parent=0 // pred_region
    _
  $region17: #{seq2seq_forward.2} parent=0 // pred_fallthru
    _
  // Predicated region
  $region18: #{seq2seq_forward.2} parent=0 // pred_check
    _
  $region19: #{seq2seq_forward.2} parent=0 // pred_check_branch
    %21 = sbr.rel (0) target = $region21
  $region20: #{seq2seq_forward.2} parent=0 // pred_region
    _
  $region21: #{seq2seq_forward.2} parent=0 // pred_fallthru
    _
  // Predicated region
  $region22: #{seq2seq_forward.2} parent=0 // pred_check
    _
  $region23: #{seq2seq_forward.2} parent=0 // pred_check_branch
    %23 = sbr.rel (0) target = $region25
  $region24: #{seq2seq_forward.2} parent=0 // pred_region
    _
  $region25: #{seq2seq_forward.2} parent=0 // pred_fallthru
    _
  // Predicated region
  $region26: #{seq2seq_forward.2} parent=0 // pred_check
    _
  $region27: #{seq2seq_forward.2} parent=0 // pred_check_branch
    %25 = sbr.rel (0) target = $region29
  $region28: #{seq2seq_forward.2} parent=0 // pred_region
    _
  $region29: #{seq2seq_forward.2} parent=0 // pred_fallthru
    _
  %v26 = vld [vmem:[%s1] sm:$0xff]
  %v27 = vld [vmem:[%s1 + $0x8] sm:$0xff]
  %v28 = vld [vmem:[%s1 + $0x10] sm:$0xff]
  %v29 = vld [vmem:[%s1 + $0x18] sm:$0xff]
  %v30 = vld [vmem:[%s1 + $0x20] sm:$0xff]
  %v31 = vld [vmem:[%s1 + $0x28] sm:$0xff]
  %v32 = vld [vmem:[%s1 + $0x30] sm:$0xff]
  %v33 = vld [vmem:[%s1 + $0x38] sm:$0xff]
  %v34 = vld [vmem:[%s2] sm:$0x1]
  %v35 = vld [vmem:[%s3] sm:$0xff]
  %v36 = vld [vmem:[%s3 + $0x8] sm:$0xff]
  %v37 = vld [vmem:[%s3 + $0x10] sm:$0xff]
  %v38 = vld [vmem:[%s3 + $0x18] sm:$0xff]
  %v39 = vld [vmem:[%s4] sm:$0x1]
  %v40 = vld [vmem:[%s5] sm:$0xff]
  %v41 = vld [vmem:[%s5 + $0x8] sm:$0xff]
  %v42 = vld [vmem:[%s5 + $0x10] sm:$0xff]
  %v43 = vld [vmem:[%s5 + $0x18] sm:$0xff]
  %v44 = vld [vmem:[%s6] sm:$0x1]
  %v45 = vld [vmem:[%s0] sm:$0x3]
  %vm46 = vcmask 261120
  %v47 = vsel %vm46, %v45, 0.0
  %v49 = vlaneseq
  %v50 = vshrl.u32 %v49, 7
  %v51 = vsub.s32 0, %v50
  %v52 = vrot.slane %v34, %v51
  %vm54 = vcmask 523264
  %v56 = vsel %vm54, %v47, 0
  %58 = vmatprep.subr.mxu0 0.0
  %59 = vmatpush1.msra.mxu0 0.0
  %60 = vmatprep.subr.mxu0 0.0
  %61 = vmatpush1.msra.mxu0 0.0
  %62 = vmatprep.subr.mxu0 0.0
  %63 = vmatpush1.msra.mxu0 0.0
  %64 = vmatprep.subr.mxu0 0.0
  %65 = vmatpush1.msra.mxu0 0.0
  %66 = vmatprep.subr.mxu0 0.0
  %67 = vmatpush1.msra.mxu0 0.0
  %68 = vmatprep.subr.mxu0 0.0
  %69 = vmatpush1.msra.mxu0 0.0
  %70 = vmatprep.subr.mxu0 0.0
  %71 = vmatpush1.msra.mxu0 0.0
  %72 = vmatprep.subr.mxu0 0.0
  %73 = vmatpush1.msra.mxu0 0.0
  %74 = vmatprep.subr.mxu0 0.0
  %75 = vmatpush1.msra.mxu0 %v33
  %76 = vmatprep.subr.mxu0 0.0
  %77 = vmatpush1.msra.mxu0 %v32
  %78 = vmatprep.subr.mxu0 0.0
  %79 = vmatpush1.msra.mxu0 %v31
  %80 = vmatprep.subr.mxu0 0.0
  %81 = vmatpush1.msra.mxu0 %v30
  %82 = vmatprep.subr.mxu0 0.0
  %83 = vmatpush1.msra.mxu0 %v29
  %84 = vmatprep.subr.mxu0 0.0
  %85 = vmatpush1.msra.mxu0 %v28
  %86 = vmatprep.subr.mxu0 0.0
  %87 = vmatpush1.msra.mxu0 %v27
  %88 = vmatprep.subr.mxu0 0.0
  %89 = vmatpush1.msra.mxu0 %v26
  %90 = vmatprep.subr.mxu0 0.0
  %91 = vmatpush2.msra.mxu0 0.0
  %92 = vmatprep.subr.mxu0 0.0
  %93 = vmatpush2.msra.mxu0 0.0
  %94 = vmatprep.subr.mxu0 0.0
  %95 = vmatpush2.msra.mxu0 0.0
  %96 = vmatprep.subr.mxu0 0.0
  %97 = vmatpush2.msra.mxu0 0.0
  %98 = vmatprep.subr.mxu0 0.0
  %99 = vmatpush2.msra.mxu0 0.0
  %100 = vmatprep.subr.mxu0 0.0
  %101 = vmatpush2.msra.mxu0 0.0
  %102 = vmatprep.subr.mxu0 0.0
  %103 = vmatpush2.msra.mxu0 0.0
  %104 = vmatprep.subr.mxu0 0.0
  %105 = vmatpush2.msra.mxu0 0.0
  %106 = vmatprep.subr.mxu0 0.0
  %107 = vmatpush2.msra.mxu0 0.0
  %108 = vmatprep.subr.mxu0 0.0
  %109 = vmatpush2.msra.mxu0 0.0
  %110 = vmatprep.subr.mxu0 0.0
  %111 = vmatpush2.msra.mxu0 0.0
  %112 = vmatprep.subr.mxu0 0.0
  %113 = vmatpush2.msra.mxu0 0.0
  %114 = vmatprep.subr.mxu0 0.0
  %115 = vmatpush2.msra.mxu0 0.0
  %116 = vmatprep.subr.mxu0 0.0
  %117 = vmatpush2.msra.mxu0 0.0
  %118 = vmatprep.subr.mxu0 0.0
  %119 = vmatpush2.msra.mxu0 0.0
  %120 = vmatprep.subr.mxu0 0.0
  %121 = vmatpush2.msra.mxu0 0.0
  %122 = vmatprep.mubr.f32.mxu0 0.0
  %123 = vmatmul.mubr.f32.gmra.mxu0 %v56
  %v124 = vpop.f32.mrf.mxu0
  %v125 = vadd.f32 %v52, %v124
  %v126 = vpop.f32.mrf.mxu0
  %127 = vdwg.mxu0
  %v128 = vxor.u32 %v125, 2147483648
  %v129 = vmul.f32 %v128, 1.442695
  %v130 = vpow.pop %v129
  %v131 = vadd.f32 %v130, 1.0
  %v132 = vrcp.pop %v131
  %v133 = vmul.f32 1.0, %v132
  %v135 = vlaneseq
  %v136 = vshrl.u32 %v135, 7
  %v137 = vsub.s32 0, %v136
  %v138 = vrot.slane %v39, %v137
  %v141 = vsel %vm46, %v45, 0
  %143 = vmatprep.subr.mxu0 0.0
  %144 = vmatpush1.msra.mxu0 0.0
  %145 = vmatprep.subr.mxu0 0.0
  %146 = vmatpush1.msra.mxu0 0.0
  %147 = vmatprep.subr.mxu0 0.0
  %148 = vmatpush1.msra.mxu0 0.0
  %149 = vmatprep.subr.mxu0 0.0
  %150 = vmatpush1.msra.mxu0 0.0
  %151 = vmatprep.subr.mxu0 0.0
  %152 = vmatpush1.msra.mxu0 0.0
  %153 = vmatprep.subr.mxu0 0.0
  %154 = vmatpush1.msra.mxu0 0.0
  %155 = vmatprep.subr.mxu0 0.0
  %156 = vmatpush1.msra.mxu0 0.0
  %157 = vmatprep.subr.mxu0 0.0
  %158 = vmatpush1.msra.mxu0 0.0
  %159 = vmatprep.subr.mxu0 0.0
  %160 = vmatpush1.msra.mxu0 0.0
  %161 = vmatprep.subr.mxu0 0.0
  %162 = vmatpush1.msra.mxu0 0.0
  %163 = vmatprep.subr.mxu0 0.0
  %164 = vmatpush1.msra.mxu0 0.0
  %165 = vmatprep.subr.mxu0 0.0
  %166 = vmatpush1.msra.mxu0 0.0
  %167 = vmatprep.subr.mxu0 0.0
  %168 = vmatpush1.msra.mxu0 %v38
  %169 = vmatprep.subr.mxu0 0.0
  %170 = vmatpush1.msra.mxu0 %v37
  %171 = vmatprep.subr.mxu0 0.0
  %172 = vmatpush1.msra.mxu0 %v36
  %173 = vmatprep.subr.mxu0 0.0
  %174 = vmatpush1.msra.mxu0 %v35
  %175 = vmatprep.subr.mxu0 0.0
  %176 = vmatpush2.msra.mxu0 0.0
  %177 = vmatprep.subr.mxu0 0.0
  %178 = vmatpush2.msra.mxu0 0.0
  %179 = vmatprep.subr.mxu0 0.0
  %180 = vmatpush2.msra.mxu0 0.0
  %181 = vmatprep.subr.mxu0 0.0
  %182 = vmatpush2.msra.mxu0 0.0
  %183 = vmatprep.subr.mxu0 0.0
  %184 = vmatpush2.msra.mxu0 0.0
  %185 = vmatprep.subr.mxu0 0.0
  %186 = vmatpush2.msra.mxu0 0.0
  %187 = vmatprep.subr.mxu0 0.0
  %188 = vmatpush2.msra.mxu0 0.0
  %189 = vmatprep.subr.mxu0 0.0
  %190 = vmatpush2.msra.mxu0 0.0
  %191 = vmatprep.subr.mxu0 0.0
  %192 = vmatpush2.msra.mxu0 0.0
  %193 = vmatprep.subr.mxu0 0.0
  %194 = vmatpush2.msra.mxu0 0.0
  %195 = vmatprep.subr.mxu0 0.0
  %196 = vmatpush2.msra.mxu0 0.0
  %197 = vmatprep.subr.mxu0 0.0
  %198 = vmatpush2.msra.mxu0 0.0
  %199 = vmatprep.subr.mxu0 0.0
  %200 = vmatpush2.msra.mxu0 0.0
  %201 = vmatprep.subr.mxu0 0.0
  %202 = vmatpush2.msra.mxu0 0.0
  %203 = vmatprep.subr.mxu0 0.0
  %204 = vmatpush2.msra.mxu0 0.0
  %205 = vmatprep.subr.mxu0 0.0
  %206 = vmatpush2.msra.mxu0 0.0
  %207 = vmatprep.mubr.f32.mxu0 0.0
  %208 = vmatmul.mubr.f32.gmra.mxu0 %v141
  %v209 = vpop.f32.mrf.mxu0
  %v210 = vadd.f32 %v138, %v209
  %v211 = vpop.f32.mrf.mxu0
  %212 = vdwg.mxu0
  %v214 = vlaneseq
  %v215 = vshrl.u32 %v214, 7
  %v216 = vsub.s32 0, %v215
  %v217 = vrot.slane %v44, %v216
  %v220 = vsel %vm46, 0.0, 0
  %222 = vmatprep.subr.mxu0 0.0
  %223 = vmatpush1.msra.mxu0 0.0
  %224 = vmatprep.subr.mxu0 0.0
  %225 = vmatpush1.msra.mxu0 0.0
  %226 = vmatprep.subr.mxu0 0.0
  %227 = vmatpush1.msra.mxu0 0.0
  %228 = vmatprep.subr.mxu0 0.0
  %229 = vmatpush1.msra.mxu0 0.0
  %230 = vmatprep.subr.mxu0 0.0
  %231 = vmatpush1.msra.mxu0 0.0
  %232 = vmatprep.subr.mxu0 0.0
  %233 = vmatpush1.msra.mxu0 0.0
  %234 = vmatprep.subr.mxu0 0.0
  %235 = vmatpush1.msra.mxu0 0.0
  %236 = vmatprep.subr.mxu0 0.0
  %237 = vmatpush1.msra.mxu0 0.0
  %238 = vmatprep.subr.mxu0 0.0
  %239 = vmatpush1.msra.mxu0 0.0
  %240 = vmatprep.subr.mxu0 0.0
  %241 = vmatpush1.msra.mxu0 0.0
  %242 = vmatprep.subr.mxu0 0.0
  %243 = vmatpush1.msra.mxu0 0.0
  %244 = vmatprep.subr.mxu0 0.0
  %245 = vmatpush1.msra.mxu0 0.0
  %246 = vmatprep.subr.mxu0 0.0
  %247 = vmatpush1.msra.mxu0 %v43
  %248 = vmatprep.subr.mxu0 0.0
  %249 = vmatpush1.msra.mxu0 %v42
  %250 = vmatprep.subr.mxu0 0.0
  %251 = vmatpush1.msra.mxu0 %v41
  %252 = vmatprep.subr.mxu0 0.0
  %253 = vmatpush1.msra.mxu0 %v40
  %254 = vmatprep.subr.mxu0 0.0
  %255 = vmatpush2.msra.mxu0 0.0
  %256 = vmatprep.subr.mxu0 0.0
  %257 = vmatpush2.msra.mxu0 0.0
  %258 = vmatprep.subr.mxu0 0.0
  %259 = vmatpush2.msra.mxu0 0.0
  %260 = vmatprep.subr.mxu0 0.0
  %261 = vmatpush2.msra.mxu0 0.0
  %262 = vmatprep.subr.mxu0 0.0
  %263 = vmatpush2.msra.mxu0 0.0
  %264 = vmatprep.subr.mxu0 0.0
  %265 = vmatpush2.msra.mxu0 0.0
  %266 = vmatprep.subr.mxu0 0.0
  %267 = vmatpush2.msra.mxu0 0.0
  %268 = vmatprep.subr.mxu0 0.0
  %269 = vmatpush2.msra.mxu0 0.0
  %270 = vmatprep.subr.mxu0 0.0
  %271 = vmatpush2.msra.mxu0 0.0
  %272 = vmatprep.subr.mxu0 0.0
  %273 = vmatpush2.msra.mxu0 0.0
  %274 = vmatprep.subr.mxu0 0.0
  %275 = vmatpush2.msra.mxu0 0.0
  %276 = vmatprep.subr.mxu0 0.0
  %277 = vmatpush2.msra.mxu0 0.0
  %278 = vmatprep.subr.mxu0 0.0
  %279 = vmatpush2.msra.mxu0 0.0
  %280 = vmatprep.subr.mxu0 0.0
  %281 = vmatpush2.msra.mxu0 0.0
  %282 = vmatprep.subr.mxu0 0.0
  %283 = vmatpush2.msra.mxu0 0.0
  %284 = vmatprep.subr.mxu0 0.0
  %285 = vmatpush2.msra.mxu0 0.0
  %286 = vmatprep.mubr.f32.mxu0 0.0
  %287 = vmatmul.mubr.f32.gmra.mxu0 %v220
  %v288 = vpop.f32.mrf.mxu0
  %v289 = vadd.f32 %v217, %v288
  %v290 = vpop.f32.mrf.mxu0
  %291 = vdwg.mxu0
  %v292 = vmul.f32 %v133, %v289
  %v293 = vadd.f32 %v210, %v292
  %v294 = vtanh.pop %v293
  %v295 = vsub.f32 1.0, %v133
  %297 = vrot.lane.b32.xlu0 %v294, 32
  %v298 = vpop.permute.xlu0 %297
  %v300 = vmul.f32 %v295, %v298
  %v301 = vmul.f32 %v133, 0.0
  %v302 = vadd.f32 %v300, %v301
  %s303 = scalar_lea.vmem %s0, 2
  %v304 = vld [vmem:[%s303] sm:$0x3]
  %v305 = vsel %vm46, %v304, %v302
  %v307 = vsel %vm54, %v305, 0
  %309 = vmatprep.subr.mxu0 0.0
  %310 = vmatpush1.msra.mxu0 0.0
  %311 = vmatprep.subr.mxu0 0.0
  %312 = vmatpush1.msra.mxu0 0.0
  %313 = vmatprep.subr.mxu0 0.0
  %314 = vmatpush1.msra.mxu0 0.0
  %315 = vmatprep.subr.mxu0 0.0
  %316 = vmatpush1.msra.mxu0 0.0
  %317 = vmatprep.subr.mxu0 0.0
  %318 = vmatpush1.msra.mxu0 0.0
  %319 = vmatprep.subr.mxu0 0.0
  %320 = vmatpush1.msra.mxu0 0.0
  %321 = vmatprep.subr.mxu0 0.0
  %322 = vmatpush1.msra.mxu0 0.0
  %323 = vmatprep.subr.mxu0 0.0
  %324 = vmatpush1.msra.mxu0 0.0
  %325 = vmatprep.subr.mxu0 0.0
  %326 = vmatpush1.msra.mxu0 %v33
  %327 = vmatprep.subr.mxu0 0.0
  %328 = vmatpush1.msra.mxu0 %v32
  %329 = vmatprep.subr.mxu0 0.0
  %330 = vmatpush1.msra.mxu0 %v31
  %331 = vmatprep.subr.mxu0 0.0
  %332 = vmatpush1.msra.mxu0 %v30
  %333 = vmatprep.subr.mxu0 0.0
  %334 = vmatpush1.msra.mxu0 %v29
  %335 = vmatprep.subr.mxu0 0.0
  %336 = vmatpush1.msra.mxu0 %v28
  %337 = vmatprep.subr.mxu0 0.0
  %338 = vmatpush1.msra.mxu0 %v27
  %339 = vmatprep.subr.mxu0 0.0
  %340 = vmatpush1.msra.mxu0 %v26
  %341 = vmatprep.subr.mxu0 0.0
  %342 = vmatpush2.msra.mxu0 0.0
  %343 = vmatprep.subr.mxu0 0.0
  %344 = vmatpush2.msra.mxu0 0.0
  %345 = vmatprep.subr.mxu0 0.0
  %346 = vmatpush2.msra.mxu0 0.0
  %347 = vmatprep.subr.mxu0 0.0
  %348 = vmatpush2.msra.mxu0 0.0
  %349 = vmatprep.subr.mxu0 0.0
  %350 = vmatpush2.msra.mxu0 0.0
  %351 = vmatprep.subr.mxu0 0.0
  %352 = vmatpush2.msra.mxu0 0.0
  %353 = vmatprep.subr.mxu0 0.0
  %354 = vmatpush2.msra.mxu0 0.0
  %355 = vmatprep.subr.mxu0 0.0
  %356 = vmatpush2.msra.mxu0 0.0
  %357 = vmatprep.subr.mxu0 0.0
  %358 = vmatpush2.msra.mxu0 0.0
  %359 = vmatprep.subr.mxu0 0.0
  %360 = vmatpush2.msra.mxu0 0.0
  %361 = vmatprep.subr.mxu0 0.0
  %362 = vmatpush2.msra.mxu0 0.0
  %363 = vmatprep.subr.mxu0 0.0
  %364 = vmatpush2.msra.mxu0 0.0
  %365 = vmatprep.subr.mxu0 0.0
  %366 = vmatpush2.msra.mxu0 0.0
  %367 = vmatprep.subr.mxu0 0.0
  %368 = vmatpush2.msra.mxu0 0.0
  %369 = vmatprep.subr.mxu0 0.0
  %370 = vmatpush2.msra.mxu0 0.0
  %371 = vmatprep.subr.mxu0 0.0
  %372 = vmatpush2.msra.mxu0 0.0
  %373 = vmatprep.mubr.f32.mxu0 0.0
  %374 = vmatmul.mubr.f32.gmra.mxu0 %v307
  %v375 = vpop.f32.mrf.mxu0
  %v376 = vadd.f32 %v52, %v375
  %v377 = vpop.f32.mrf.mxu0
  %378 = vdwg.mxu0
  %v379 = vxor.u32 %v376, 2147483648
  %v380 = vmul.f32 %v379, 1.442695
  %v381 = vpow.pop %v380
  %v382 = vadd.f32 %v381, 1.0
  %v383 = vrcp.pop %v382
  %v384 = vmul.f32 1.0, %v383
  %v386 = vsel %vm46, %v304, 0
  %388 = vmatprep.subr.mxu0 0.0
  %389 = vmatpush1.msra.mxu0 0.0
  %390 = vmatprep.subr.mxu0 0.0
  %391 = vmatpush1.msra.mxu0 0.0
  %392 = vmatprep.subr.mxu0 0.0
  %393 = vmatpush1.msra.mxu0 0.0
  %394 = vmatprep.subr.mxu0 0.0
  %395 = vmatpush1.msra.mxu0 0.0
  %396 = vmatprep.subr.mxu0 0.0
  %397 = vmatpush1.msra.mxu0 0.0
  %398 = vmatprep.subr.mxu0 0.0
  %399 = vmatpush1.msra.mxu0 0.0
  %400 = vmatprep.subr.mxu0 0.0
  %401 = vmatpush1.msra.mxu0 0.0
  %402 = vmatprep.subr.mxu0 0.0
  %403 = vmatpush1.msra.mxu0 0.0
  %404 = vmatprep.subr.mxu0 0.0
  %405 = vmatpush1.msra.mxu0 0.0
  %406 = vmatprep.subr.mxu0 0.0
  %407 = vmatpush1.msra.mxu0 0.0
  %408 = vmatprep.subr.mxu0 0.0
  %409 = vmatpush1.msra.mxu0 0.0
  %410 = vmatprep.subr.mxu0 0.0
  %411 = vmatpush1.msra.mxu0 0.0
  %412 = vmatprep.subr.mxu0 0.0
  %413 = vmatpush1.msra.mxu0 %v38
  %414 = vmatprep.subr.mxu0 0.0
  %415 = vmatpush1.msra.mxu0 %v37
  %416 = vmatprep.subr.mxu0 0.0
  %417 = vmatpush1.msra.mxu0 %v36
  %418 = vmatprep.subr.mxu0 0.0
  %419 = vmatpush1.msra.mxu0 %v35
  %420 = vmatprep.subr.mxu0 0.0
  %421 = vmatpush2.msra.mxu0 0.0
  %422 = vmatprep.subr.mxu0 0.0
  %423 = vmatpush2.msra.mxu0 0.0
  %424 = vmatprep.subr.mxu0 0.0
  %425 = vmatpush2.msra.mxu0 0.0
  %426 = vmatprep.subr.mxu0 0.0
  %427 = vmatpush2.msra.mxu0 0.0
  %428 = vmatprep.subr.mxu0 0.0
  %429 = vmatpush2.msra.mxu0 0.0
  %430 = vmatprep.subr.mxu0 0.0
  %431 = vmatpush2.msra.mxu0 0.0
  %432 = vmatprep.subr.mxu0 0.0
  %433 = vmatpush2.msra.mxu0 0.0
  %434 = vmatprep.subr.mxu0 0.0
  %435 = vmatpush2.msra.mxu0 0.0
  %436 = vmatprep.subr.mxu0 0.0
  %437 = vmatpush2.msra.mxu0 0.0
  %438 = vmatprep.subr.mxu0 0.0
  %439 = vmatpush2.msra.mxu0 0.0
  %440 = vmatprep.subr.mxu0 0.0
  %441 = vmatpush2.msra.mxu0 0.0
  %442 = vmatprep.subr.mxu0 0.0
  %443 = vmatpush2.msra.mxu0 0.0
  %444 = vmatprep.subr.mxu0 0.0
  %445 = vmatpush2.msra.mxu0 0.0
  %446 = vmatprep.subr.mxu0 0.0
  %447 = vmatpush2.msra.mxu0 0.0
  %448 = vmatprep.subr.mxu0 0.0
  %449 = vmatpush2.msra.mxu0 0.0
  %450 = vmatprep.subr.mxu0 0.0
  %451 = vmatpush2.msra.mxu0 0.0
  %452 = vmatprep.mubr.f32.mxu0 0.0
  %453 = vmatmul.mubr.f32.gmra.mxu0 %v386
  %v454 = vpop.f32.mrf.mxu0
  %v455 = vadd.f32 %v138, %v454
  %v456 = vpop.f32.mrf.mxu0
  %457 = vdwg.mxu0
  %459 = vrot.lane.b32.xlu0 %v302, 96
  %v460 = vpop.permute.xlu0 %459
  %v461 = vsel %vm46, %v460, 0
  %463 = vmatprep.subr.mxu0 0.0
  %464 = vmatpush1.msra.mxu0 0.0
  %465 = vmatprep.subr.mxu0 0.0
  %466 = vmatpush1.msra.mxu0 0.0
  %467 = vmatprep.subr.mxu0 0.0
  %468 = vmatpush1.msra.mxu0 0.0
  %469 = vmatprep.subr.mxu0 0.0
  %470 = vmatpush1.msra.mxu0 0.0
  %471 = vmatprep.subr.mxu0 0.0
  %472 = vmatpush1.msra.mxu0 0.0
  %473 = vmatprep.subr.mxu0 0.0
  %474 = vmatpush1.msra.mxu0 0.0
  %475 = vmatprep.subr.mxu0 0.0
  %476 = vmatpush1.msra.mxu0 0.0
  %477 = vmatprep.subr.mxu0 0.0
  %478 = vmatpush1.msra.mxu0 0.0
  %479 = vmatprep.subr.mxu0 0.0
  %480 = vmatpush1.msra.mxu0 0.0
  %481 = vmatprep.subr.mxu0 0.0
  %482 = vmatpush1.msra.mxu0 0.0
  %483 = vmatprep.subr.mxu0 0.0
  %484 = vmatpush1.msra.mxu0 0.0
  %485 = vmatprep.subr.mxu0 0.0
  %486 = vmatpush1.msra.mxu0 0.0
  %487 = vmatprep.subr.mxu0 0.0
  %488 = vmatpush1.msra.mxu0 %v43
  %489 = vmatprep.subr.mxu0 0.0
  %490 = vmatpush1.msra.mxu0 %v42
  %491 = vmatprep.subr.mxu0 0.0
  %492 = vmatpush1.msra.mxu0 %v41
  %493 = vmatprep.subr.mxu0 0.0
  %494 = vmatpush1.msra.mxu0 %v40
  %495 = vmatprep.subr.mxu0 0.0
  %496 = vmatpush2.msra.mxu0 0.0
  %497 = vmatprep.subr.mxu0 0.0
  %498 = vmatpush2.msra.mxu0 0.0
  %499 = vmatprep.subr.mxu0 0.0
  %500 = vmatpush2.msra.mxu0 0.0
  %501 = vmatprep.subr.mxu0 0.0
  %502 = vmatpush2.msra.mxu0 0.0
  %503 = vmatprep.subr.mxu0 0.0
  %504 = vmatpush2.msra.mxu0 0.0
  %505 = vmatprep.subr.mxu0 0.0
  %506 = vmatpush2.msra.mxu0 0.0
  %507 = vmatprep.subr.mxu0 0.0
  %508 = vmatpush2.msra.mxu0 0.0
  %509 = vmatprep.subr.mxu0 0.0
  %510 = vmatpush2.msra.mxu0 0.0
  %511 = vmatprep.subr.mxu0 0.0
  %512 = vmatpush2.msra.mxu0 0.0
  %513 = vmatprep.subr.mxu0 0.0
  %514 = vmatpush2.msra.mxu0 0.0
  %515 = vmatprep.subr.mxu0 0.0
  %516 = vmatpush2.msra.mxu0 0.0
  %517 = vmatprep.subr.mxu0 0.0
  %518 = vmatpush2.msra.mxu0 0.0
  %519 = vmatprep.subr.mxu0 0.0
  %520 = vmatpush2.msra.mxu0 0.0
  %521 = vmatprep.subr.mxu0 0.0
  %522 = vmatpush2.msra.mxu0 0.0
  %523 = vmatprep.subr.mxu0 0.0
  %524 = vmatpush2.msra.mxu0 0.0
  %525 = vmatprep.subr.mxu0 0.0
  %526 = vmatpush2.msra.mxu0 0.0
  %527 = vmatprep.mubr.f32.mxu0 0.0
  %528 = vmatmul.mubr.f32.gmra.mxu0 %v461
  %v529 = vpop.f32.mrf.mxu0
  %v530 = vadd.f32 %v217, %v529
  %v531 = vpop.f32.mrf.mxu0
  %532 = vdwg.mxu0
  %v533 = vmul.f32 %v384, %v530
  %v534 = vadd.f32 %v455, %v533
  %v535 = vtanh.pop %v534
  %v536 = vsub.f32 1.0, %v384
  %538 = vrot.lane.b32.xlu0 %v535, 32
  %v539 = vpop.permute.xlu0 %538
  %v541 = vmul.f32 %v536, %v539
  %v542 = vmul.f32 %v384, %v302
  %v543 = vadd.f32 %v541, %v542
  %s544 = scalar_lea.vmem %s0, 4
  %v545 = vld [vmem:[%s544] sm:$0x3]
  %v546 = vsel %vm46, %v545, %v543
  %v548 = vsel %vm54, %v546, 0
  %550 = vmatprep.subr.mxu0 0.0
  %551 = vmatpush1.msra.mxu0 0.0
  %552 = vmatprep.subr.mxu0 0.0
  %553 = vmatpush1.msra.mxu0 0.0
  %554 = vmatprep.subr.mxu0 0.0
  %555 = vmatpush1.msra.mxu0 0.0
  %556 = vmatprep.subr.mxu0 0.0
  %557 = vmatpush1.msra.mxu0 0.0
  %558 = vmatprep.subr.mxu0 0.0
  %559 = vmatpush1.msra.mxu0 0.0
  %560 = vmatprep.subr.mxu0 0.0
  %561 = vmatpush1.msra.mxu0 0.0
  %562 = vmatprep.subr.mxu0 0.0
  %563 = vmatpush1.msra.mxu0 0.0
  %564 = vmatprep.subr.mxu0 0.0
  %565 = vmatpush1.msra.mxu0 0.0
  %566 = vmatprep.subr.mxu0 0.0
  %567 = vmatpush1.msra.mxu0 %v33
  %568 = vmatprep.subr.mxu0 0.0
  %569 = vmatpush1.msra.mxu0 %v32
  %570 = vmatprep.subr.mxu0 0.0
  %571 = vmatpush1.msra.mxu0 %v31
  %572 = vmatprep.subr.mxu0 0.0
  %573 = vmatpush1.msra.mxu0 %v30
  %574 = vmatprep.subr.mxu0 0.0
  %575 = vmatpush1.msra.mxu0 %v29
  %576 = vmatprep.subr.mxu0 0.0
  %577 = vmatpush1.msra.mxu0 %v28
  %578 = vmatprep.subr.mxu0 0.0
  %579 = vmatpush1.msra.mxu0 %v27
  %580 = vmatprep.subr.mxu0 0.0
  %581 = vmatpush1.msra.mxu0 %v26
  %582 = vmatprep.subr.mxu0 0.0
  %583 = vmatpush2.msra.mxu0 0.0
  %584 = vmatprep.subr.mxu0 0.0
  %585 = vmatpush2.msra.mxu0 0.0
  %586 = vmatprep.subr.mxu0 0.0
  %587 = vmatpush2.msra.mxu0 0.0
  %588 = vmatprep.subr.mxu0 0.0
  %589 = vmatpush2.msra.mxu0 0.0
  %590 = vmatprep.subr.mxu0 0.0
  %591 = vmatpush2.msra.mxu0 0.0
  %592 = vmatprep.subr.mxu0 0.0
  %593 = vmatpush2.msra.mxu0 0.0
  %594 = vmatprep.subr.mxu0 0.0
  %595 = vmatpush2.msra.mxu0 0.0
  %596 = vmatprep.subr.mxu0 0.0
  %597 = vmatpush2.msra.mxu0 0.0
  %598 = vmatprep.subr.mxu0 0.0
  %599 = vmatpush2.msra.mxu0 0.0
  %600 = vmatprep.subr.mxu0 0.0
  %601 = vmatpush2.msra.mxu0 0.0
  %602 = vmatprep.subr.mxu0 0.0
  %603 = vmatpush2.msra.mxu0 0.0
  %604 = vmatprep.subr.mxu0 0.0
  %605 = vmatpush2.msra.mxu0 0.0
  %606 = vmatprep.subr.mxu0 0.0
  %607 = vmatpush2.msra.mxu0 0.0
  %608 = vmatprep.subr.mxu0 0.0
  %609 = vmatpush2.msra.mxu0 0.0
  %610 = vmatprep.subr.mxu0 0.0
  %611 = vmatpush2.msra.mxu0 0.0
  %612 = vmatprep.subr.mxu0 0.0
  %613 = vmatpush2.msra.mxu0 0.0
  %614 = vmatprep.mubr.f32.mxu0 0.0
  %615 = vmatmul.mubr.f32.gmra.mxu0 %v548
  %v616 = vpop.f32.mrf.mxu0
  %v617 = vadd.f32 %v52, %v616
  %v618 = vpop.f32.mrf.mxu0
  %619 = vdwg.mxu0
  %v620 = vxor.u32 %v617, 2147483648
  %v621 = vmul.f32 %v620, 1.442695
  %v622 = vpow.pop %v621
  %v623 = vadd.f32 %v622, 1.0
  %v624 = vrcp.pop %v623
  %v625 = vmul.f32 1.0, %v624
  %v627 = vsel %vm46, %v545, 0
  %629 = vmatprep.subr.mxu0 0.0
  %630 = vmatpush1.msra.mxu0 0.0
  %631 = vmatprep.subr.mxu0 0.0
  %632 = vmatpush1.msra.mxu0 0.0
  %633 = vmatprep.subr.mxu0 0.0
  %634 = vmatpush1.msra.mxu0 0.0
  %635 = vmatprep.subr.mxu0 0.0
  %636 = vmatpush1.msra.mxu0 0.0
  %637 = vmatprep.subr.mxu0 0.0
  %638 = vmatpush1.msra.mxu0 0.0
  %639 = vmatprep.subr.mxu0 0.0
  %640 = vmatpush1.msra.mxu0 0.0
  %641 = vmatprep.subr.mxu0 0.0
  %642 = vmatpush1.msra.mxu0 0.0
  %643 = vmatprep.subr.mxu0 0.0
  %644 = vmatpush1.msra.mxu0 0.0
  %645 = vmatprep.subr.mxu0 0.0
  %646 = vmatpush1.msra.mxu0 0.0
  %647 = vmatprep.subr.mxu0 0.0
  %648 = vmatpush1.msra.mxu0 0.0
  %649 = vmatprep.subr.mxu0 0.0
  %650 = vmatpush1.msra.mxu0 0.0
  %651 = vmatprep.subr.mxu0 0.0
  %652 = vmatpush1.msra.mxu0 0.0
  %653 = vmatprep.subr.mxu0 0.0
  %654 = vmatpush1.msra.mxu0 %v38
  %655 = vmatprep.subr.mxu0 0.0
  %656 = vmatpush1.msra.mxu0 %v37
  %657 = vmatprep.subr.mxu0 0.0
  %658 = vmatpush1.msra.mxu0 %v36
  %659 = vmatprep.subr.mxu0 0.0
  %660 = vmatpush1.msra.mxu0 %v35
  %661 = vmatprep.subr.mxu0 0.0
  %662 = vmatpush2.msra.mxu0 0.0
  %663 = vmatprep.subr.mxu0 0.0
  %664 = vmatpush2.msra.mxu0 0.0
  %665 = vmatprep.subr.mxu0 0.0
  %666 = vmatpush2.msra.mxu0 0.0
  %667 = vmatprep.subr.mxu0 0.0
  %668 = vmatpush2.msra.mxu0 0.0
  %669 = vmatprep.subr.mxu0 0.0
  %670 = vmatpush2.msra.mxu0 0.0
  %671 = vmatprep.subr.mxu0 0.0
  %672 = vmatpush2.msra.mxu0 0.0
  %673 = vmatprep.subr.mxu0 0.0
  %674 = vmatpush2.msra.mxu0 0.0
  %675 = vmatprep.subr.mxu0 0.0
  %676 = vmatpush2.msra.mxu0 0.0
  %677 = vmatprep.subr.mxu0 0.0
  %678 = vmatpush2.msra.mxu0 0.0
  %679 = vmatprep.subr.mxu0 0.0
  %680 = vmatpush2.msra.mxu0 0.0
  %681 = vmatprep.subr.mxu0 0.0
  %682 = vmatpush2.msra.mxu0 0.0
  %683 = vmatprep.subr.mxu0 0.0
  %684 = vmatpush2.msra.mxu0 0.0
  %685 = vmatprep.subr.mxu0 0.0
  %686 = vmatpush2.msra.mxu0 0.0
  %687 = vmatprep.subr.mxu0 0.0
  %688 = vmatpush2.msra.mxu0 0.0
  %689 = vmatprep.subr.mxu0 0.0
  %690 = vmatpush2.msra.mxu0 0.0
  %691 = vmatprep.subr.mxu0 0.0
  %692 = vmatpush2.msra.mxu0 0.0
  %693 = vmatprep.mubr.f32.mxu0 0.0
  %694 = vmatmul.mubr.f32.gmra.mxu0 %v627
  %v695 = vpop.f32.mrf.mxu0
  %v696 = vadd.f32 %v138, %v695
  %v697 = vpop.f32.mrf.mxu0
  %698 = vdwg.mxu0
  %700 = vrot.lane.b32.xlu0 %v543, 96
  %v701 = vpop.permute.xlu0 %700
  %v702 = vsel %vm46, %v701, 0
  %704 = vmatprep.subr.mxu0 0.0
  %705 = vmatpush1.msra.mxu0 0.0
  %706 = vmatprep.subr.mxu0 0.0
  %707 = vmatpush1.msra.mxu0 0.0
  %708 = vmatprep.subr.mxu0 0.0
  %709 = vmatpush1.msra.mxu0 0.0
  %710 = vmatprep.subr.mxu0 0.0
  %711 = vmatpush1.msra.mxu0 0.0
  %712 = vmatprep.subr.mxu0 0.0
  %713 = vmatpush1.msra.mxu0 0.0
  %714 = vmatprep.subr.mxu0 0.0
  %715 = vmatpush1.msra.mxu0 0.0
  %716 = vmatprep.subr.mxu0 0.0
  %717 = vmatpush1.msra.mxu0 0.0
  %718 = vmatprep.subr.mxu0 0.0
  %719 = vmatpush1.msra.mxu0 0.0
  %720 = vmatprep.subr.mxu0 0.0
  %721 = vmatpush1.msra.mxu0 0.0
  %722 = vmatprep.subr.mxu0 0.0
  %723 = vmatpush1.msra.mxu0 0.0
  %724 = vmatprep.subr.mxu0 0.0
  %725 = vmatpush1.msra.mxu0 0.0
  %726 = vmatprep.subr.mxu0 0.0
  %727 = vmatpush1.msra.mxu0 0.0
  %728 = vmatprep.subr.mxu0 0.0
  %729 = vmatpush1.msra.mxu0 %v43
  %730 = vmatprep.subr.mxu0 0.0
  %731 = vmatpush1.msra.mxu0 %v42
  %732 = vmatprep.subr.mxu0 0.0
  %733 = vmatpush1.msra.mxu0 %v41
  %734 = vmatprep.subr.mxu0 0.0
  %735 = vmatpush1.msra.mxu0 %v40
  %736 = vmatprep.subr.mxu0 0.0
  %737 = vmatpush2.msra.mxu0 0.0
  %738 = vmatprep.subr.mxu0 0.0
  %739 = vmatpush2.msra.mxu0 0.0
  %740 = vmatprep.subr.mxu0 0.0
  %741 = vmatpush2.msra.mxu0 0.0
  %742 = vmatprep.subr.mxu0 0.0
  %743 = vmatpush2.msra.mxu0 0.0
  %744 = vmatprep.subr.mxu0 0.0
  %745 = vmatpush2.msra.mxu0 0.0
  %746 = vmatprep.subr.mxu0 0.0
  %747 = vmatpush2.msra.mxu0 0.0
  %748 = vmatprep.subr.mxu0 0.0
  %749 = vmatpush2.msra.mxu0 0.0
  %750 = vmatprep.subr.mxu0 0.0
  %751 = vmatpush2.msra.mxu0 0.0
  %752 = vmatprep.subr.mxu0 0.0
  %753 = vmatpush2.msra.mxu0 0.0
  %754 = vmatprep.subr.mxu0 0.0
  %755 = vmatpush2.msra.mxu0 0.0
  %756 = vmatprep.subr.mxu0 0.0
  %757 = vmatpush2.msra.mxu0 0.0
  %758 = vmatprep.subr.mxu0 0.0
  %759 = vmatpush2.msra.mxu0 0.0
  %760 = vmatprep.subr.mxu0 0.0
  %761 = vmatpush2.msra.mxu0 0.0
  %762 = vmatprep.subr.mxu0 0.0
  %763 = vmatpush2.msra.mxu0 0.0
  %764 = vmatprep.subr.mxu0 0.0
  %765 = vmatpush2.msra.mxu0 0.0
  %766 = vmatprep.subr.mxu0 0.0
  %767 = vmatpush2.msra.mxu0 0.0
  %768 = vmatprep.mubr.f32.mxu0 0.0
  %769 = vmatmul.mubr.f32.gmra.mxu0 %v702
  %v770 = vpop.f32.mrf.mxu0
  %v771 = vadd.f32 %v217, %v770
  %v772 = vpop.f32.mrf.mxu0
  %773 = vdwg.mxu0
  %v774 = vmul.f32 %v625, %v771
  %v775 = vadd.f32 %v696, %v774
  %v776 = vtanh.pop %v775
  %v777 = vsub.f32 1.0, %v625
  %779 = vrot.lane.b32.xlu0 %v776, 32
  %v780 = vpop.permute.xlu0 %779
  %v782 = vmul.f32 %v777, %v780
  %v783 = vmul.f32 %v625, %v543
  %v784 = vadd.f32 %v782, %v783
  %s785 = scalar_lea.vmem %s0, 6
  %v786 = vld [vmem:[%s785] sm:$0x3]
  %v787 = vsel %vm46, %v786, %v784
  %v789 = vsel %vm54, %v787, 0
  %791 = vmatprep.subr.mxu0 0.0
  %792 = vmatpush1.msra.mxu0 0.0
  %793 = vmatprep.subr.mxu0 0.0
  %794 = vmatpush1.msra.mxu0 0.0
  %795 = vmatprep.subr.mxu0 0.0
  %796 = vmatpush1.msra.mxu0 0.0
  %797 = vmatprep.subr.mxu0 0.0
  %798 = vmatpush1.msra.mxu0 0.0
  %799 = vmatprep.subr.mxu0 0.0
  %800 = vmatpush1.msra.mxu0 0.0
  %801 = vmatprep.subr.mxu0 0.0
  %802 = vmatpush1.msra.mxu0 0.0
  %803 = vmatprep.subr.mxu0 0.0
  %804 = vmatpush1.msra.mxu0 0.0
  %805 = vmatprep.subr.mxu0 0.0
  %806 = vmatpush1.msra.mxu0 0.0
  %807 = vmatprep.subr.mxu0 0.0
  %808 = vmatpush1.msra.mxu0 %v33
  %809 = vmatprep.subr.mxu0 0.0
  %810 = vmatpush1.msra.mxu0 %v32
  %811 = vmatprep.subr.mxu0 0.0
  %812 = vmatpush1.msra.mxu0 %v31
  %813 = vmatprep.subr.mxu0 0.0
  %814 = vmatpush1.msra.mxu0 %v30
  %815 = vmatprep.subr.mxu0 0.0
  %816 = vmatpush1.msra.mxu0 %v29
  %817 = vmatprep.subr.mxu0 0.0
  %818 = vmatpush1.msra.mxu0 %v28
  %819 = vmatprep.subr.mxu0 0.0
  %820 = vmatpush1.msra.mxu0 %v27
  %821 = vmatprep.subr.mxu0 0.0
  %822 = vmatpush1.msra.mxu0 %v26
  %823 = vmatprep.subr.mxu0 0.0
  %824 = vmatpush2.msra.mxu0 0.0
  %825 = vmatprep.subr.mxu0 0.0
  %826 = vmatpush2.msra.mxu0 0.0
  %827 = vmatprep.subr.mxu0 0.0
  %828 = vmatpush2.msra.mxu0 0.0
  %829 = vmatprep.subr.mxu0 0.0
  %830 = vmatpush2.msra.mxu0 0.0
  %831 = vmatprep.subr.mxu0 0.0
  %832 = vmatpush2.msra.mxu0 0.0
  %833 = vmatprep.subr.mxu0 0.0
  %834 = vmatpush2.msra.mxu0 0.0
  %835 = vmatprep.subr.mxu0 0.0
  %836 = vmatpush2.msra.mxu0 0.0
  %837 = vmatprep.subr.mxu0 0.0
  %838 = vmatpush2.msra.mxu0 0.0
  %839 = vmatprep.subr.mxu0 0.0
  %840 = vmatpush2.msra.mxu0 0.0
  %841 = vmatprep.subr.mxu0 0.0
  %842 = vmatpush2.msra.mxu0 0.0
  %843 = vmatprep.subr.mxu0 0.0
  %844 = vmatpush2.msra.mxu0 0.0
  %845 = vmatprep.subr.mxu0 0.0
  %846 = vmatpush2.msra.mxu0 0.0
  %847 = vmatprep.subr.mxu0 0.0
  %848 = vmatpush2.msra.mxu0 0.0
  %849 = vmatprep.subr.mxu0 0.0
  %850 = vmatpush2.msra.mxu0 0.0
  %851 = vmatprep.subr.mxu0 0.0
  %852 = vmatpush2.msra.mxu0 0.0
  %853 = vmatprep.subr.mxu0 0.0
  %854 = vmatpush2.msra.mxu0 0.0
  %855 = vmatprep.mubr.f32.mxu0 0.0
  %856 = vmatmul.mubr.f32.gmra.mxu0 %v789
  %v857 = vpop.f32.mrf.mxu0
  %v858 = vadd.f32 %v52, %v857
  %v859 = vpop.f32.mrf.mxu0
  %860 = vdwg.mxu0
  %v861 = vxor.u32 %v858, 2147483648
  %v862 = vmul.f32 %v861, 1.442695
  %v863 = vpow.pop %v862
  %v864 = vadd.f32 %v863, 1.0
  %v865 = vrcp.pop %v864
  %v866 = vmul.f32 1.0, %v865
  %v868 = vsel %vm46, %v786, 0
  %870 = vmatprep.subr.mxu0 0.0
  %871 = vmatpush1.msra.mxu0 0.0
  %872 = vmatprep.subr.mxu0 0.0
  %873 = vmatpush1.msra.mxu0 0.0
  %874 = vmatprep.subr.mxu0 0.0
  %875 = vmatpush1.msra.mxu0 0.0
  %876 = vmatprep.subr.mxu0 0.0
  %877 = vmatpush1.msra.mxu0 0.0
  %878 = vmatprep.subr.mxu0 0.0
  %879 = vmatpush1.msra.mxu0 0.0
  %880 = vmatprep.subr.mxu0 0.0
  %881 = vmatpush1.msra.mxu0 0.0
  %882 = vmatprep.subr.mxu0 0.0
  %883 = vmatpush1.msra.mxu0 0.0
  %884 = vmatprep.subr.mxu0 0.0
  %885 = vmatpush1.msra.mxu0 0.0
  %886 = vmatprep.subr.mxu0 0.0
  %887 = vmatpush1.msra.mxu0 0.0
  %888 = vmatprep.subr.mxu0 0.0
  %889 = vmatpush1.msra.mxu0 0.0
  %890 = vmatprep.subr.mxu0 0.0
  %891 = vmatpush1.msra.mxu0 0.0
  %892 = vmatprep.subr.mxu0 0.0
  %893 = vmatpush1.msra.mxu0 0.0
  %894 = vmatprep.subr.mxu0 0.0
  %895 = vmatpush1.msra.mxu0 %v38
  %896 = vmatprep.subr.mxu0 0.0
  %897 = vmatpush1.msra.mxu0 %v37
  %898 = vmatprep.subr.mxu0 0.0
  %899 = vmatpush1.msra.mxu0 %v36
  %900 = vmatprep.subr.mxu0 0.0
  %901 = vmatpush1.msra.mxu0 %v35
  %902 = vmatprep.subr.mxu0 0.0
  %903 = vmatpush2.msra.mxu0 0.0
  %904 = vmatprep.subr.mxu0 0.0
  %905 = vmatpush2.msra.mxu0 0.0
  %906 = vmatprep.subr.mxu0 0.0
  %907 = vmatpush2.msra.mxu0 0.0
  %908 = vmatprep.subr.mxu0 0.0
  %909 = vmatpush2.msra.mxu0 0.0
  %910 = vmatprep.subr.mxu0 0.0
  %911 = vmatpush2.msra.mxu0 0.0
  %912 = vmatprep.subr.mxu0 0.0
  %913 = vmatpush2.msra.mxu0 0.0
  %914 = vmatprep.subr.mxu0 0.0
  %915 = vmatpush2.msra.mxu0 0.0
  %916 = vmatprep.subr.mxu0 0.0
  %917 = vmatpush2.msra.mxu0 0.0
  %918 = vmatprep.subr.mxu0 0.0
  %919 = vmatpush2.msra.mxu0 0.0
  %920 = vmatprep.subr.mxu0 0.0
  %921 = vmatpush2.msra.mxu0 0.0
  %922 = vmatprep.subr.mxu0 0.0
  %923 = vmatpush2.msra.mxu0 0.0
  %924 = vmatprep.subr.mxu0 0.0
  %925 = vmatpush2.msra.mxu0 0.0
  %926 = vmatprep.subr.mxu0 0.0
  %927 = vmatpush2.msra.mxu0 0.0
  %928 = vmatprep.subr.mxu0 0.0
  %929 = vmatpush2.msra.mxu0 0.0
  %930 = vmatprep.subr.mxu0 0.0
  %931 = vmatpush2.msra.mxu0 0.0
  %932 = vmatprep.subr.mxu0 0.0
  %933 = vmatpush2.msra.mxu0 0.0
  %934 = vmatprep.mubr.f32.mxu0 0.0
  %935 = vmatmul.mubr.f32.gmra.mxu0 %v868
  %v936 = vpop.f32.mrf.mxu0
  %v937 = vadd.f32 %v138, %v936
  %v938 = vpop.f32.mrf.mxu0
  %939 = vdwg.mxu0
  %941 = vrot.lane.b32.xlu0 %v784, 96
  %v942 = vpop.permute.xlu0 %941
  %v943 = vsel %vm46, %v942, 0
  %945 = vmatprep.subr.mxu0 0.0
  %946 = vmatpush1.msra.mxu0 0.0
  %947 = vmatprep.subr.mxu0 0.0
  %948 = vmatpush1.msra.mxu0 0.0
  %949 = vmatprep.subr.mxu0 0.0
  %950 = vmatpush1.msra.mxu0 0.0
  %951 = vmatprep.subr.mxu0 0.0
  %952 = vmatpush1.msra.mxu0 0.0
  %953 = vmatprep.subr.mxu0 0.0
  %954 = vmatpush1.msra.mxu0 0.0
  %955 = vmatprep.subr.mxu0 0.0
  %956 = vmatpush1.msra.mxu0 0.0
  %957 = vmatprep.subr.mxu0 0.0
  %958 = vmatpush1.msra.mxu0 0.0
  %959 = vmatprep.subr.mxu0 0.0
  %960 = vmatpush1.msra.mxu0 0.0
  %961 = vmatprep.subr.mxu0 0.0
  %962 = vmatpush1.msra.mxu0 0.0
  %963 = vmatprep.subr.mxu0 0.0
  %964 = vmatpush1.msra.mxu0 0.0
  %965 = vmatprep.subr.mxu0 0.0
  %966 = vmatpush1.msra.mxu0 0.0
  %967 = vmatprep.subr.mxu0 0.0
  %968 = vmatpush1.msra.mxu0 0.0
  %969 = vmatprep.subr.mxu0 0.0
  %970 = vmatpush1.msra.mxu0 %v43
  %971 = vmatprep.subr.mxu0 0.0
  %972 = vmatpush1.msra.mxu0 %v42
  %973 = vmatprep.subr.mxu0 0.0
  %974 = vmatpush1.msra.mxu0 %v41
  %975 = vmatprep.subr.mxu0 0.0
  %976 = vmatpush1.msra.mxu0 %v40
  %977 = vmatprep.subr.mxu0 0.0
  %978 = vmatpush2.msra.mxu0 0.0
  %979 = vmatprep.subr.mxu0 0.0
  %980 = vmatpush2.msra.mxu0 0.0
  %981 = vmatprep.subr.mxu0 0.0
  %982 = vmatpush2.msra.mxu0 0.0
  %983 = vmatprep.subr.mxu0 0.0
  %984 = vmatpush2.msra.mxu0 0.0
  %985 = vmatprep.subr.mxu0 0.0
  %986 = vmatpush2.msra.mxu0 0.0
  %987 = vmatprep.subr.mxu0 0.0
  %988 = vmatpush2.msra.mxu0 0.0
  %989 = vmatprep.subr.mxu0 0.0
  %990 = vmatpush2.msra.mxu0 0.0
  %991 = vmatprep.subr.mxu0 0.0
  %992 = vmatpush2.msra.mxu0 0.0
  %993 = vmatprep.subr.mxu0 0.0
  %994 = vmatpush2.msra.mxu0 0.0
  %995 = vmatprep.subr.mxu0 0.0
  %996 = vmatpush2.msra.mxu0 0.0
  %997 = vmatprep.subr.mxu0 0.0
  %998 = vmatpush2.msra.mxu0 0.0
  %999 = vmatprep.subr.mxu0 0.0
  %1000 = vmatpush2.msra.mxu0 0.0
  %1001 = vmatprep.subr.mxu0 0.0
  %1002 = vmatpush2.msra.mxu0 0.0
  %1003 = vmatprep.subr.mxu0 0.0
  %1004 = vmatpush2.msra.mxu0 0.0
  %1005 = vmatprep.subr.mxu0 0.0
  %1006 = vmatpush2.msra.mxu0 0.0
  %1007 = vmatprep.subr.mxu0 0.0
  %1008 = vmatpush2.msra.mxu0 0.0
  %1009 = vmatprep.mubr.f32.mxu0 0.0
  %1010 = vmatmul.mubr.f32.gmra.mxu0 %v943
  %v1011 = vpop.f32.mrf.mxu0
  %v1012 = vadd.f32 %v217, %v1011
  %v1013 = vpop.f32.mrf.mxu0
  %1014 = vdwg.mxu0
  %v1015 = vmul.f32 %v866, %v1012
  %v1016 = vadd.f32 %v937, %v1015
  %v1017 = vtanh.pop %v1016
  %v1018 = vsub.f32 1.0, %v866
  %1020 = vrot.lane.b32.xlu0 %v1017, 32
  %v1021 = vpop.permute.xlu0 %1020
  %v1023 = vmul.f32 %v1018, %v1021
  %v1024 = vmul.f32 %v866, %v784
  %v1025 = vadd.f32 %v1023, %v1024
  %s1026 = scalar_lea.vmem %s0, 8
  %v1027 = vld [vmem:[%s1026] sm:$0x3]
  %v1028 = vsel %vm46, %v1027, %v1025
  %v1030 = vsel %vm54, %v1028, 0
  %1032 = vmatprep.subr.mxu0 0.0
  %1033 = vmatpush1.msra.mxu0 0.0
  %1034 = vmatprep.subr.mxu0 0.0
  %1035 = vmatpush1.msra.mxu0 0.0
  %1036 = vmatprep.subr.mxu0 0.0
  %1037 = vmatpush1.msra.mxu0 0.0
  %1038 = vmatprep.subr.mxu0 0.0
  %1039 = vmatpush1.msra.mxu0 0.0
  %1040 = vmatprep.subr.mxu0 0.0
  %1041 = vmatpush1.msra.mxu0 0.0
  %1042 = vmatprep.subr.mxu0 0.0
  %1043 = vmatpush1.msra.mxu0 0.0
  %1044 = vmatprep.subr.mxu0 0.0
  %1045 = vmatpush1.msra.mxu0 0.0
  %1046 = vmatprep.subr.mxu0 0.0
  %1047 = vmatpush1.msra.mxu0 0.0
  %1048 = vmatprep.subr.mxu0 0.0
  %1049 = vmatpush1.msra.mxu0 %v33
  %1050 = vmatprep.subr.mxu0 0.0
  %1051 = vmatpush1.msra.mxu0 %v32
  %1052 = vmatprep.subr.mxu0 0.0
  %1053 = vmatpush1.msra.mxu0 %v31
  %1054 = vmatprep.subr.mxu0 0.0
  %1055 = vmatpush1.msra.mxu0 %v30
  %1056 = vmatprep.subr.mxu0 0.0
  %1057 = vmatpush1.msra.mxu0 %v29
  %1058 = vmatprep.subr.mxu0 0.0
  %1059 = vmatpush1.msra.mxu0 %v28
  %1060 = vmatprep.subr.mxu0 0.0
  %1061 = vmatpush1.msra.mxu0 %v27
  %1062 = vmatprep.subr.mxu0 0.0
  %1063 = vmatpush1.msra.mxu0 %v26
  %1064 = vmatprep.subr.mxu0 0.0
  %1065 = vmatpush2.msra.mxu0 0.0
  %1066 = vmatprep.subr.mxu0 0.0
  %1067 = vmatpush2.msra.mxu0 0.0
  %1068 = vmatprep.subr.mxu0 0.0
  %1069 = vmatpush2.msra.mxu0 0.0
  %1070 = vmatprep.subr.mxu0 0.0
  %1071 = vmatpush2.msra.mxu0 0.0
  %1072 = vmatprep.subr.mxu0 0.0
  %1073 = vmatpush2.msra.mxu0 0.0
  %1074 = vmatprep.subr.mxu0 0.0
  %1075 = vmatpush2.msra.mxu0 0.0
  %1076 = vmatprep.subr.mxu0 0.0
  %1077 = vmatpush2.msra.mxu0 0.0
  %1078 = vmatprep.subr.mxu0 0.0
  %1079 = vmatpush2.msra.mxu0 0.0
  %1080 = vmatprep.subr.mxu0 0.0
  %1081 = vmatpush2.msra.mxu0 0.0
  %1082 = vmatprep.subr.mxu0 0.0
  %1083 = vmatpush2.msra.mxu0 0.0
  %1084 = vmatprep.subr.mxu0 0.0
  %1085 = vmatpush2.msra.mxu0 0.0
  %1086 = vmatprep.subr.mxu0 0.0
  %1087 = vmatpush2.msra.mxu0 0.0
  %1088 = vmatprep.subr.mxu0 0.0
  %1089 = vmatpush2.msra.mxu0 0.0
  %1090 = vmatprep.subr.mxu0 0.0
  %1091 = vmatpush2.msra.mxu0 0.0
  %1092 = vmatprep.subr.mxu0 0.0
  %1093 = vmatpush2.msra.mxu0 0.0
  %1094 = vmatprep.subr.mxu0 0.0
  %1095 = vmatpush2.msra.mxu0 0.0
  %1096 = vmatprep.mubr.f32.mxu0 0.0
  %1097 = vmatmul.mubr.f32.gmra.mxu0 %v1030
  %v1098 = vpop.f32.mrf.mxu0
  %v1099 = vadd.f32 %v52, %v1098
  %v1100 = vpop.f32.mrf.mxu0
  %1101 = vdwg.mxu0
  %v1102 = vxor.u32 %v1099, 2147483648
  %v1103 = vmul.f32 %v1102, 1.442695
  %v1104 = vpow.pop %v1103
  %v1105 = vadd.f32 %v1104, 1.0
  %v1106 = vrcp.pop %v1105
  %v1107 = vmul.f32 1.0, %v1106
  %v1109 = vsel %vm46, %v1027, 0
  %1111 = vmatprep.subr.mxu0 0.0
  %1112 = vmatpush1.msra.mxu0 0.0
  %1113 = vmatprep.subr.mxu0 0.0
  %1114 = vmatpush1.msra.mxu0 0.0
  %1115 = vmatprep.subr.mxu0 0.0
  %1116 = vmatpush1.msra.mxu0 0.0
  %1117 = vmatprep.subr.mxu0 0.0
  %1118 = vmatpush1.msra.mxu0 0.0
  %1119 = vmatprep.subr.mxu0 0.0
  %1120 = vmatpush1.msra.mxu0 0.0
  %1121 = vmatprep.subr.mxu0 0.0
  %1122 = vmatpush1.msra.mxu0 0.0
  %1123 = vmatprep.subr.mxu0 0.0
  %1124 = vmatpush1.msra.mxu0 0.0
  %1125 = vmatprep.subr.mxu0 0.0
  %1126 = vmatpush1.msra.mxu0 0.0
  %1127 = vmatprep.subr.mxu0 0.0
  %1128 = vmatpush1.msra.mxu0 0.0
  %1129 = vmatprep.subr.mxu0 0.0
  %1130 = vmatpush1.msra.mxu0 0.0
  %1131 = vmatprep.subr.mxu0 0.0
  %1132 = vmatpush1.msra.mxu0 0.0
  %1133 = vmatprep.subr.mxu0 0.0
  %1134 = vmatpush1.msra.mxu0 0.0
  %1135 = vmatprep.subr.mxu0 0.0
  %1136 = vmatpush1.msra.mxu0 %v38
  %1137 = vmatprep.subr.mxu0 0.0
  %1138 = vmatpush1.msra.mxu0 %v37
  %1139 = vmatprep.subr.mxu0 0.0
  %1140 = vmatpush1.msra.mxu0 %v36
  %1141 = vmatprep.subr.mxu0 0.0
  %1142 = vmatpush1.msra.mxu0 %v35
  %1143 = vmatprep.subr.mxu0 0.0
  %1144 = vmatpush2.msra.mxu0 0.0
  %1145 = vmatprep.subr.mxu0 0.0
  %1146 = vmatpush2.msra.mxu0 0.0
  %1147 = vmatprep.subr.mxu0 0.0
  %1148 = vmatpush2.msra.mxu0 0.0
  %1149 = vmatprep.subr.mxu0 0.0
  %1150 = vmatpush2.msra.mxu0 0.0
  %1151 = vmatprep.subr.mxu0 0.0
  %1152 = vmatpush2.msra.mxu0 0.0
  %1153 = vmatprep.subr.mxu0 0.0
  %1154 = vmatpush2.msra.mxu0 0.0
  %1155 = vmatprep.subr.mxu0 0.0
  %1156 = vmatpush2.msra.mxu0 0.0
  %1157 = vmatprep.subr.mxu0 0.0
  %1158 = vmatpush2.msra.mxu0 0.0
  %1159 = vmatprep.subr.mxu0 0.0
  %1160 = vmatpush2.msra.mxu0 0.0
  %1161 = vmatprep.subr.mxu0 0.0
  %1162 = vmatpush2.msra.mxu0 0.0
  %1163 = vmatprep.subr.mxu0 0.0
  %1164 = vmatpush2.msra.mxu0 0.0
  %1165 = vmatprep.subr.mxu0 0.0
  %1166 = vmatpush2.msra.mxu0 0.0
  %1167 = vmatprep.subr.mxu0 0.0
  %1168 = vmatpush2.msra.mxu0 0.0
  %1169 = vmatprep.subr.mxu0 0.0
  %1170 = vmatpush2.msra.mxu0 0.0
  %1171 = vmatprep.subr.mxu0 0.0
  %1172 = vmatpush2.msra.mxu0 0.0
  %1173 = vmatprep.subr.mxu0 0.0
  %1174 = vmatpush2.msra.mxu0 0.0
  %1175 = vmatprep.mubr.f32.mxu0 0.0
  %1176 = vmatmul.mubr.f32.gmra.mxu0 %v1109
  %v1177 = vpop.f32.mrf.mxu0
  %v1178 = vadd.f32 %v138, %v1177
  %v1179 = vpop.f32.mrf.mxu0
  %1180 = vdwg.mxu0
  %1182 = vrot.lane.b32.xlu0 %v1025, 96
  %v1183 = vpop.permute.xlu0 %1182
  %v1184 = vsel %vm46, %v1183, 0
  %1186 = vmatprep.subr.mxu0 0.0
  %1187 = vmatpush1.msra.mxu0 0.0
  %1188 = vmatprep.subr.mxu0 0.0
  %1189 = vmatpush1.msra.mxu0 0.0
  %1190 = vmatprep.subr.mxu0 0.0
  %1191 = vmatpush1.msra.mxu0 0.0
  %1192 = vmatprep.subr.mxu0 0.0
  %1193 = vmatpush1.msra.mxu0 0.0
  %1194 = vmatprep.subr.mxu0 0.0
  %1195 = vmatpush1.msra.mxu0 0.0
  %1196 = vmatprep.subr.mxu0 0.0
  %1197 = vmatpush1.msra.mxu0 0.0
  %1198 = vmatprep.subr.mxu0 0.0
  %1199 = vmatpush1.msra.mxu0 0.0
  %1200 = vmatprep.subr.mxu0 0.0
  %1201 = vmatpush1.msra.mxu0 0.0
  %1202 = vmatprep.subr.mxu0 0.0
  %1203 = vmatpush1.msra.mxu0 0.0
  %1204 = vmatprep.subr.mxu0 0.0
  %1205 = vmatpush1.msra.mxu0 0.0
  %1206 = vmatprep.subr.mxu0 0.0
  %1207 = vmatpush1.msra.mxu0 0.0
  %1208 = vmatprep.subr.mxu0 0.0
  %1209 = vmatpush1.msra.mxu0 0.0
  %1210 = vmatprep.subr.mxu0 0.0
  %1211 = vmatpush1.msra.mxu0 %v43
  %1212 = vmatprep.subr.mxu0 0.0
  %1213 = vmatpush1.msra.mxu0 %v42
  %1214 = vmatprep.subr.mxu0 0.0
  %1215 = vmatpush1.msra.mxu0 %v41
  %1216 = vmatprep.subr.mxu0 0.0
  %1217 = vmatpush1.msra.mxu0 %v40
  %1218 = vmatprep.subr.mxu0 0.0
  %1219 = vmatpush2.msra.mxu0 0.0
  %1220 = vmatprep.subr.mxu0 0.0
  %1221 = vmatpush2.msra.mxu0 0.0
  %1222 = vmatprep.subr.mxu0 0.0
  %1223 = vmatpush2.msra.mxu0 0.0
  %1224 = vmatprep.subr.mxu0 0.0
  %1225 = vmatpush2.msra.mxu0 0.0
  %1226 = vmatprep.subr.mxu0 0.0
  %1227 = vmatpush2.msra.mxu0 0.0
  %1228 = vmatprep.subr.mxu0 0.0
  %1229 = vmatpush2.msra.mxu0 0.0
  %1230 = vmatprep.subr.mxu0 0.0
  %1231 = vmatpush2.msra.mxu0 0.0
  %1232 = vmatprep.subr.mxu0 0.0
  %1233 = vmatpush2.msra.mxu0 0.0
  %1234 = vmatprep.subr.mxu0 0.0
  %1235 = vmatpush2.msra.mxu0 0.0
  %1236 = vmatprep.subr.mxu0 0.0
  %1237 = vmatpush2.msra.mxu0 0.0
  %1238 = vmatprep.subr.mxu0 0.0
  %1239 = vmatpush2.msra.mxu0 0.0
  %1240 = vmatprep.subr.mxu0 0.0
  %1241 = vmatpush2.msra.mxu0 0.0
  %1242 = vmatprep.subr.mxu0 0.0
  %1243 = vmatpush2.msra.mxu0 0.0
  %1244 = vmatprep.subr.mxu0 0.0
  %1245 = vmatpush2.msra.mxu0 0.0
  %1246 = vmatprep.subr.mxu0 0.0
  %1247 = vmatpush2.msra.mxu0 0.0
  %1248 = vmatprep.subr.mxu0 0.0
  %1249 = vmatpush2.msra.mxu0 0.0
  %1250 = vmatprep.mubr.f32.mxu0 0.0
  %1251 = vmatmul.mubr.f32.gmra.mxu0 %v1184
  %v1252 = vpop.f32.mrf.mxu0
  %v1253 = vadd.f32 %v217, %v1252
  %v1254 = vpop.f32.mrf.mxu0
  %1255 = vdwg.mxu0
  %v1256 = vmul.f32 %v1107, %v1253
  %v1257 = vadd.f32 %v1178, %v1256
  %v1258 = vtanh.pop %v1257
  %v1259 = vsub.f32 1.0, %v1107
  %1261 = vrot.lane.b32.xlu0 %v1258, 32
  %v1262 = vpop.permute.xlu0 %1261
  %v1264 = vmul.f32 %v1259, %v1262
  %v1265 = vmul.f32 %v1107, %v1025
  %v1266 = vadd.f32 %v1264, %v1265
  %s1267 = scalar_lea.vmem %s0, 10
  %v1268 = vld [vmem:[%s1267] sm:$0x3]
  %v1269 = vsel %vm46, %v1268, %v1266
  %v1271 = vsel %vm54, %v1269, 0
  %1273 = vmatprep.subr.mxu0 0.0
  %1274 = vmatpush1.msra.mxu0 0.0
  %1275 = vmatprep.subr.mxu0 0.0
  %1276 = vmatpush1.msra.mxu0 0.0
  %1277 = vmatprep.subr.mxu0 0.0
  %1278 = vmatpush1.msra.mxu0 0.0
  %1279 = vmatprep.subr.mxu0 0.0
  %1280 = vmatpush1.msra.mxu0 0.0
  %1281 = vmatprep.subr.mxu0 0.0
  %1282 = vmatpush1.msra.mxu0 0.0
  %1283 = vmatprep.subr.mxu0 0.0
  %1284 = vmatpush1.msra.mxu0 0.0
  %1285 = vmatprep.subr.mxu0 0.0
  %1286 = vmatpush1.msra.mxu0 0.0
  %1287 = vmatprep.subr.mxu0 0.0
  %1288 = vmatpush1.msra.mxu0 0.0
  %1289 = vmatprep.subr.mxu0 0.0
  %1290 = vmatpush1.msra.mxu0 %v33
  %1291 = vmatprep.subr.mxu0 0.0
  %1292 = vmatpush1.msra.mxu0 %v32
  %1293 = vmatprep.subr.mxu0 0.0
  %1294 = vmatpush1.msra.mxu0 %v31
  %1295 = vmatprep.subr.mxu0 0.0
  %1296 = vmatpush1.msra.mxu0 %v30
  %1297 = vmatprep.subr.mxu0 0.0
  %1298 = vmatpush1.msra.mxu0 %v29
  %1299 = vmatprep.subr.mxu0 0.0
  %1300 = vmatpush1.msra.mxu0 %v28
  %1301 = vmatprep.subr.mxu0 0.0
  %1302 = vmatpush1.msra.mxu0 %v27
  %1303 = vmatprep.subr.mxu0 0.0
  %1304 = vmatpush1.msra.mxu0 %v26
  %1305 = vmatprep.subr.mxu0 0.0
  %1306 = vmatpush2.msra.mxu0 0.0
  %1307 = vmatprep.subr.mxu0 0.0
  %1308 = vmatpush2.msra.mxu0 0.0
  %1309 = vmatprep.subr.mxu0 0.0
  %1310 = vmatpush2.msra.mxu0 0.0
  %1311 = vmatprep.subr.mxu0 0.0
  %1312 = vmatpush2.msra.mxu0 0.0
  %1313 = vmatprep.subr.mxu0 0.0
  %1314 = vmatpush2.msra.mxu0 0.0
  %1315 = vmatprep.subr.mxu0 0.0
  %1316 = vmatpush2.msra.mxu0 0.0
  %1317 = vmatprep.subr.mxu0 0.0
  %1318 = vmatpush2.msra.mxu0 0.0
  %1319 = vmatprep.subr.mxu0 0.0
  %1320 = vmatpush2.msra.mxu0 0.0
  %1321 = vmatprep.subr.mxu0 0.0
  %1322 = vmatpush2.msra.mxu0 0.0
  %1323 = vmatprep.subr.mxu0 0.0
  %1324 = vmatpush2.msra.mxu0 0.0
  %1325 = vmatprep.subr.mxu0 0.0
  %1326 = vmatpush2.msra.mxu0 0.0
  %1327 = vmatprep.subr.mxu0 0.0
  %1328 = vmatpush2.msra.mxu0 0.0
  %1329 = vmatprep.subr.mxu0 0.0
  %1330 = vmatpush2.msra.mxu0 0.0
  %1331 = vmatprep.subr.mxu0 0.0
  %1332 = vmatpush2.msra.mxu0 0.0
  %1333 = vmatprep.subr.mxu0 0.0
  %1334 = vmatpush2.msra.mxu0 0.0
  %1335 = vmatprep.subr.mxu0 0.0
  %1336 = vmatpush2.msra.mxu0 0.0
  %1337 = vmatprep.mubr.f32.mxu0 0.0
  %1338 = vmatmul.mubr.f32.gmra.mxu0 %v1271
  %v1339 = vpop.f32.mrf.mxu0
  %v1340 = vadd.f32 %v52, %v1339
  %v1341 = vpop.f32.mrf.mxu0
  %1342 = vdwg.mxu0
  %v1343 = vxor.u32 %v1340, 2147483648
  %v1344 = vmul.f32 %v1343, 1.442695
  %v1345 = vpow.pop %v1344
  %v1346 = vadd.f32 %v1345, 1.0
  %v1347 = vrcp.pop %v1346
  %v1348 = vmul.f32 1.0, %v1347
  %v1350 = vsel %vm46, %v1268, 0
  %1352 = vmatprep.subr.mxu0 0.0
  %1353 = vmatpush1.msra.mxu0 0.0
  %1354 = vmatprep.subr.mxu0 0.0
  %1355 = vmatpush1.msra.mxu0 0.0
  %1356 = vmatprep.subr.mxu0 0.0
  %1357 = vmatpush1.msra.mxu0 0.0
  %1358 = vmatprep.subr.mxu0 0.0
  %1359 = vmatpush1.msra.mxu0 0.0
  %1360 = vmatprep.subr.mxu0 0.0
  %1361 = vmatpush1.msra.mxu0 0.0
  %1362 = vmatprep.subr.mxu0 0.0
  %1363 = vmatpush1.msra.mxu0 0.0
  %1364 = vmatprep.subr.mxu0 0.0
  %1365 = vmatpush1.msra.mxu0 0.0
  %1366 = vmatprep.subr.mxu0 0.0
  %1367 = vmatpush1.msra.mxu0 0.0
  %1368 = vmatprep.subr.mxu0 0.0
  %1369 = vmatpush1.msra.mxu0 0.0
  %1370 = vmatprep.subr.mxu0 0.0
  %1371 = vmatpush1.msra.mxu0 0.0
  %1372 = vmatprep.subr.mxu0 0.0
  %1373 = vmatpush1.msra.mxu0 0.0
  %1374 = vmatprep.subr.mxu0 0.0
  %1375 = vmatpush1.msra.mxu0 0.0
  %1376 = vmatprep.subr.mxu0 0.0
  %1377 = vmatpush1.msra.mxu0 %v38
  %1378 = vmatprep.subr.mxu0 0.0
  %1379 = vmatpush1.msra.mxu0 %v37
  %1380 = vmatprep.subr.mxu0 0.0
  %1381 = vmatpush1.msra.mxu0 %v36
  %1382 = vmatprep.subr.mxu0 0.0
  %1383 = vmatpush1.msra.mxu0 %v35
  %1384 = vmatprep.subr.mxu0 0.0
  %1385 = vmatpush2.msra.mxu0 0.0
  %1386 = vmatprep.subr.mxu0 0.0
  %1387 = vmatpush2.msra.mxu0 0.0
  %1388 = vmatprep.subr.mxu0 0.0
  %1389 = vmatpush2.msra.mxu0 0.0
  %1390 = vmatprep.subr.mxu0 0.0
  %1391 = vmatpush2.msra.mxu0 0.0
  %1392 = vmatprep.subr.mxu0 0.0
  %1393 = vmatpush2.msra.mxu0 0.0
  %1394 = vmatprep.subr.mxu0 0.0
  %1395 = vmatpush2.msra.mxu0 0.0
  %1396 = vmatprep.subr.mxu0 0.0
  %1397 = vmatpush2.msra.mxu0 0.0
  %1398 = vmatprep.subr.mxu0 0.0
  %1399 = vmatpush2.msra.mxu0 0.0
  %1400 = vmatprep.subr.mxu0 0.0
  %1401 = vmatpush2.msra.mxu0 0.0
  %1402 = vmatprep.subr.mxu0 0.0
  %1403 = vmatpush2.msra.mxu0 0.0
  %1404 = vmatprep.subr.mxu0 0.0
  %1405 = vmatpush2.msra.mxu0 0.0
  %1406 = vmatprep.subr.mxu0 0.0
  %1407 = vmatpush2.msra.mxu0 0.0
  %1408 = vmatprep.subr.mxu0 0.0
  %1409 = vmatpush2.msra.mxu0 0.0
  %1410 = vmatprep.subr.mxu0 0.0
  %1411 = vmatpush2.msra.mxu0 0.0
  %1412 = vmatprep.subr.mxu0 0.0
  %1413 = vmatpush2.msra.mxu0 0.0
  %1414 = vmatprep.subr.mxu0 0.0
  %1415 = vmatpush2.msra.mxu0 0.0
  %1416 = vmatprep.mubr.f32.mxu0 0.0
  %1417 = vmatmul.mubr.f32.gmra.mxu0 %v1350
  %v1418 = vpop.f32.mrf.mxu0
  %v1419 = vadd.f32 %v138, %v1418
  %v1420 = vpop.f32.mrf.mxu0
  %1421 = vdwg.mxu0
  %1423 = vrot.lane.b32.xlu0 %v1266, 96
  %v1424 = vpop.permute.xlu0 %1423
  %v1425 = vsel %vm46, %v1424, 0
  %1427 = vmatprep.subr.mxu0 0.0
  %1428 = vmatpush1.msra.mxu0 0.0
  %1429 = vmatprep.subr.mxu0 0.0
  %1430 = vmatpush1.msra.mxu0 0.0
  %1431 = vmatprep.subr.mxu0 0.0
  %1432 = vmatpush1.msra.mxu0 0.0
  %1433 = vmatprep.subr.mxu0 0.0
  %1434 = vmatpush1.msra.mxu0 0.0
  %1435 = vmatprep.subr.mxu0 0.0
  %1436 = vmatpush1.msra.mxu0 0.0
  %1437 = vmatprep.subr.mxu0 0.0
  %1438 = vmatpush1.msra.mxu0 0.0
  %1439 = vmatprep.subr.mxu0 0.0
  %1440 = vmatpush1.msra.mxu0 0.0
  %1441 = vmatprep.subr.mxu0 0.0
  %1442 = vmatpush1.msra.mxu0 0.0
  %1443 = vmatprep.subr.mxu0 0.0
  %1444 = vmatpush1.msra.mxu0 0.0
  %1445 = vmatprep.subr.mxu0 0.0
  %1446 = vmatpush1.msra.mxu0 0.0
  %1447 = vmatprep.subr.mxu0 0.0
  %1448 = vmatpush1.msra.mxu0 0.0
  %1449 = vmatprep.subr.mxu0 0.0
  %1450 = vmatpush1.msra.mxu0 0.0
  %1451 = vmatprep.subr.mxu0 0.0
  %1452 = vmatpush1.msra.mxu0 %v43
  %1453 = vmatprep.subr.mxu0 0.0
  %1454 = vmatpush1.msra.mxu0 %v42
  %1455 = vmatprep.subr.mxu0 0.0
  %1456 = vmatpush1.msra.mxu0 %v41
  %1457 = vmatprep.subr.mxu0 0.0
  %1458 = vmatpush1.msra.mxu0 %v40
  %1459 = vmatprep.subr.mxu0 0.0
  %1460 = vmatpush2.msra.mxu0 0.0
  %1461 = vmatprep.subr.mxu0 0.0
  %1462 = vmatpush2.msra.mxu0 0.0
  %1463 = vmatprep.subr.mxu0 0.0
  %1464 = vmatpush2.msra.mxu0 0.0
  %1465 = vmatprep.subr.mxu0 0.0
  %1466 = vmatpush2.msra.mxu0 0.0
  %1467 = vmatprep.subr.mxu0 0.0
  %1468 = vmatpush2.msra.mxu0 0.0
  %1469 = vmatprep.subr.mxu0 0.0
  %1470 = vmatpush2.msra.mxu0 0.0
  %1471 = vmatprep.subr.mxu0 0.0
  %1472 = vmatpush2.msra.mxu0 0.0
  %1473 = vmatprep.subr.mxu0 0.0
  %1474 = vmatpush2.msra.mxu0 0.0
  %1475 = vmatprep.subr.mxu0 0.0
  %1476 = vmatpush2.msra.mxu0 0.0
  %1477 = vmatprep.subr.mxu0 0.0
  %1478 = vmatpush2.msra.mxu0 0.0
  %1479 = vmatprep.subr.mxu0 0.0
  %1480 = vmatpush2.msra.mxu0 0.0
  %1481 = vmatprep.subr.mxu0 0.0
  %1482 = vmatpush2.msra.mxu0 0.0
  %1483 = vmatprep.subr.mxu0 0.0
  %1484 = vmatpush2.msra.mxu0 0.0
  %1485 = vmatprep.subr.mxu0 0.0
  %1486 = vmatpush2.msra.mxu0 0.0
  %1487 = vmatprep.subr.mxu0 0.0
  %1488 = vmatpush2.msra.mxu0 0.0
  %1489 = vmatprep.subr.mxu0 0.0
  %1490 = vmatpush2.msra.mxu0 0.0
  %1491 = vmatprep.mubr.f32.mxu0 0.0
  %1492 = vmatmul.mubr.f32.gmra.mxu0 %v1425
  %v1493 = vpop.f32.mrf.mxu0
  %v1494 = vadd.f32 %v217, %v1493
  %v1495 = vpop.f32.mrf.mxu0
  %1496 = vdwg.mxu0
  %v1497 = vmul.f32 %v1348, %v1494
  %v1498 = vadd.f32 %v1419, %v1497
  %v1499 = vtanh.pop %v1498
  %v1500 = vsub.f32 1.0, %v1348
  %1502 = vrot.lane.b32.xlu0 %v1499, 32
  %v1503 = vpop.permute.xlu0 %1502
  %v1505 = vmul.f32 %v1500, %v1503
  %v1506 = vmul.f32 %v1348, %v1266
  %v1507 = vadd.f32 %v1505, %v1506
  %s1508 = scalar_lea.vmem %s0, 12
  %v1509 = vld [vmem:[%s1508] sm:$0x3]
  %v1510 = vsel %vm46, %v1509, %v1507
  %v1512 = vsel %vm54, %v1510, 0
  %1514 = vmatprep.subr.mxu0 0.0
  %1515 = vmatpush1.msra.mxu0 0.0
  %1516 = vmatprep.subr.mxu0 0.0
  %1517 = vmatpush1.msra.mxu0 0.0
  %1518 = vmatprep.subr.mxu0 0.0
  %1519 = vmatpush1.msra.mxu0 0.0
  %1520 = vmatprep.subr.mxu0 0.0
  %1521 = vmatpush1.msra.mxu0 0.0
  %1522 = vmatprep.subr.mxu0 0.0
  %1523 = vmatpush1.msra.mxu0 0.0
  %1524 = vmatprep.subr.mxu0 0.0
  %1525 = vmatpush1.msra.mxu0 0.0
  %1526 = vmatprep.subr.mxu0 0.0
  %1527 = vmatpush1.msra.mxu0 0.0
  %1528 = vmatprep.subr.mxu0 0.0
  %1529 = vmatpush1.msra.mxu0 0.0
  %1530 = vmatprep.subr.mxu0 0.0
  %1531 = vmatpush1.msra.mxu0 %v33
  %1532 = vmatprep.subr.mxu0 0.0
  %1533 = vmatpush1.msra.mxu0 %v32
  %1534 = vmatprep.subr.mxu0 0.0
  %1535 = vmatpush1.msra.mxu0 %v31
  %1536 = vmatprep.subr.mxu0 0.0
  %1537 = vmatpush1.msra.mxu0 %v30
  %1538 = vmatprep.subr.mxu0 0.0
  %1539 = vmatpush1.msra.mxu0 %v29
  %1540 = vmatprep.subr.mxu0 0.0
  %1541 = vmatpush1.msra.mxu0 %v28
  %1542 = vmatprep.subr.mxu0 0.0
  %1543 = vmatpush1.msra.mxu0 %v27
  %1544 = vmatprep.subr.mxu0 0.0
  %1545 = vmatpush1.msra.mxu0 %v26
  %1546 = vmatprep.subr.mxu0 0.0
  %1547 = vmatpush2.msra.mxu0 0.0
  %1548 = vmatprep.subr.mxu0 0.0
  %1549 = vmatpush2.msra.mxu0 0.0
  %1550 = vmatprep.subr.mxu0 0.0
  %1551 = vmatpush2.msra.mxu0 0.0
  %1552 = vmatprep.subr.mxu0 0.0
  %1553 = vmatpush2.msra.mxu0 0.0
  %1554 = vmatprep.subr.mxu0 0.0
  %1555 = vmatpush2.msra.mxu0 0.0
  %1556 = vmatprep.subr.mxu0 0.0
  %1557 = vmatpush2.msra.mxu0 0.0
  %1558 = vmatprep.subr.mxu0 0.0
  %1559 = vmatpush2.msra.mxu0 0.0
  %1560 = vmatprep.subr.mxu0 0.0
  %1561 = vmatpush2.msra.mxu0 0.0
  %1562 = vmatprep.subr.mxu0 0.0
  %1563 = vmatpush2.msra.mxu0 0.0
  %1564 = vmatprep.subr.mxu0 0.0
  %1565 = vmatpush2.msra.mxu0 0.0
  %1566 = vmatprep.subr.mxu0 0.0
  %1567 = vmatpush2.msra.mxu0 0.0
  %1568 = vmatprep.subr.mxu0 0.0
  %1569 = vmatpush2.msra.mxu0 0.0
  %1570 = vmatprep.subr.mxu0 0.0
  %1571 = vmatpush2.msra.mxu0 0.0
  %1572 = vmatprep.subr.mxu0 0.0
  %1573 = vmatpush2.msra.mxu0 0.0
  %1574 = vmatprep.subr.mxu0 0.0
  %1575 = vmatpush2.msra.mxu0 0.0
  %1576 = vmatprep.subr.mxu0 0.0
  %1577 = vmatpush2.msra.mxu0 0.0
  %1578 = vmatprep.mubr.f32.mxu0 0.0
  %1579 = vmatmul.mubr.f32.gmra.mxu0 %v1512
  %v1580 = vpop.f32.mrf.mxu0
  %v1581 = vadd.f32 %v52, %v1580
  %v1582 = vpop.f32.mrf.mxu0
  %1583 = vdwg.mxu0
  %v1584 = vxor.u32 %v1581, 2147483648
  %v1585 = vmul.f32 %v1584, 1.442695
  %v1586 = vpow.pop %v1585
  %v1587 = vadd.f32 %v1586, 1.0
  %v1588 = vrcp.pop %v1587
  %v1589 = vmul.f32 1.0, %v1588
  %v1591 = vsel %vm46, %v1509, 0
  %1593 = vmatprep.subr.mxu0 0.0
  %1594 = vmatpush1.msra.mxu0 0.0
  %1595 = vmatprep.subr.mxu0 0.0
  %1596 = vmatpush1.msra.mxu0 0.0
  %1597 = vmatprep.subr.mxu0 0.0
  %1598 = vmatpush1.msra.mxu0 0.0
  %1599 = vmatprep.subr.mxu0 0.0
  %1600 = vmatpush1.msra.mxu0 0.0
  %1601 = vmatprep.subr.mxu0 0.0
  %1602 = vmatpush1.msra.mxu0 0.0
  %1603 = vmatprep.subr.mxu0 0.0
  %1604 = vmatpush1.msra.mxu0 0.0
  %1605 = vmatprep.subr.mxu0 0.0
  %1606 = vmatpush1.msra.mxu0 0.0
  %1607 = vmatprep.subr.mxu0 0.0
  %1608 = vmatpush1.msra.mxu0 0.0
  %1609 = vmatprep.subr.mxu0 0.0
  %1610 = vmatpush1.msra.mxu0 0.0
  %1611 = vmatprep.subr.mxu0 0.0
  %1612 = vmatpush1.msra.mxu0 0.0
  %1613 = vmatprep.subr.mxu0 0.0
  %1614 = vmatpush1.msra.mxu0 0.0
  %1615 = vmatprep.subr.mxu0 0.0
  %1616 = vmatpush1.msra.mxu0 0.0
  %1617 = vmatprep.subr.mxu0 0.0
  %1618 = vmatpush1.msra.mxu0 %v38
  %1619 = vmatprep.subr.mxu0 0.0
  %1620 = vmatpush1.msra.mxu0 %v37
  %1621 = vmatprep.subr.mxu0 0.0
  %1622 = vmatpush1.msra.mxu0 %v36
  %1623 = vmatprep.subr.mxu0 0.0
  %1624 = vmatpush1.msra.mxu0 %v35
  %1625 = vmatprep.subr.mxu0 0.0
  %1626 = vmatpush2.msra.mxu0 0.0
  %1627 = vmatprep.subr.mxu0 0.0
  %1628 = vmatpush2.msra.mxu0 0.0
  %1629 = vmatprep.subr.mxu0 0.0
  %1630 = vmatpush2.msra.mxu0 0.0
  %1631 = vmatprep.subr.mxu0 0.0
  %1632 = vmatpush2.msra.mxu0 0.0
  %1633 = vmatprep.subr.mxu0 0.0
  %1634 = vmatpush2.msra.mxu0 0.0
  %1635 = vmatprep.subr.mxu0 0.0
  %1636 = vmatpush2.msra.mxu0 0.0
  %1637 = vmatprep.subr.mxu0 0.0
  %1638 = vmatpush2.msra.mxu0 0.0
  %1639 = vmatprep.subr.mxu0 0.0
  %1640 = vmatpush2.msra.mxu0 0.0
  %1641 = vmatprep.subr.mxu0 0.0
  %1642 = vmatpush2.msra.mxu0 0.0
  %1643 = vmatprep.subr.mxu0 0.0
  %1644 = vmatpush2.msra.mxu0 0.0
  %1645 = vmatprep.subr.mxu0 0.0
  %1646 = vmatpush2.msra.mxu0 0.0
  %1647 = vmatprep.subr.mxu0 0.0
  %1648 = vmatpush2.msra.mxu0 0.0
  %1649 = vmatprep.subr.mxu0 0.0
  %1650 = vmatpush2.msra.mxu0 0.0
  %1651 = vmatprep.subr.mxu0 0.0
  %1652 = vmatpush2.msra.mxu0 0.0
  %1653 = vmatprep.subr.mxu0 0.0
  %1654 = vmatpush2.msra.mxu0 0.0
  %1655 = vmatprep.subr.mxu0 0.0
  %1656 = vmatpush2.msra.mxu0 0.0
  %1657 = vmatprep.mubr.f32.mxu0 0.0
  %1658 = vmatmul.mubr.f32.gmra.mxu0 %v1591
  %v1659 = vpop.f32.mrf.mxu0
  %v1660 = vadd.f32 %v138, %v1659
  %v1661 = vpop.f32.mrf.mxu0
  %1662 = vdwg.mxu0
  %1664 = vrot.lane.b32.xlu0 %v1507, 96
  %v1665 = vpop.permute.xlu0 %1664
  %v1666 = vsel %vm46, %v1665, 0
  %1668 = vmatprep.subr.mxu0 0.0
  %1669 = vmatpush1.msra.mxu0 0.0
  %1670 = vmatprep.subr.mxu0 0.0
  %1671 = vmatpush1.msra.mxu0 0.0
  %1672 = vmatprep.subr.mxu0 0.0
  %1673 = vmatpush1.msra.mxu0 0.0
  %1674 = vmatprep.subr.mxu0 0.0
  %1675 = vmatpush1.msra.mxu0 0.0
  %1676 = vmatprep.subr.mxu0 0.0
  %1677 = vmatpush1.msra.mxu0 0.0
  %1678 = vmatprep.subr.mxu0 0.0
  %1679 = vmatpush1.msra.mxu0 0.0
  %1680 = vmatprep.subr.mxu0 0.0
  %1681 = vmatpush1.msra.mxu0 0.0
  %1682 = vmatprep.subr.mxu0 0.0
  %1683 = vmatpush1.msra.mxu0 0.0
  %1684 = vmatprep.subr.mxu0 0.0
  %1685 = vmatpush1.msra.mxu0 0.0
  %1686 = vmatprep.subr.mxu0 0.0
  %1687 = vmatpush1.msra.mxu0 0.0
  %1688 = vmatprep.subr.mxu0 0.0
  %1689 = vmatpush1.msra.mxu0 0.0
  %1690 = vmatprep.subr.mxu0 0.0
  %1691 = vmatpush1.msra.mxu0 0.0
  %1692 = vmatprep.subr.mxu0 0.0
  %1693 = vmatpush1.msra.mxu0 %v43
  %1694 = vmatprep.subr.mxu0 0.0
  %1695 = vmatpush1.msra.mxu0 %v42
  %1696 = vmatprep.subr.mxu0 0.0
  %1697 = vmatpush1.msra.mxu0 %v41
  %1698 = vmatprep.subr.mxu0 0.0
  %1699 = vmatpush1.msra.mxu0 %v40
  %1700 = vmatprep.subr.mxu0 0.0
  %1701 = vmatpush2.msra.mxu0 0.0
  %1702 = vmatprep.subr.mxu0 0.0
  %1703 = vmatpush2.msra.mxu0 0.0
  %1704 = vmatprep.subr.mxu0 0.0
  %1705 = vmatpush2.msra.mxu0 0.0
  %1706 = vmatprep.subr.mxu0 0.0
  %1707 = vmatpush2.msra.mxu0 0.0
  %1708 = vmatprep.subr.mxu0 0.0
  %1709 = vmatpush2.msra.mxu0 0.0
  %1710 = vmatprep.subr.mxu0 0.0
  %1711 = vmatpush2.msra.mxu0 0.0
  %1712 = vmatprep.subr.mxu0 0.0
  %1713 = vmatpush2.msra.mxu0 0.0
  %1714 = vmatprep.subr.mxu0 0.0
  %1715 = vmatpush2.msra.mxu0 0.0
  %1716 = vmatprep.subr.mxu0 0.0
  %1717 = vmatpush2.msra.mxu0 0.0
  %1718 = vmatprep.subr.mxu0 0.0
  %1719 = vmatpush2.msra.mxu0 0.0
  %1720 = vmatprep.subr.mxu0 0.0
  %1721 = vmatpush2.msra.mxu0 0.0
  %1722 = vmatprep.subr.mxu0 0.0
  %1723 = vmatpush2.msra.mxu0 0.0
  %1724 = vmatprep.subr.mxu0 0.0
  %1725 = vmatpush2.msra.mxu0 0.0
  %1726 = vmatprep.subr.mxu0 0.0
  %1727 = vmatpush2.msra.mxu0 0.0
  %1728 = vmatprep.subr.mxu0 0.0
  %1729 = vmatpush2.msra.mxu0 0.0
  %1730 = vmatprep.subr.mxu0 0.0
  %1731 = vmatpush2.msra.mxu0 0.0
  %1732 = vmatprep.mubr.f32.mxu0 0.0
  %1733 = vmatmul.mubr.f32.gmra.mxu0 %v1666
  %v1734 = vpop.f32.mrf.mxu0
  %v1735 = vadd.f32 %v217, %v1734
  %v1736 = vpop.f32.mrf.mxu0
  %1737 = vdwg.mxu0
  %v1738 = vmul.f32 %v1589, %v1735
  %v1739 = vadd.f32 %v1660, %v1738
  %v1740 = vtanh.pop %v1739
  %v1741 = vsub.f32 1.0, %v1589
  %1743 = vrot.lane.b32.xlu0 %v1740, 32
  %v1744 = vpop.permute.xlu0 %1743
  %v1746 = vmul.f32 %v1741, %v1744
  %v1747 = vmul.f32 %v1589, %v1507
  %v1748 = vadd.f32 %v1746, %v1747
  %s1749 = scalar_lea.vmem %s0, 14
  %v1750 = vld [vmem:[%s1749] sm:$0x3]
  %v1751 = vsel %vm46, %v1750, %v1748
  %v1753 = vsel %vm54, %v1751, 0
  %1755 = vmatprep.subr.mxu0 0.0
  %1756 = vmatpush1.msra.mxu0 0.0
  %1757 = vmatprep.subr.mxu0 0.0
  %1758 = vmatpush1.msra.mxu0 0.0
  %1759 = vmatprep.subr.mxu0 0.0
  %1760 = vmatpush1.msra.mxu0 0.0
  %1761 = vmatprep.subr.mxu0 0.0
  %1762 = vmatpush1.msra.mxu0 0.0
  %1763 = vmatprep.subr.mxu0 0.0
  %1764 = vmatpush1.msra.mxu0 0.0
  %1765 = vmatprep.subr.mxu0 0.0
  %1766 = vmatpush1.msra.mxu0 0.0
  %1767 = vmatprep.subr.mxu0 0.0
  %1768 = vmatpush1.msra.mxu0 0.0
  %1769 = vmatprep.subr.mxu0 0.0
  %1770 = vmatpush1.msra.mxu0 0.0
  %1771 = vmatprep.subr.mxu0 0.0
  %1772 = vmatpush1.msra.mxu0 %v33
  %1773 = vmatprep.subr.mxu0 0.0
  %1774 = vmatpush1.msra.mxu0 %v32
  %1775 = vmatprep.subr.mxu0 0.0
  %1776 = vmatpush1.msra.mxu0 %v31
  %1777 = vmatprep.subr.mxu0 0.0
  %1778 = vmatpush1.msra.mxu0 %v30
  %1779 = vmatprep.subr.mxu0 0.0
  %1780 = vmatpush1.msra.mxu0 %v29
  %1781 = vmatprep.subr.mxu0 0.0
  %1782 = vmatpush1.msra.mxu0 %v28
  %1783 = vmatprep.subr.mxu0 0.0
  %1784 = vmatpush1.msra.mxu0 %v27
  %1785 = vmatprep.subr.mxu0 0.0
  %1786 = vmatpush1.msra.mxu0 %v26
  %1787 = vmatprep.subr.mxu0 0.0
  %1788 = vmatpush2.msra.mxu0 0.0
  %1789 = vmatprep.subr.mxu0 0.0
  %1790 = vmatpush2.msra.mxu0 0.0
  %1791 = vmatprep.subr.mxu0 0.0
  %1792 = vmatpush2.msra.mxu0 0.0
  %1793 = vmatprep.subr.mxu0 0.0
  %1794 = vmatpush2.msra.mxu0 0.0
  %1795 = vmatprep.subr.mxu0 0.0
  %1796 = vmatpush2.msra.mxu0 0.0
  %1797 = vmatprep.subr.mxu0 0.0
  %1798 = vmatpush2.msra.mxu0 0.0
  %1799 = vmatprep.subr.mxu0 0.0
  %1800 = vmatpush2.msra.mxu0 0.0
  %1801 = vmatprep.subr.mxu0 0.0
  %1802 = vmatpush2.msra.mxu0 0.0
  %1803 = vmatprep.subr.mxu0 0.0
  %1804 = vmatpush2.msra.mxu0 0.0
  %1805 = vmatprep.subr.mxu0 0.0
  %1806 = vmatpush2.msra.mxu0 0.0
  %1807 = vmatprep.subr.mxu0 0.0
  %1808 = vmatpush2.msra.mxu0 0.0
  %1809 = vmatprep.subr.mxu0 0.0
  %1810 = vmatpush2.msra.mxu0 0.0
  %1811 = vmatprep.subr.mxu0 0.0
  %1812 = vmatpush2.msra.mxu0 0.0
  %1813 = vmatprep.subr.mxu0 0.0
  %1814 = vmatpush2.msra.mxu0 0.0
  %1815 = vmatprep.subr.mxu0 0.0
  %1816 = vmatpush2.msra.mxu0 0.0
  %1817 = vmatprep.subr.mxu0 0.0
  %1818 = vmatpush2.msra.mxu0 0.0
  %1819 = vmatprep.mubr.f32.mxu0 0.0
  %1820 = vmatmul.mubr.f32.gmra.mxu0 %v1753
  %v1821 = vpop.f32.mrf.mxu0
  %v1822 = vadd.f32 %v52, %v1821
  %v1823 = vpop.f32.mrf.mxu0
  %1824 = vdwg.mxu0
  %v1825 = vxor.u32 %v1822, 2147483648
  %v1826 = vmul.f32 %v1825, 1.442695
  %v1827 = vpow.pop %v1826
  %v1828 = vadd.f32 %v1827, 1.0
  %v1829 = vrcp.pop %v1828
  %v1830 = vmul.f32 1.0, %v1829
  %v1832 = vsel %vm46, %v1750, 0
  %1834 = vmatprep.subr.mxu0 0.0
  %1835 = vmatpush1.msra.mxu0 0.0
  %1836 = vmatprep.subr.mxu0 0.0
  %1837 = vmatpush1.msra.mxu0 0.0
  %1838 = vmatprep.subr.mxu0 0.0
  %1839 = vmatpush1.msra.mxu0 0.0
  %1840 = vmatprep.subr.mxu0 0.0
  %1841 = vmatpush1.msra.mxu0 0.0
  %1842 = vmatprep.subr.mxu0 0.0
  %1843 = vmatpush1.msra.mxu0 0.0
  %1844 = vmatprep.subr.mxu0 0.0
  %1845 = vmatpush1.msra.mxu0 0.0
  %1846 = vmatprep.subr.mxu0 0.0
  %1847 = vmatpush1.msra.mxu0 0.0
  %1848 = vmatprep.subr.mxu0 0.0
  %1849 = vmatpush1.msra.mxu0 0.0
  %1850 = vmatprep.subr.mxu0 0.0
  %1851 = vmatpush1.msra.mxu0 0.0
  %1852 = vmatprep.subr.mxu0 0.0
  %1853 = vmatpush1.msra.mxu0 0.0
  %1854 = vmatprep.subr.mxu0 0.0
  %1855 = vmatpush1.msra.mxu0 0.0
  %1856 = vmatprep.subr.mxu0 0.0
  %1857 = vmatpush1.msra.mxu0 0.0
  %1858 = vmatprep.subr.mxu0 0.0
  %1859 = vmatpush1.msra.mxu0 %v38
  %1860 = vmatprep.subr.mxu0 0.0
  %1861 = vmatpush1.msra.mxu0 %v37
  %1862 = vmatprep.subr.mxu0 0.0
  %1863 = vmatpush1.msra.mxu0 %v36
  %1864 = vmatprep.subr.mxu0 0.0
  %1865 = vmatpush1.msra.mxu0 %v35
  %1866 = vmatprep.subr.mxu0 0.0
  %1867 = vmatpush2.msra.mxu0 0.0
  %1868 = vmatprep.subr.mxu0 0.0
  %1869 = vmatpush2.msra.mxu0 0.0
  %1870 = vmatprep.subr.mxu0 0.0
  %1871 = vmatpush2.msra.mxu0 0.0
  %1872 = vmatprep.subr.mxu0 0.0
  %1873 = vmatpush2.msra.mxu0 0.0
  %1874 = vmatprep.subr.mxu0 0.0
  %1875 = vmatpush2.msra.mxu0 0.0
  %1876 = vmatprep.subr.mxu0 0.0
  %1877 = vmatpush2.msra.mxu0 0.0
  %1878 = vmatprep.subr.mxu0 0.0
  %1879 = vmatpush2.msra.mxu0 0.0
  %1880 = vmatprep.subr.mxu0 0.0
  %1881 = vmatpush2.msra.mxu0 0.0
  %1882 = vmatprep.subr.mxu0 0.0
  %1883 = vmatpush2.msra.mxu0 0.0
  %1884 = vmatprep.subr.mxu0 0.0
  %1885 = vmatpush2.msra.mxu0 0.0
  %1886 = vmatprep.subr.mxu0 0.0
  %1887 = vmatpush2.msra.mxu0 0.0
  %1888 = vmatprep.subr.mxu0 0.0
  %1889 = vmatpush2.msra.mxu0 0.0
  %1890 = vmatprep.subr.mxu0 0.0
  %1891 = vmatpush2.msra.mxu0 0.0
  %1892 = vmatprep.subr.mxu0 0.0
  %1893 = vmatpush2.msra.mxu0 0.0
  %1894 = vmatprep.subr.mxu0 0.0
  %1895 = vmatpush2.msra.mxu0 0.0
  %1896 = vmatprep.subr.mxu0 0.0
  %1897 = vmatpush2.msra.mxu0 0.0
  %1898 = vmatprep.mubr.f32.mxu0 0.0
  %1899 = vmatmul.mubr.f32.gmra.mxu0 %v1832
  %v1900 = vpop.f32.mrf.mxu0
  %v1901 = vadd.f32 %v138, %v1900
  %v1902 = vpop.f32.mrf.mxu0
  %1903 = vdwg.mxu0
  %1905 = vrot.lane.b32.xlu0 %v1748, 96
  %v1906 = vpop.permute.xlu0 %1905
  %v1907 = vsel %vm46, %v1906, 0
  %1909 = vmatprep.subr.mxu0 0.0
  %1910 = vmatpush1.msra.mxu0 0.0
  %1911 = vmatprep.subr.mxu0 0.0
  %1912 = vmatpush1.msra.mxu0 0.0
  %1913 = vmatprep.subr.mxu0 0.0
  %1914 = vmatpush1.msra.mxu0 0.0
  %1915 = vmatprep.subr.mxu0 0.0
  %1916 = vmatpush1.msra.mxu0 0.0
  %1917 = vmatprep.subr.mxu0 0.0
  %1918 = vmatpush1.msra.mxu0 0.0
  %1919 = vmatprep.subr.mxu0 0.0
  %1920 = vmatpush1.msra.mxu0 0.0
  %1921 = vmatprep.subr.mxu0 0.0
  %1922 = vmatpush1.msra.mxu0 0.0
  %1923 = vmatprep.subr.mxu0 0.0
  %1924 = vmatpush1.msra.mxu0 0.0
  %1925 = vmatprep.subr.mxu0 0.0
  %1926 = vmatpush1.msra.mxu0 0.0
  %1927 = vmatprep.subr.mxu0 0.0
  %1928 = vmatpush1.msra.mxu0 0.0
  %1929 = vmatprep.subr.mxu0 0.0
  %1930 = vmatpush1.msra.mxu0 0.0
  %1931 = vmatprep.subr.mxu0 0.0
  %1932 = vmatpush1.msra.mxu0 0.0
  %1933 = vmatprep.subr.mxu0 0.0
  %1934 = vmatpush1.msra.mxu0 %v43
  %1935 = vmatprep.subr.mxu0 0.0
  %1936 = vmatpush1.msra.mxu0 %v42
  %1937 = vmatprep.subr.mxu0 0.0
  %1938 = vmatpush1.msra.mxu0 %v41
  %1939 = vmatprep.subr.mxu0 0.0
  %1940 = vmatpush1.msra.mxu0 %v40
  %1941 = vmatprep.subr.mxu0 0.0
  %1942 = vmatpush2.msra.mxu0 0.0
  %1943 = vmatprep.subr.mxu0 0.0
  %1944 = vmatpush2.msra.mxu0 0.0
  %1945 = vmatprep.subr.mxu0 0.0
  %1946 = vmatpush2.msra.mxu0 0.0
  %1947 = vmatprep.subr.mxu0 0.0
  %1948 = vmatpush2.msra.mxu0 0.0
  %1949 = vmatprep.subr.mxu0 0.0
  %1950 = vmatpush2.msra.mxu0 0.0
  %1951 = vmatprep.subr.mxu0 0.0
  %1952 = vmatpush2.msra.mxu0 0.0
  %1953 = vmatprep.subr.mxu0 0.0
  %1954 = vmatpush2.msra.mxu0 0.0
  %1955 = vmatprep.subr.mxu0 0.0
  %1956 = vmatpush2.msra.mxu0 0.0
  %1957 = vmatprep.subr.mxu0 0.0
  %1958 = vmatpush2.msra.mxu0 0.0
  %1959 = vmatprep.subr.mxu0 0.0
  %1960 = vmatpush2.msra.mxu0 0.0
  %1961 = vmatprep.subr.mxu0 0.0
  %1962 = vmatpush2.msra.mxu0 0.0
  %1963 = vmatprep.subr.mxu0 0.0
  %1964 = vmatpush2.msra.mxu0 0.0
  %1965 = vmatprep.subr.mxu0 0.0
  %1966 = vmatpush2.msra.mxu0 0.0
  %1967 = vmatprep.subr.mxu0 0.0
  %1968 = vmatpush2.msra.mxu0 0.0
  %1969 = vmatprep.subr.mxu0 0.0
  %1970 = vmatpush2.msra.mxu0 0.0
  %1971 = vmatprep.subr.mxu0 0.0
  %1972 = vmatpush2.msra.mxu0 0.0
  %1973 = vmatprep.mubr.f32.mxu0 0.0
  %1974 = vmatmul.mubr.f32.gmra.mxu0 %v1907
  %v1975 = vpop.f32.mrf.mxu0
  %v1976 = vadd.f32 %v217, %v1975
  %v1977 = vpop.f32.mrf.mxu0
  %1978 = vdwg.mxu0
  %v1979 = vmul.f32 %v1830, %v1976
  %v1980 = vadd.f32 %v1901, %v1979
  %v1981 = vtanh.pop %v1980
  %v1982 = vsub.f32 1.0, %v1830
  %1984 = vrot.lane.b32.xlu0 %v1981, 32
  %v1985 = vpop.permute.xlu0 %1984
  %v1987 = vmul.f32 %v1982, %v1985
  %v1988 = vmul.f32 %v1830, %v1748
  %v1989 = vadd.f32 %v1987, %v1988
  %1991 = vrot.lane.b32.xlu0 %v1989, 96
  %v1992 = vpop.permute.xlu0 %1991
  %vm1994 = vcmask 254976
  %1995 = vst.msk [vmem:[%s7] sm:$0x3] %vm1994, %v1992
  // Predicated region
  $region30: #{seq2seq_forward.2} parent=0 // pred_check
    _
  $region31: #{seq2seq_forward.2} parent=0 // pred_check_branch
    %1997 = sbr.rel (0) target = $region33
  $region32: #{seq2seq_forward.2} parent=0 // pred_region
    _
  $region33: #{seq2seq_forward.2} parent=0 // pred_fallthru
    _
  // Predicated region
  $region34: #{seq2seq_forward.2} parent=0 // pred_check
    _
  $region35: #{seq2seq_forward.2} parent=0 // pred_check_branch
    %1999 = sbr.rel (0) target = $region37
  $region36: #{seq2seq_forward.2} parent=0 // pred_region
    _
  $region37: #{seq2seq_forward.2} parent=0 // pred_fallthru
    _

</llo_original>
